<compile_context>
chip_gen: v6e
topology: v6e:2x2x1
jax: 0.10.0
libtpu: 0.0.40
codegen_flags: <defaults>
</compile_context>

<pallas_src>
import math
import functools

import jax
import jax.numpy as jnp
from jax.experimental import pallas as pl
from jax.experimental.pallas import tpu as pltpu


# ============================================================================
# Kernel A: fully fused transformer encoders (macro AE layer + all price layers)
# ============================================================================
def _encoder_layer(x, add_mask, wqkv_ref, wo_ref, w1_ref, w2_ref, vecs_ref,
                   *, B, S, D, F, nhead):
    """One post-norm nn.TransformerEncoderLayer on batch-folded activations.

    x        : (B*S, D) f32
    add_mask : (B, S)   f32 additive key-padding mask (0 = attend, -1e9 = ignore)
    wqkv_ref : (D, 3D)  packed [Wq * 1/sqrt(hd) | Wk | Wv]
    vecs_ref : (8, Vmax) packed row vectors:
               0: b_qkv (3D, q-part pre-scaled)  1: bo  2: ln1_gamma  3: ln1_beta
               4: b1 (F)                         5: b2  6: ln2_gamma  7: ln2_beta
    """
    hd = D // nhead
    vp = vecs_ref[...]
    b_qkv = vp[0:1, :3 * D]
    bo    = vp[1:2, :D]
    g1    = vp[2:3, :D]
    be1   = vp[3:4, :D]
    b1    = vp[4:5, :F]
    b2    = vp[5:6, :D]
    g2    = vp[6:7, :D]
    be2   = vp[7:8, :D]

    # Packed QKV projection; the whole batch goes through one matmul.
    qkv = jnp.dot(x, wqkv_ref[...], preferred_element_type=jnp.float32) + b_qkv
    q = qkv[:, 0 * D:1 * D]      # already scaled by 1/sqrt(hd) (folded into Wq, bq)
    k = qkv[:, 1 * D:2 * D]
    v = qkv[:, 2 * D:3 * D]

    # Per-head column-selection masks (VPU) instead of narrow lane slices + concat.
    lane = jax.lax.broadcasted_iota(jnp.int32, (1, D), 1)

    ctx_rows = []
    for b in range(B):                       # static loops (B, nhead are tiny)
        qb = q[b * S:(b + 1) * S, :]
        kb = k[b * S:(b + 1) * S, :]
        vb = v[b * S:(b + 1) * S, :]
        mb = add_mask[b:b + 1, :]            # (1, S), broadcast over query rows
        ctx_b = jnp.zeros((S, D), jnp.float32)
        for h in range(nhead):
            sel = jnp.logical_and(lane >= h * hd, lane < (h + 1) * hd)
            sel = sel.astype(jnp.float32)    # (1, D) 0/1 head-column mask
            s_h = jnp.dot(qb * sel, kb.T, preferred_element_type=jnp.float32) + mb
            s_h = s_h - jnp.max(s_h, axis=-1, keepdims=True)
            e_h = jnp.exp(s_h)
            p_h = e_h * pl.reciprocal(jnp.sum(e_h, axis=-1, keepdims=True), approx=True)
            ctx_b = ctx_b + jnp.dot(p_h, vb, preferred_element_type=jnp.float32) * sel
        ctx_rows.append(ctx_b)
    ctx = jnp.concatenate(ctx_rows, axis=0)                  # (B*S, D)

    # Residual + LayerNorm1 (post-norm, as in default nn.TransformerEncoderLayer)
    y = x + jnp.dot(ctx, wo_ref[...], preferred_element_type=jnp.float32) + bo
    mu = jnp.mean(y, axis=-1, keepdims=True)
    var = jnp.mean((y - mu) * (y - mu), axis=-1, keepdims=True)
    y = (y - mu) * jax.lax.rsqrt(var + 1e-5) * g1 + be1

    # Feed-forward (ReLU); dropout is identity at inference
    h1 = jnp.maximum(jnp.dot(y, w1_ref[...], preferred_element_type=jnp.float32) + b1, 0.0)
    z = y + jnp.dot(h1, w2_ref[...], preferred_element_type=jnp.float32) + b2

    mu2 = jnp.mean(z, axis=-1, keepdims=True)
    var2 = jnp.mean((z - mu2) * (z - mu2), axis=-1, keepdims=True)
    return (z - mu2) * jax.lax.rsqrt(var2 + 1e-5) * g2 + be2


def fused_encoders_kernel(*refs, B, S, Dm, Dp, Fm, Fp, nhead_m, nhead_p, n_price):
    xm_ref, xp_ref, mmask_ref, pmask_ref = refs[0:4]
    n_in = 4 + 5 * (1 + n_price)
    layer_refs = refs[4:n_in]
    out_m_ref, out_p_ref = refs[n_in:n_in + 2]

    # --- macro branch -------------------------------------------------------
    # TODO(synk): the reference torch.load()s a pretrained autoencoder; its encode()
    # is substituted with a synthetic, deterministically-initialized encoder layer
    # (projection to encoding_dims happens in the head kernel).
    m = _encoder_layer(xm_ref[...], mmask_ref[...], *layer_refs[0:5],
                       B=B, S=S, D=Dm, F=Fm, nhead=nhead_m)
    out_m_ref[...] = m

    # --- price branch: stacked TransformerEncoder layers, resident in VMEM ---
    x = xp_ref[...]
    pmask = pmask_ref[...]
    for l in range(n_price):
        lr = layer_refs[5 * (l + 1):5 * (l + 2)]
        x = _encoder_layer(x, pmask, *lr, B=B, S=S, D=Dp, F=Fp, nhead=nhead_p)
    out_p_ref[...] = x


def fused_encoders(xm2d, xp2d, mmask, pmask, ae_layer, price_layers, cfg):
    B, S = cfg["B"], cfg["S"]
    Dm, Dp = cfg["AE_DIM"], cfg["DIM"]

    layer_arrays = []
    for lp in [ae_layer] + list(price_layers):
        layer_arrays += [lp["wqkv"], lp["wo"], lp["w1"], lp["w2"], lp["vecs"]]
    operands = [xm2d, xp2d, mmask, pmask] + layer_arrays

    def full2(shape):
        return pl.BlockSpec(shape, lambda i: (0, 0))

    kern = functools.partial(
        fused_encoders_kernel, B=B, S=S, Dm=Dm, Dp=Dp,
        Fm=cfg["AE_FF"], Fp=cfg["FF"],
        nhead_m=cfg["AE_NHEAD"], nhead_p=cfg["NHEAD"],
        n_price=len(price_layers))

    return pl.pallas_call(
        kern,
        out_shape=(jax.ShapeDtypeStruct((B * S, Dm), jnp.float32),
                   jax.ShapeDtypeStruct((B * S, Dp), jnp.float32)),
        grid=(1,),
        in_specs=[full2(a.shape) for a in operands],
        out_specs=(full2((B * S, Dm)), full2((B * S, Dp))),
        compiler_params=pltpu.CompilerParams(dimension_semantics=("arbitrary",)),
    )(*operands)


# ============================================================================
# Kernel B: fused heads (all eval-mode BatchNorms pre-folded into the Linears)
# ============================================================================
def fused_head_kernel(mflat_ref, pflat_ref, w_ae_ref, w_lt_ref, wfm_ref, wfp_ref,
                      hv_ref, out_ref, *, E, DIM):
    hv = hv_ref[...]
    b_ae = hv[0:1, :E]
    b_lt = hv[1:2, :E]
    b_f  = hv[2:3, :DIM]
    m_enc = jnp.dot(mflat_ref[...], w_ae_ref[...], preferred_element_type=jnp.float32) + b_ae
    p_enc = jnp.dot(pflat_ref[...], w_lt_ref[...], preferred_element_type=jnp.float32) + b_lt
    # concat([macro_enc, price_enc]) @ Wf == m_enc @ Wf[:E] + p_enc @ Wf[E:]
    out_ref[...] = (jnp.dot(m_enc, wfm_ref[...], preferred_element_type=jnp.float32)
                    + jnp.dot(p_enc, wfp_ref[...], preferred_element_type=jnp.float32)
                    + b_f)


def fused_head(m_flat, p_flat, head, cfg):
    B, E, DIM = cfg["B"], cfg["E"], cfg["DIM"]

    def full2(shape):
        return pl.BlockSpec(shape, lambda i: (0, 0))

    operands = [m_flat, p_flat, head["w_ae"], head["w_lt"],
                head["wf_m"], head["wf_p"], head["vecs"]]
    return pl.pallas_call(
        functools.partial(fused_head_kernel, E=E, DIM=DIM),
        out_shape=jax.ShapeDtypeStruct((B, DIM), jnp.float32),
        grid=(1,),
        in_specs=[full2(a.shape) for a in operands],
        out_specs=full2((B, DIM)),
        compiler_params=pltpu.CompilerParams(dimension_semantics=("arbitrary",)),
    )(*operands)


# ============================================================================
# Parameter construction (raw, torch-like) and offline packing/folding
# ============================================================================
def init_encoder_layer(key, d, ff):
    ks = jax.random.split(key, 16)
    n = lambda k, s, sc=0.05: sc * jax.random.normal(k, s, jnp.float32)
    return dict(
        wq=n(ks[0], (d, d)), wk=n(ks[1], (d, d)), wv=n(ks[2], (d, d)),
        bq=n(ks[3], (d,)), bk=n(ks[4], (d,)), bv=n(ks[5], (d,)),
        wo=n(ks[6], (d, d)), bo=n(ks[7], (d,)),
        g1=1.0 + n(ks[8], (d,)), be1=n(ks[9], (d,)),
        w1=n(ks[10], (d, ff)), b1=n(ks[11], (ff,)),
        w2=n(ks[12], (ff, d)), b2=n(ks[13], (d,)),
        g2=1.0 + n(ks[14], (d,)), be2=n(ks[15], (d,)),
    )


def init_bn(key, f):
    ks = jax.random.split(key, 4)
    return dict(
        gamma=1.0 + 0.05 * jax.random.normal(ks[0], (f,), jnp.float32),
        beta=0.05 * jax.random.normal(ks[1], (f,), jnp.float32),
        mean=0.05 * jax.random.normal(ks[2], (f,), jnp.float32),
        var=1.0 + 0.1 * jnp.abs(jax.random.normal(ks[3], (f,), jnp.float32)),
    )


def pack_encoder_layer(p, nhead):
    d = p["wq"].shape[0]
    f = p["w1"].shape[1]
    scale = 1.0 / math.sqrt(d // nhead)
    wqkv = jnp.concatenate([p["wq"] * scale, p["wk"], p["wv"]], axis=1)   # (d, 3d)
    bqkv = jnp.concatenate([p["bq"] * scale, p["bk"], p["bv"]], axis=0)   # (3d,)
    vmax = max(3 * d, f)
    rows = [bqkv, p["bo"], p["g1"], p["be1"], p["b1"], p["b2"], p["g2"], p["be2"]]
    vecs = jnp.zeros((8, vmax), jnp.float32)
    for i, r in enumerate(rows):
        vecs = vecs.at[i, :r.shape[0]].set(r)
    return dict(wqkv=wqkv, wo=p["wo"], w1=p["w1"], w2=p["w2"], vecs=vecs)


def fold_bn_into_linear(bn, w, b, eps=1e-5):
    """y = BN_eval(x) @ W + b  ==  x @ W' + b'  (exact algebraic fold)."""
    s = bn["gamma"] * jax.lax.rsqrt(bn["var"] + eps)
    w_f = w * s[:, None]
    b_f = b + (bn["beta"] - bn["mean"] * s) @ w
    return w_f, b_f


def prepare_params(raw, cfg):
    E, DIM = cfg["E"], cfg["DIM"]
    ae_layer = pack_encoder_layer(raw["ae_layer"], cfg["AE_NHEAD"])
    price_layers = [pack_encoder_layer(p, cfg["NHEAD"]) for p in raw["price_layers"]]

    w_lt, b_lt = fold_bn_into_linear(raw["bn_price"], raw["w_lt"], raw["b_lt"])
    w_fin, b_fin = fold_bn_into_linear(raw["bn_final"], raw["w_final"], raw["b_final"])
    hv = jnp.zeros((8, max(E, DIM)), jnp.float32)
    hv = hv.at[0, :E].set(raw["b_ae"]).at[1, :E].set(b_lt).at[2, :DIM].set(b_fin)
    head = dict(w_ae=raw["w_ae"], w_lt=w_lt, wf_m=w_fin[:E], wf_p=w_fin[E:], vecs=hv)
    return dict(ae_layer=ae_layer, price_layers=price_layers, head=head)


# ============================================================================
# ReturnPrediction.forward
# ============================================================================
def return_prediction_forward(prep, cfg, price_series, macro_series,
                              macro_padding_mask, price_padding_mask):
    B, S, Dp = price_series.shape
    Dm = macro_series.shape[-1]

    mmask = jnp.where(macro_padding_mask, -1e9, 0.0).astype(jnp.float32)
    if price_padding_mask is None:
        pmask = jnp.zeros((B, S), jnp.float32)
    else:
        pmask = jnp.where(price_padding_mask, -1e9, 0.0).astype(jnp.float32)

    xm2d = macro_series.astype(jnp.float32).reshape(B * S, Dm)
    xp2d = price_series.astype(jnp.float32).reshape(B * S, Dp)

    m2d, p2d = fused_encoders(xm2d, xp2d, mmask, pmask,
                              prep["ae_layer"], prep["price_layers"], cfg)

    # Flatten (nn.Flatten(1, -1)); lane-dense (B, S*D) slabs for the head matmuls.
    m_flat = m2d.reshape(B, S * Dm)
    p_flat = p2d.reshape(B, S * Dp)
    return fused_head(m_flat, p_flat, prep["head"], cfg)


# ============================================================================
# Pure-JAX reference (unfolded math) for validation
# ============================================================================
def _ref_layernorm(x, g, b, eps=1e-5):
    mu = x.mean(-1, keepdims=True)
    var = ((x - mu) ** 2).mean(-1, keepdims=True)
    return (x - mu) * jax.lax.rsqrt(var + eps) * g + b


def _ref_encoder_layer(x, pad_mask, p, nhead):
    B, S, D = x.shape
    hd = D // nhead
    add = jnp.where(pad_mask, -1e9, 0.0)[:, None, None, :]
    q = x @ p["wq"] + p["bq"]
    k = x @ p["wk"] + p["bk"]
    v = x @ p["wv"] + p["bv"]
    sp = lambda t: t.reshape(B, S, nhead, hd).transpose(0, 2, 1, 3)
    s = jnp.einsum("bhqd,bhkd->bhqk", sp(q), sp(k)) / math.sqrt(hd) + add
    a = jax.nn.softmax(s, axis=-1)
    ctx = jnp.einsum("bhqk,bhkd->bhqd", a, sp(v)).transpose(0, 2, 1, 3).reshape(B, S, D)
    y = _ref_layernorm(x + ctx @ p["wo"] + p["bo"], p["g1"], p["be1"])
    ff = jax.nn.relu(y @ p["w1"] + p["b1"]) @ p["w2"] + p["b2"]
    return _ref_layernorm(y + ff, p["g2"], p["be2"])


def _ref_bn(x, bn, eps=1e-5):
    return (x - bn["mean"]) * jax.lax.rsqrt(bn["var"] + eps) * bn["gamma"] + bn["beta"]


def reference_forward(raw, cfg, price, macro, mpad, ppad):
    B = price.shape[0]
    m = _ref_encoder_layer(macro, mpad, raw["ae_layer"], cfg["AE_NHEAD"])
    macro_enc = m.reshape(B, -1) @ raw["w_ae"] + raw["b_ae"]
    x = price
    pp = ppad if ppad is not None else jnp.zeros(price.shape[:2], bool)
    for lp in raw["price_layers"]:
        x = _ref_encoder_layer(x, pp, lp, cfg["NHEAD"])
    price_enc = _ref_bn(x.reshape(B, -1), raw["bn_price"]) @ raw["w_lt"] + raw["b_lt"]
    enc = jnp.concatenate([macro_enc, price_enc], axis=-1)
    return _ref_bn(enc, raw["bn_final"]) @ raw["w_final"] + raw["b_final"]


# ============================================================================
if __name__ == "__main__":
    cfg = dict(B=2, S=16, DIM=8, NHEAD=2, NLAYERS=2, FF=32,
               AE_DIM=16, AE_NHEAD=2, AE_FF=32, E=2)

    root = jax.random.PRNGKey(0)
    keys = jax.random.split(root, 16)

    raw = dict(
        price_layers=[init_encoder_layer(keys[i], cfg["DIM"], cfg["FF"])
                      for i in range(cfg["NLAYERS"])],
        ae_layer=init_encoder_layer(keys[4], cfg["AE_DIM"], cfg["AE_FF"]),
        w_ae=0.05 * jax.random.normal(keys[5], (cfg["S"] * cfg["AE_DIM"], cfg["E"]), jnp.float32),
        b_ae=0.05 * jax.random.normal(keys[6], (cfg["E"],), jnp.float32),
        bn_price=init_bn(keys[7], cfg["S"] * cfg["DIM"]),
        w_lt=0.05 * jax.random.normal(keys[8], (cfg["S"] * cfg["DIM"], cfg["E"]), jnp.float32),
        b_lt=0.05 * jax.random.normal(keys[9], (cfg["E"],), jnp.float32),
        bn_final=init_bn(keys[10], 2 * cfg["E"]),
        w_final=0.05 * jax.random.normal(keys[11], (2 * cfg["E"], cfg["DIM"]), jnp.float32),
        b_final=0.05 * jax.random.normal(keys[12], (cfg["DIM"],), jnp.float32),
    )
    prep = prepare_params(raw, cfg)

    price_series = jax.random.normal(keys[13], (cfg["B"], cfg["S"], cfg["DIM"]), jnp.float32)
    macro_series = jax.random.normal(keys[14], (cfg["B"], cfg["S"], cfg["AE_DIM"]), jnp.float32)
    # key padding masks: True = padded/ignored (torch convention)
    macro_padding_mask = jnp.zeros((cfg["B"], cfg["S"]), bool).at[:, -3:].set(True)
    price_padding_mask = jnp.zeros((cfg["B"], cfg["S"]), bool).at[:, -2:].set(True)

    fwd = jax.jit(lambda ps, ms, mm, pm: return_prediction_forward(prep, cfg, ps, ms, mm, pm))
    prediction = jax.block_until_ready(
        fwd(price_series, macro_series, macro_padding_mask, price_padding_mask))
    assert prediction.shape == (cfg["B"], cfg["DIM"]) and prediction.dtype == jnp.float32

    ref = reference_forward(raw, cfg, price_series, macro_series,
                            macro_padding_mask, price_padding_mask)
    max_err = float(jnp.max(jnp.abs(prediction - ref)))
    if not (max_err < 2e-2):
        raise AssertionError(f"kernel/reference mismatch: max_abs_err={max_err}")
    print("KERNEL_OK")
</pallas_src>

<mosaic_0001>
module attributes {stable_mosaic.version = 11 : i64} {
  func.func @fused_encoders_kernel(%arg0: i32, %arg1: memref<32x16xf32, #tpu.memory_space<vmem>>, %arg2: memref<32x8xf32, #tpu.memory_space<vmem>>, %arg3: memref<2x16xf32, #tpu.memory_space<vmem>>, %arg4: memref<2x16xf32, #tpu.memory_space<vmem>>, %arg5: memref<16x48xf32, #tpu.memory_space<vmem>>, %arg6: memref<16x16xf32, #tpu.memory_space<vmem>>, %arg7: memref<16x32xf32, #tpu.memory_space<vmem>>, %arg8: memref<32x16xf32, #tpu.memory_space<vmem>>, %arg9: memref<8x48xf32, #tpu.memory_space<vmem>>, %arg10: memref<8x24xf32, #tpu.memory_space<vmem>>, %arg11: memref<8x8xf32, #tpu.memory_space<vmem>>, %arg12: memref<8x32xf32, #tpu.memory_space<vmem>>, %arg13: memref<32x8xf32, #tpu.memory_space<vmem>>, %arg14: memref<8x32xf32, #tpu.memory_space<vmem>>, %arg15: memref<8x24xf32, #tpu.memory_space<vmem>>, %arg16: memref<8x8xf32, #tpu.memory_space<vmem>>, %arg17: memref<8x32xf32, #tpu.memory_space<vmem>>, %arg18: memref<32x8xf32, #tpu.memory_space<vmem>>, %arg19: memref<8x32xf32, #tpu.memory_space<vmem>>, %arg20: memref<32x16xf32, #tpu.memory_space<vmem>>, %arg21: memref<32x8xf32, #tpu.memory_space<vmem>>) attributes {dimension_semantics = [#tpu.dimension_semantics<arbitrary>], iteration_bounds = array<i64: 1>, scalar_prefetch = 0 : i64, scratch_operands = 0 : i64, tpu.core_type = #tpu.core_type<tc>, window_params = [{pipeline_mode = #tpu.pipeline_mode<synchronous>, transform_indices = @transform_0, window_bounds = array<i64: 32, 16>}, {pipeline_mode = #tpu.pipeline_mode<synchronous>, transform_indices = @transform_1, window_bounds = array<i64: 32, 8>}, {pipeline_mode = #tpu.pipeline_mode<synchronous>, transform_indices = @transform_2, window_bounds = array<i64: 2, 16>}, {pipeline_mode = #tpu.pipeline_mode<synchronous>, transform_indices = @transform_3, window_bounds = array<i64: 2, 16>}, {pipeline_mode = #tpu.pipeline_mode<synchronous>, transform_indices = @transform_4, window_bounds = array<i64: 16, 48>}, {pipeline_mode = #tpu.pipeline_mode<synchronous>, transform_indices = @transform_5, window_bounds = array<i64: 16, 16>}, {pipeline_mode = #tpu.pipeline_mode<synchronous>, transform_indices = @transform_6, window_bounds = array<i64: 16, 32>}, {pipeline_mode = #tpu.pipeline_mode<synchronous>, transform_indices = @transform_7, window_bounds = array<i64: 32, 16>}, {pipeline_mode = #tpu.pipeline_mode<synchronous>, transform_indices = @transform_8, window_bounds = array<i64: 8, 48>}, {pipeline_mode = #tpu.pipeline_mode<synchronous>, transform_indices = @transform_9, window_bounds = array<i64: 8, 24>}, {pipeline_mode = #tpu.pipeline_mode<synchronous>, transform_indices = @transform_10, window_bounds = array<i64: 8, 8>}, {pipeline_mode = #tpu.pipeline_mode<synchronous>, transform_indices = @transform_11, window_bounds = array<i64: 8, 32>}, {pipeline_mode = #tpu.pipeline_mode<synchronous>, transform_indices = @transform_12, window_bounds = array<i64: 32, 8>}, {pipeline_mode = #tpu.pipeline_mode<synchronous>, transform_indices = @transform_13, window_bounds = array<i64: 8, 32>}, {pipeline_mode = #tpu.pipeline_mode<synchronous>, transform_indices = @transform_14, window_bounds = array<i64: 8, 24>}, {pipeline_mode = #tpu.pipeline_mode<synchronous>, transform_indices = @transform_15, window_bounds = array<i64: 8, 8>}, {pipeline_mode = #tpu.pipeline_mode<synchronous>, transform_indices = @transform_16, window_bounds = array<i64: 8, 32>}, {pipeline_mode = #tpu.pipeline_mode<synchronous>, transform_indices = @transform_17, window_bounds = array<i64: 32, 8>}, {pipeline_mode = #tpu.pipeline_mode<synchronous>, transform_indices = @transform_18, window_bounds = array<i64: 8, 32>}, {pipeline_mode = #tpu.pipeline_mode<synchronous>, transform_indices = @transform_19, window_bounds = array<i64: 32, 16>}, {pipeline_mode = #tpu.pipeline_mode<synchronous>, transform_indices = @transform_20, window_bounds = array<i64: 32, 8>}]} {
    %c0 = arith.constant 0 : index
    %c0_0 = arith.constant 0 : index
    %0 = vector.load %arg1[%c0, %c0_0] : memref<32x16xf32, #tpu.memory_space<vmem>>, vector<32x16xf32>
    %c0_1 = arith.constant 0 : index
    %c0_2 = arith.constant 0 : index
    %1 = vector.load %arg3[%c0_1, %c0_2] : memref<2x16xf32, #tpu.memory_space<vmem>>, vector<2x16xf32>
    %c0_3 = arith.constant 0 : index
    %c0_4 = arith.constant 0 : index
    %2 = vector.load %arg9[%c0_3, %c0_4] : memref<8x48xf32, #tpu.memory_space<vmem>>, vector<8x48xf32>
    %3 = vector.extract_strided_slice %2 {offsets = [0, 0], sizes = [1, 48], strides = [1, 1]} : vector<8x48xf32> to vector<1x48xf32>
    %4 = vector.extract_strided_slice %2 {offsets = [1, 0], sizes = [1, 16], strides = [1, 1]} : vector<8x48xf32> to vector<1x16xf32>
    %5 = vector.extract_strided_slice %2 {offsets = [2, 0], sizes = [1, 16], strides = [1, 1]} : vector<8x48xf32> to vector<1x16xf32>
    %6 = vector.extract_strided_slice %2 {offsets = [3, 0], sizes = [1, 16], strides = [1, 1]} : vector<8x48xf32> to vector<1x16xf32>
    %7 = vector.extract_strided_slice %2 {offsets = [4, 0], sizes = [1, 32], strides = [1, 1]} : vector<8x48xf32> to vector<1x32xf32>
    %8 = vector.extract_strided_slice %2 {offsets = [5, 0], sizes = [1, 16], strides = [1, 1]} : vector<8x48xf32> to vector<1x16xf32>
    %9 = vector.extract_strided_slice %2 {offsets = [6, 0], sizes = [1, 16], strides = [1, 1]} : vector<8x48xf32> to vector<1x16xf32>
    %10 = vector.extract_strided_slice %2 {offsets = [7, 0], sizes = [1, 16], strides = [1, 1]} : vector<8x48xf32> to vector<1x16xf32>
    %c0_5 = arith.constant 0 : index
    %c0_6 = arith.constant 0 : index
    %11 = vector.load %arg5[%c0_5, %c0_6] : memref<16x48xf32, #tpu.memory_space<vmem>>, vector<16x48xf32>
    %cst = arith.constant dense<0.000000e+00> : vector<32x48xf32>
    %12 = tpu.matmul %0, %11, %cst {dimension_numbers = #tpu.dot_dimension_numbers<[1], [0], [0], [1], [0, 0, 1, 1], [], []>} : vector<32x16xf32>, vector<16x48xf32>, vector<32x48xf32> -> vector<32x48xf32>
    %13 = vector.broadcast %3 : vector<1x48xf32> to vector<32x48xf32>
    %14 = arith.addf %12, %13 : vector<32x48xf32>
    %15 = vector.extract_strided_slice %14 {offsets = [0, 0], sizes = [32, 16], strides = [1, 1]} : vector<32x48xf32> to vector<32x16xf32>
    %16 = vector.extract_strided_slice %14 {offsets = [0, 16], sizes = [32, 16], strides = [1, 1]} : vector<32x48xf32> to vector<32x16xf32>
    %17 = vector.extract_strided_slice %14 {offsets = [0, 32], sizes = [32, 16], strides = [1, 1]} : vector<32x48xf32> to vector<32x16xf32>
    %18 = tpu.iota {dimensions = array<i32: 1>} : vector<1x16xi32>
    %19 = vector.extract_strided_slice %15 {offsets = [0, 0], sizes = [16, 16], strides = [1, 1]} : vector<32x16xf32> to vector<16x16xf32>
    %20 = vector.extract_strided_slice %16 {offsets = [0, 0], sizes = [16, 16], strides = [1, 1]} : vector<32x16xf32> to vector<16x16xf32>
    %21 = vector.extract_strided_slice %17 {offsets = [0, 0], sizes = [16, 16], strides = [1, 1]} : vector<32x16xf32> to vector<16x16xf32>
    %22 = vector.extract_strided_slice %1 {offsets = [0, 0], sizes = [1, 16], strides = [1, 1]} : vector<2x16xf32> to vector<1x16xf32>
    %cst_7 = arith.constant 0.000000e+00 : f32
    %23 = vector.broadcast %cst_7 : f32 to vector<16x16xf32>
    %c0_i32 = arith.constant 0 : i32
    %24 = vector.broadcast %c0_i32 : i32 to vector<1x16xi32>
    %25 = arith.cmpi sge, %18, %24 : vector<1x16xi32>
    %c8_i32 = arith.constant 8 : i32
    %26 = vector.broadcast %c8_i32 : i32 to vector<1x16xi32>
    %27 = arith.cmpi slt, %18, %26 : vector<1x16xi32>
    %28 = arith.andi %25, %27 : vector<1x16xi1>
    %29 = arith.extui %28 : vector<1x16xi1> to vector<1x16xi32>
    %30 = arith.sitofp %29 : vector<1x16xi32> to vector<1x16xf32>
    %31 = vector.broadcast %30 : vector<1x16xf32> to vector<16x16xf32>
    %32 = arith.mulf %19, %31 : vector<16x16xf32>
    %33 = tpu.transpose %20, [1, 0] : vector<16x16xf32> -> vector<16x16xf32>
    %cst_8 = arith.constant dense<0.000000e+00> : vector<16x16xf32>
    %34 = tpu.matmul %32, %33, %cst_8 {dimension_numbers = #tpu.dot_dimension_numbers<[1], [0], [0], [1], [0, 0, 1, 1], [], []>} : vector<16x16xf32>, vector<16x16xf32>, vector<16x16xf32> -> vector<16x16xf32>
    %35 = vector.broadcast %22 : vector<1x16xf32> to vector<16x16xf32>
    %36 = arith.addf %34, %35 : vector<16x16xf32>
    %cst_9 = arith.constant dense<0xFF800000> : vector<16xf32>
    %37 = vector.multi_reduction <maximumf>, %36, %cst_9 [1] : vector<16x16xf32> to vector<16xf32>
    %38 = vector.shape_cast %37 : vector<16xf32> to vector<16x1xf32>
    %39 = vector.broadcast %38 : vector<16x1xf32> to vector<16x16xf32>
    %40 = arith.subf %36, %39 : vector<16x16xf32>
    %41 = math.exp %40 : vector<16x16xf32>
    %cst_10 = arith.constant dense<0.000000e+00> : vector<16xf32>
    %42 = vector.multi_reduction <add>, %41, %cst_10 [1] : vector<16x16xf32> to vector<16xf32>
    %43 = vector.shape_cast %42 : vector<16xf32> to vector<16x1xf32>
    %44 = tpu.reciprocal %43 {approx = true} : vector<16x1xf32> -> vector<16x1xf32>
    %45 = vector.broadcast %44 : vector<16x1xf32> to vector<16x16xf32>
    %46 = arith.mulf %41, %45 : vector<16x16xf32>
    %cst_11 = arith.constant dense<0.000000e+00> : vector<16x16xf32>
    %47 = tpu.matmul %46, %21, %cst_11 {dimension_numbers = #tpu.dot_dimension_numbers<[1], [0], [0], [1], [0, 0, 1, 1], [], []>} : vector<16x16xf32>, vector<16x16xf32>, vector<16x16xf32> -> vector<16x16xf32>
    %48 = vector.broadcast %30 : vector<1x16xf32> to vector<16x16xf32>
    %49 = arith.mulf %47, %48 : vector<16x16xf32>
    %50 = arith.addf %23, %49 : vector<16x16xf32>
    %c8_i32_12 = arith.constant 8 : i32
    %51 = vector.broadcast %c8_i32_12 : i32 to vector<1x16xi32>
    %52 = arith.cmpi sge, %18, %51 : vector<1x16xi32>
    %c16_i32 = arith.constant 16 : i32
    %53 = vector.broadcast %c16_i32 : i32 to vector<1x16xi32>
    %54 = arith.cmpi slt, %18, %53 : vector<1x16xi32>
    %55 = arith.andi %52, %54 : vector<1x16xi1>
    %56 = arith.extui %55 : vector<1x16xi1> to vector<1x16xi32>
    %57 = arith.sitofp %56 : vector<1x16xi32> to vector<1x16xf32>
    %58 = vector.broadcast %57 : vector<1x16xf32> to vector<16x16xf32>
    %59 = arith.mulf %19, %58 : vector<16x16xf32>
    %60 = tpu.transpose %20, [1, 0] : vector<16x16xf32> -> vector<16x16xf32>
    %cst_13 = arith.constant dense<0.000000e+00> : vector<16x16xf32>
    %61 = tpu.matmul %59, %60, %cst_13 {dimension_numbers = #tpu.dot_dimension_numbers<[1], [0], [0], [1], [0, 0, 1, 1], [], []>} : vector<16x16xf32>, vector<16x16xf32>, vector<16x16xf32> -> vector<16x16xf32>
    %62 = vector.broadcast %22 : vector<1x16xf32> to vector<16x16xf32>
    %63 = arith.addf %61, %62 : vector<16x16xf32>
    %cst_14 = arith.constant dense<0xFF800000> : vector<16xf32>
    %64 = vector.multi_reduction <maximumf>, %63, %cst_14 [1] : vector<16x16xf32> to vector<16xf32>
    %65 = vector.shape_cast %64 : vector<16xf32> to vector<16x1xf32>
    %66 = vector.broadcast %65 : vector<16x1xf32> to vector<16x16xf32>
    %67 = arith.subf %63, %66 : vector<16x16xf32>
    %68 = math.exp %67 : vector<16x16xf32>
    %cst_15 = arith.constant dense<0.000000e+00> : vector<16xf32>
    %69 = vector.multi_reduction <add>, %68, %cst_15 [1] : vector<16x16xf32> to vector<16xf32>
    %70 = vector.shape_cast %69 : vector<16xf32> to vector<16x1xf32>
    %71 = tpu.reciprocal %70 {approx = true} : vector<16x1xf32> -> vector<16x1xf32>
    %72 = vector.broadcast %71 : vector<16x1xf32> to vector<16x16xf32>
    %73 = arith.mulf %68, %72 : vector<16x16xf32>
    %cst_16 = arith.constant dense<0.000000e+00> : vector<16x16xf32>
    %74 = tpu.matmul %73, %21, %cst_16 {dimension_numbers = #tpu.dot_dimension_numbers<[1], [0], [0], [1], [0, 0, 1, 1], [], []>} : vector<16x16xf32>, vector<16x16xf32>, vector<16x16xf32> -> vector<16x16xf32>
    %75 = vector.broadcast %57 : vector<1x16xf32> to vector<16x16xf32>
    %76 = arith.mulf %74, %75 : vector<16x16xf32>
    %77 = arith.addf %50, %76 : vector<16x16xf32>
    %78 = vector.extract_strided_slice %15 {offsets = [16, 0], sizes = [16, 16], strides = [1, 1]} : vector<32x16xf32> to vector<16x16xf32>
    %79 = vector.extract_strided_slice %16 {offsets = [16, 0], sizes = [16, 16], strides = [1, 1]} : vector<32x16xf32> to vector<16x16xf32>
    %80 = vector.extract_strided_slice %17 {offsets = [16, 0], sizes = [16, 16], strides = [1, 1]} : vector<32x16xf32> to vector<16x16xf32>
    %81 = vector.extract_strided_slice %1 {offsets = [1, 0], sizes = [1, 16], strides = [1, 1]} : vector<2x16xf32> to vector<1x16xf32>
    %cst_17 = arith.constant 0.000000e+00 : f32
    %82 = vector.broadcast %cst_17 : f32 to vector<16x16xf32>
    %c0_i32_18 = arith.constant 0 : i32
    %83 = vector.broadcast %c0_i32_18 : i32 to vector<1x16xi32>
    %84 = arith.cmpi sge, %18, %83 : vector<1x16xi32>
    %c8_i32_19 = arith.constant 8 : i32
    %85 = vector.broadcast %c8_i32_19 : i32 to vector<1x16xi32>
    %86 = arith.cmpi slt, %18, %85 : vector<1x16xi32>
    %87 = arith.andi %84, %86 : vector<1x16xi1>
    %88 = arith.extui %87 : vector<1x16xi1> to vector<1x16xi32>
    %89 = arith.sitofp %88 : vector<1x16xi32> to vector<1x16xf32>
    %90 = vector.broadcast %89 : vector<1x16xf32> to vector<16x16xf32>
    %91 = arith.mulf %78, %90 : vector<16x16xf32>
    %92 = tpu.transpose %79, [1, 0] : vector<16x16xf32> -> vector<16x16xf32>
    %cst_20 = arith.constant dense<0.000000e+00> : vector<16x16xf32>
    %93 = tpu.matmul %91, %92, %cst_20 {dimension_numbers = #tpu.dot_dimension_numbers<[1], [0], [0], [1], [0, 0, 1, 1], [], []>} : vector<16x16xf32>, vector<16x16xf32>, vector<16x16xf32> -> vector<16x16xf32>
    %94 = vector.broadcast %81 : vector<1x16xf32> to vector<16x16xf32>
    %95 = arith.addf %93, %94 : vector<16x16xf32>
    %cst_21 = arith.constant dense<0xFF800000> : vector<16xf32>
    %96 = vector.multi_reduction <maximumf>, %95, %cst_21 [1] : vector<16x16xf32> to vector<16xf32>
    %97 = vector.shape_cast %96 : vector<16xf32> to vector<16x1xf32>
    %98 = vector.broadcast %97 : vector<16x1xf32> to vector<16x16xf32>
    %99 = arith.subf %95, %98 : vector<16x16xf32>
    %100 = math.exp %99 : vector<16x16xf32>
    %cst_22 = arith.constant dense<0.000000e+00> : vector<16xf32>
    %101 = vector.multi_reduction <add>, %100, %cst_22 [1] : vector<16x16xf32> to vector<16xf32>
    %102 = vector.shape_cast %101 : vector<16xf32> to vector<16x1xf32>
    %103 = tpu.reciprocal %102 {approx = true} : vector<16x1xf32> -> vector<16x1xf32>
    %104 = vector.broadcast %103 : vector<16x1xf32> to vector<16x16xf32>
    %105 = arith.mulf %100, %104 : vector<16x16xf32>
    %cst_23 = arith.constant dense<0.000000e+00> : vector<16x16xf32>
    %106 = tpu.matmul %105, %80, %cst_23 {dimension_numbers = #tpu.dot_dimension_numbers<[1], [0], [0], [1], [0, 0, 1, 1], [], []>} : vector<16x16xf32>, vector<16x16xf32>, vector<16x16xf32> -> vector<16x16xf32>
    %107 = vector.broadcast %89 : vector<1x16xf32> to vector<16x16xf32>
    %108 = arith.mulf %106, %107 : vector<16x16xf32>
    %109 = arith.addf %82, %108 : vector<16x16xf32>
    %c8_i32_24 = arith.constant 8 : i32
    %110 = vector.broadcast %c8_i32_24 : i32 to vector<1x16xi32>
    %111 = arith.cmpi sge, %18, %110 : vector<1x16xi32>
    %c16_i32_25 = arith.constant 16 : i32
    %112 = vector.broadcast %c16_i32_25 : i32 to vector<1x16xi32>
    %113 = arith.cmpi slt, %18, %112 : vector<1x16xi32>
    %114 = arith.andi %111, %113 : vector<1x16xi1>
    %115 = arith.extui %114 : vector<1x16xi1> to vector<1x16xi32>
    %116 = arith.sitofp %115 : vector<1x16xi32> to vector<1x16xf32>
    %117 = vector.broadcast %116 : vector<1x16xf32> to vector<16x16xf32>
    %118 = arith.mulf %78, %117 : vector<16x16xf32>
    %119 = tpu.transpose %79, [1, 0] : vector<16x16xf32> -> vector<16x16xf32>
    %cst_26 = arith.constant dense<0.000000e+00> : vector<16x16xf32>
    %120 = tpu.matmul %118, %119, %cst_26 {dimension_numbers = #tpu.dot_dimension_numbers<[1], [0], [0], [1], [0, 0, 1, 1], [], []>} : vector<16x16xf32>, vector<16x16xf32>, vector<16x16xf32> -> vector<16x16xf32>
    %121 = vector.broadcast %81 : vector<1x16xf32> to vector<16x16xf32>
    %122 = arith.addf %120, %121 : vector<16x16xf32>
    %cst_27 = arith.constant dense<0xFF800000> : vector<16xf32>
    %123 = vector.multi_reduction <maximumf>, %122, %cst_27 [1] : vector<16x16xf32> to vector<16xf32>
    %124 = vector.shape_cast %123 : vector<16xf32> to vector<16x1xf32>
    %125 = vector.broadcast %124 : vector<16x1xf32> to vector<16x16xf32>
    %126 = arith.subf %122, %125 : vector<16x16xf32>
    %127 = math.exp %126 : vector<16x16xf32>
    %cst_28 = arith.constant dense<0.000000e+00> : vector<16xf32>
    %128 = vector.multi_reduction <add>, %127, %cst_28 [1] : vector<16x16xf32> to vector<16xf32>
    %129 = vector.shape_cast %128 : vector<16xf32> to vector<16x1xf32>
    %130 = tpu.reciprocal %129 {approx = true} : vector<16x1xf32> -> vector<16x1xf32>
    %131 = vector.broadcast %130 : vector<16x1xf32> to vector<16x16xf32>
    %132 = arith.mulf %127, %131 : vector<16x16xf32>
    %cst_29 = arith.constant dense<0.000000e+00> : vector<16x16xf32>
    %133 = tpu.matmul %132, %80, %cst_29 {dimension_numbers = #tpu.dot_dimension_numbers<[1], [0], [0], [1], [0, 0, 1, 1], [], []>} : vector<16x16xf32>, vector<16x16xf32>, vector<16x16xf32> -> vector<16x16xf32>
    %134 = vector.broadcast %116 : vector<1x16xf32> to vector<16x16xf32>
    %135 = arith.mulf %133, %134 : vector<16x16xf32>
    %136 = arith.addf %109, %135 : vector<16x16xf32>
    %137 = tpu.concatenate %77, %136 in 0 : vector<16x16xf32>, vector<16x16xf32> -> vector<32x16xf32>
    %c0_30 = arith.constant 0 : index
    %c0_31 = arith.constant 0 : index
    %138 = vector.load %arg6[%c0_30, %c0_31] : memref<16x16xf32, #tpu.memory_space<vmem>>, vector<16x16xf32>
    %cst_32 = arith.constant dense<0.000000e+00> : vector<32x16xf32>
    %139 = tpu.matmul %137, %138, %cst_32 {dimension_numbers = #tpu.dot_dimension_numbers<[1], [0], [0], [1], [0, 0, 1, 1], [], []>} : vector<32x16xf32>, vector<16x16xf32>, vector<32x16xf32> -> vector<32x16xf32>
    %140 = arith.addf %0, %139 : vector<32x16xf32>
    %141 = vector.broadcast %4 : vector<1x16xf32> to vector<32x16xf32>
    %142 = arith.addf %140, %141 : vector<32x16xf32>
    %cst_33 = arith.constant dense<0.000000e+00> : vector<32xf32>
    %143 = vector.multi_reduction <add>, %142, %cst_33 [1] : vector<32x16xf32> to vector<32xf32>
    %144 = vector.shape_cast %143 : vector<32xf32> to vector<32x1xf32>
    %cst_34 = arith.constant 1.600000e+01 : f32
    %145 = vector.broadcast %cst_34 : f32 to vector<32x1xf32>
    %146 = arith.divf %144, %145 : vector<32x1xf32>
    %147 = vector.broadcast %146 : vector<32x1xf32> to vector<32x16xf32>
    %148 = arith.subf %142, %147 : vector<32x16xf32>
    %149 = vector.broadcast %146 : vector<32x1xf32> to vector<32x16xf32>
    %150 = arith.subf %142, %149 : vector<32x16xf32>
    %151 = arith.mulf %148, %150 : vector<32x16xf32>
    %cst_35 = arith.constant dense<0.000000e+00> : vector<32xf32>
    %152 = vector.multi_reduction <add>, %151, %cst_35 [1] : vector<32x16xf32> to vector<32xf32>
    %153 = vector.shape_cast %152 : vector<32xf32> to vector<32x1xf32>
    %cst_36 = arith.constant 1.600000e+01 : f32
    %154 = vector.broadcast %cst_36 : f32 to vector<32x1xf32>
    %155 = arith.divf %153, %154 : vector<32x1xf32>
    %156 = vector.broadcast %146 : vector<32x1xf32> to vector<32x16xf32>
    %157 = arith.subf %142, %156 : vector<32x16xf32>
    %cst_37 = arith.constant 9.99999974E-6 : f32
    %158 = vector.broadcast %cst_37 : f32 to vector<32x1xf32>
    %159 = arith.addf %155, %158 : vector<32x1xf32>
    %160 = math.rsqrt %159 : vector<32x1xf32>
    %161 = vector.broadcast %160 : vector<32x1xf32> to vector<32x16xf32>
    %162 = arith.mulf %157, %161 : vector<32x16xf32>
    %163 = vector.broadcast %5 : vector<1x16xf32> to vector<32x16xf32>
    %164 = arith.mulf %162, %163 : vector<32x16xf32>
    %165 = vector.broadcast %6 : vector<1x16xf32> to vector<32x16xf32>
    %166 = arith.addf %164, %165 : vector<32x16xf32>
    %c0_38 = arith.constant 0 : index
    %c0_39 = arith.constant 0 : index
    %167 = vector.load %arg7[%c0_38, %c0_39] : memref<16x32xf32, #tpu.memory_space<vmem>>, vector<16x32xf32>
    %cst_40 = arith.constant dense<0.000000e+00> : vector<32x32xf32>
    %168 = tpu.matmul %166, %167, %cst_40 {dimension_numbers = #tpu.dot_dimension_numbers<[1], [0], [0], [1], [0, 0, 1, 1], [], []>} : vector<32x16xf32>, vector<16x32xf32>, vector<32x32xf32> -> vector<32x32xf32>
    %169 = vector.broadcast %7 : vector<1x32xf32> to vector<32x32xf32>
    %170 = arith.addf %168, %169 : vector<32x32xf32>
    %cst_41 = arith.constant 0.000000e+00 : f32
    %171 = vector.broadcast %cst_41 : f32 to vector<32x32xf32>
    %172 = arith.maximumf %170, %171 : vector<32x32xf32>
    %c0_42 = arith.constant 0 : index
    %c0_43 = arith.constant 0 : index
    %173 = vector.load %arg8[%c0_42, %c0_43] : memref<32x16xf32, #tpu.memory_space<vmem>>, vector<32x16xf32>
    %cst_44 = arith.constant dense<0.000000e+00> : vector<32x16xf32>
    %174 = tpu.matmul %172, %173, %cst_44 {dimension_numbers = #tpu.dot_dimension_numbers<[1], [0], [0], [1], [0, 0, 1, 1], [], []>} : vector<32x32xf32>, vector<32x16xf32>, vector<32x16xf32> -> vector<32x16xf32>
    %175 = arith.addf %166, %174 : vector<32x16xf32>
    %176 = vector.broadcast %8 : vector<1x16xf32> to vector<32x16xf32>
    %177 = arith.addf %175, %176 : vector<32x16xf32>
    %cst_45 = arith.constant dense<0.000000e+00> : vector<32xf32>
    %178 = vector.multi_reduction <add>, %177, %cst_45 [1] : vector<32x16xf32> to vector<32xf32>
    %179 = vector.shape_cast %178 : vector<32xf32> to vector<32x1xf32>
    %cst_46 = arith.constant 1.600000e+01 : f32
    %180 = vector.broadcast %cst_46 : f32 to vector<32x1xf32>
    %181 = arith.divf %179, %180 : vector<32x1xf32>
    %182 = vector.broadcast %181 : vector<32x1xf32> to vector<32x16xf32>
    %183 = arith.subf %177, %182 : vector<32x16xf32>
    %184 = vector.broadcast %181 : vector<32x1xf32> to vector<32x16xf32>
    %185 = arith.subf %177, %184 : vector<32x16xf32>
    %186 = arith.mulf %183, %185 : vector<32x16xf32>
    %cst_47 = arith.constant dense<0.000000e+00> : vector<32xf32>
    %187 = vector.multi_reduction <add>, %186, %cst_47 [1] : vector<32x16xf32> to vector<32xf32>
    %188 = vector.shape_cast %187 : vector<32xf32> to vector<32x1xf32>
    %cst_48 = arith.constant 1.600000e+01 : f32
    %189 = vector.broadcast %cst_48 : f32 to vector<32x1xf32>
    %190 = arith.divf %188, %189 : vector<32x1xf32>
    %191 = vector.broadcast %181 : vector<32x1xf32> to vector<32x16xf32>
    %192 = arith.subf %177, %191 : vector<32x16xf32>
    %cst_49 = arith.constant 9.99999974E-6 : f32
    %193 = vector.broadcast %cst_49 : f32 to vector<32x1xf32>
    %194 = arith.addf %190, %193 : vector<32x1xf32>
    %195 = math.rsqrt %194 : vector<32x1xf32>
    %196 = vector.broadcast %195 : vector<32x1xf32> to vector<32x16xf32>
    %197 = arith.mulf %192, %196 : vector<32x16xf32>
    %198 = vector.broadcast %9 : vector<1x16xf32> to vector<32x16xf32>
    %199 = arith.mulf %197, %198 : vector<32x16xf32>
    %200 = vector.broadcast %10 : vector<1x16xf32> to vector<32x16xf32>
    %201 = arith.addf %199, %200 : vector<32x16xf32>
    %c0_50 = arith.constant 0 : index
    %c0_51 = arith.constant 0 : index
    %202 = vector.load %arg20[%c0_50, %c0_51] : memref<32x16xf32, #tpu.memory_space<vmem>>, vector<32x16xf32>
    tpu.vector_store %arg20[%c0_50, %c0_51], %201 {strides = array<i32>} : memref<32x16xf32, #tpu.memory_space<vmem>>, vector<32x16xf32>,
    %c0_52 = arith.constant 0 : index
    %c0_53 = arith.constant 0 : index
    %203 = vector.load %arg2[%c0_52, %c0_53] : memref<32x8xf32, #tpu.memory_space<vmem>>, vector<32x8xf32>
    %c0_54 = arith.constant 0 : index
    %c0_55 = arith.constant 0 : index
    %204 = vector.load %arg4[%c0_54, %c0_55] : memref<2x16xf32, #tpu.memory_space<vmem>>, vector<2x16xf32>
    %c0_56 = arith.constant 0 : index
    %c0_57 = arith.constant 0 : index
    %205 = vector.load %arg14[%c0_56, %c0_57] : memref<8x32xf32, #tpu.memory_space<vmem>>, vector<8x32xf32>
    %206 = vector.extract_strided_slice %205 {offsets = [0, 0], sizes = [1, 24], strides = [1, 1]} : vector<8x32xf32> to vector<1x24xf32>
    %207 = vector.extract_strided_slice %205 {offsets = [1, 0], sizes = [1, 8], strides = [1, 1]} : vector<8x32xf32> to vector<1x8xf32>
    %208 = vector.extract_strided_slice %205 {offsets = [2, 0], sizes = [1, 8], strides = [1, 1]} : vector<8x32xf32> to vector<1x8xf32>
    %209 = vector.extract_strided_slice %205 {offsets = [3, 0], sizes = [1, 8], strides = [1, 1]} : vector<8x32xf32> to vector<1x8xf32>
    %210 = vector.extract_strided_slice %205 {offsets = [4, 0], sizes = [1, 32], strides = [1, 1]} : vector<8x32xf32> to vector<1x32xf32>
    %211 = vector.extract_strided_slice %205 {offsets = [5, 0], sizes = [1, 8], strides = [1, 1]} : vector<8x32xf32> to vector<1x8xf32>
    %212 = vector.extract_strided_slice %205 {offsets = [6, 0], sizes = [1, 8], strides = [1, 1]} : vector<8x32xf32> to vector<1x8xf32>
    %213 = vector.extract_strided_slice %205 {offsets = [7, 0], sizes = [1, 8], strides = [1, 1]} : vector<8x32xf32> to vector<1x8xf32>
    %c0_58 = arith.constant 0 : index
    %c0_59 = arith.constant 0 : index
    %214 = vector.load %arg10[%c0_58, %c0_59] : memref<8x24xf32, #tpu.memory_space<vmem>>, vector<8x24xf32>
    %cst_60 = arith.constant dense<0.000000e+00> : vector<32x24xf32>
    %215 = tpu.matmul %203, %214, %cst_60 {dimension_numbers = #tpu.dot_dimension_numbers<[1], [0], [0], [1], [0, 0, 1, 1], [], []>} : vector<32x8xf32>, vector<8x24xf32>, vector<32x24xf32> -> vector<32x24xf32>
    %216 = vector.broadcast %206 : vector<1x24xf32> to vector<32x24xf32>
    %217 = arith.addf %215, %216 : vector<32x24xf32>
    %218 = vector.extract_strided_slice %217 {offsets = [0, 0], sizes = [32, 8], strides = [1, 1]} : vector<32x24xf32> to vector<32x8xf32>
    %219 = vector.extract_strided_slice %217 {offsets = [0, 8], sizes = [32, 8], strides = [1, 1]} : vector<32x24xf32> to vector<32x8xf32>
    %220 = vector.extract_strided_slice %217 {offsets = [0, 16], sizes = [32, 8], strides = [1, 1]} : vector<32x24xf32> to vector<32x8xf32>
    %221 = tpu.iota {dimensions = array<i32: 1>} : vector<1x8xi32>
    %222 = vector.extract_strided_slice %218 {offsets = [0, 0], sizes = [16, 8], strides = [1, 1]} : vector<32x8xf32> to vector<16x8xf32>
    %223 = vector.extract_strided_slice %219 {offsets = [0, 0], sizes = [16, 8], strides = [1, 1]} : vector<32x8xf32> to vector<16x8xf32>
    %224 = vector.extract_strided_slice %220 {offsets = [0, 0], sizes = [16, 8], strides = [1, 1]} : vector<32x8xf32> to vector<16x8xf32>
    %225 = vector.extract_strided_slice %204 {offsets = [0, 0], sizes = [1, 16], strides = [1, 1]} : vector<2x16xf32> to vector<1x16xf32>
    %cst_61 = arith.constant 0.000000e+00 : f32
    %226 = vector.broadcast %cst_61 : f32 to vector<16x8xf32>
    %c0_i32_62 = arith.constant 0 : i32
    %227 = vector.broadcast %c0_i32_62 : i32 to vector<1x8xi32>
    %228 = arith.cmpi sge, %221, %227 : vector<1x8xi32>
    %c4_i32 = arith.constant 4 : i32
    %229 = vector.broadcast %c4_i32 : i32 to vector<1x8xi32>
    %230 = arith.cmpi slt, %221, %229 : vector<1x8xi32>
    %231 = arith.andi %228, %230 : vector<1x8xi1>
    %232 = arith.extui %231 : vector<1x8xi1> to vector<1x8xi32>
    %233 = arith.sitofp %232 : vector<1x8xi32> to vector<1x8xf32>
    %234 = vector.broadcast %233 : vector<1x8xf32> to vector<16x8xf32>
    %235 = arith.mulf %222, %234 : vector<16x8xf32>
    %236 = tpu.transpose %223, [1, 0] : vector<16x8xf32> -> vector<8x16xf32>
    %cst_63 = arith.constant dense<0.000000e+00> : vector<16x16xf32>
    %237 = tpu.matmul %235, %236, %cst_63 {dimension_numbers = #tpu.dot_dimension_numbers<[1], [0], [0], [1], [0, 0, 1, 1], [], []>} : vector<16x8xf32>, vector<8x16xf32>, vector<16x16xf32> -> vector<16x16xf32>
    %238 = vector.broadcast %225 : vector<1x16xf32> to vector<16x16xf32>
    %239 = arith.addf %237, %238 : vector<16x16xf32>
    %cst_64 = arith.constant dense<0xFF800000> : vector<16xf32>
    %240 = vector.multi_reduction <maximumf>, %239, %cst_64 [1] : vector<16x16xf32> to vector<16xf32>
    %241 = vector.shape_cast %240 : vector<16xf32> to vector<16x1xf32>
    %242 = vector.broadcast %241 : vector<16x1xf32> to vector<16x16xf32>
    %243 = arith.subf %239, %242 : vector<16x16xf32>
    %244 = math.exp %243 : vector<16x16xf32>
    %cst_65 = arith.constant dense<0.000000e+00> : vector<16xf32>
    %245 = vector.multi_reduction <add>, %244, %cst_65 [1] : vector<16x16xf32> to vector<16xf32>
    %246 = vector.shape_cast %245 : vector<16xf32> to vector<16x1xf32>
    %247 = tpu.reciprocal %246 {approx = true} : vector<16x1xf32> -> vector<16x1xf32>
    %248 = vector.broadcast %247 : vector<16x1xf32> to vector<16x16xf32>
    %249 = arith.mulf %244, %248 : vector<16x16xf32>
    %cst_66 = arith.constant dense<0.000000e+00> : vector<16x8xf32>
    %250 = tpu.matmul %249, %224, %cst_66 {dimension_numbers = #tpu.dot_dimension_numbers<[1], [0], [0], [1], [0, 0, 1, 1], [], []>} : vector<16x16xf32>, vector<16x8xf32>, vector<16x8xf32> -> vector<16x8xf32>
    %251 = vector.broadcast %233 : vector<1x8xf32> to vector<16x8xf32>
    %252 = arith.mulf %250, %251 : vector<16x8xf32>
    %253 = arith.addf %226, %252 : vector<16x8xf32>
    %c4_i32_67 = arith.constant 4 : i32
    %254 = vector.broadcast %c4_i32_67 : i32 to vector<1x8xi32>
    %255 = arith.cmpi sge, %221, %254 : vector<1x8xi32>
    %c8_i32_68 = arith.constant 8 : i32
    %256 = vector.broadcast %c8_i32_68 : i32 to vector<1x8xi32>
    %257 = arith.cmpi slt, %221, %256 : vector<1x8xi32>
    %258 = arith.andi %255, %257 : vector<1x8xi1>
    %259 = arith.extui %258 : vector<1x8xi1> to vector<1x8xi32>
    %260 = arith.sitofp %259 : vector<1x8xi32> to vector<1x8xf32>
    %261 = vector.broadcast %260 : vector<1x8xf32> to vector<16x8xf32>
    %262 = arith.mulf %222, %261 : vector<16x8xf32>
    %263 = tpu.transpose %223, [1, 0] : vector<16x8xf32> -> vector<8x16xf32>
    %cst_69 = arith.constant dense<0.000000e+00> : vector<16x16xf32>
    %264 = tpu.matmul %262, %263, %cst_69 {dimension_numbers = #tpu.dot_dimension_numbers<[1], [0], [0], [1], [0, 0, 1, 1], [], []>} : vector<16x8xf32>, vector<8x16xf32>, vector<16x16xf32> -> vector<16x16xf32>
    %265 = vector.broadcast %225 : vector<1x16xf32> to vector<16x16xf32>
    %266 = arith.addf %264, %265 : vector<16x16xf32>
    %cst_70 = arith.constant dense<0xFF800000> : vector<16xf32>
    %267 = vector.multi_reduction <maximumf>, %266, %cst_70 [1] : vector<16x16xf32> to vector<16xf32>
    %268 = vector.shape_cast %267 : vector<16xf32> to vector<16x1xf32>
    %269 = vector.broadcast %268 : vector<16x1xf32> to vector<16x16xf32>
    %270 = arith.subf %266, %269 : vector<16x16xf32>
    %271 = math.exp %270 : vector<16x16xf32>
    %cst_71 = arith.constant dense<0.000000e+00> : vector<16xf32>
    %272 = vector.multi_reduction <add>, %271, %cst_71 [1] : vector<16x16xf32> to vector<16xf32>
    %273 = vector.shape_cast %272 : vector<16xf32> to vector<16x1xf32>
    %274 = tpu.reciprocal %273 {approx = true} : vector<16x1xf32> -> vector<16x1xf32>
    %275 = vector.broadcast %274 : vector<16x1xf32> to vector<16x16xf32>
    %276 = arith.mulf %271, %275 : vector<16x16xf32>
    %cst_72 = arith.constant dense<0.000000e+00> : vector<16x8xf32>
    %277 = tpu.matmul %276, %224, %cst_72 {dimension_numbers = #tpu.dot_dimension_numbers<[1], [0], [0], [1], [0, 0, 1, 1], [], []>} : vector<16x16xf32>, vector<16x8xf32>, vector<16x8xf32> -> vector<16x8xf32>
    %278 = vector.broadcast %260 : vector<1x8xf32> to vector<16x8xf32>
    %279 = arith.mulf %277, %278 : vector<16x8xf32>
    %280 = arith.addf %253, %279 : vector<16x8xf32>
    %281 = vector.extract_strided_slice %218 {offsets = [16, 0], sizes = [16, 8], strides = [1, 1]} : vector<32x8xf32> to vector<16x8xf32>
    %282 = vector.extract_strided_slice %219 {offsets = [16, 0], sizes = [16, 8], strides = [1, 1]} : vector<32x8xf32> to vector<16x8xf32>
    %283 = vector.extract_strided_slice %220 {offsets = [16, 0], sizes = [16, 8], strides = [1, 1]} : vector<32x8xf32> to vector<16x8xf32>
    %284 = vector.extract_strided_slice %204 {offsets = [1, 0], sizes = [1, 16], strides = [1, 1]} : vector<2x16xf32> to vector<1x16xf32>
    %cst_73 = arith.constant 0.000000e+00 : f32
    %285 = vector.broadcast %cst_73 : f32 to vector<16x8xf32>
    %c0_i32_74 = arith.constant 0 : i32
    %286 = vector.broadcast %c0_i32_74 : i32 to vector<1x8xi32>
    %287 = arith.cmpi sge, %221, %286 : vector<1x8xi32>
    %c4_i32_75 = arith.constant 4 : i32
    %288 = vector.broadcast %c4_i32_75 : i32 to vector<1x8xi32>
    %289 = arith.cmpi slt, %221, %288 : vector<1x8xi32>
    %290 = arith.andi %287, %289 : vector<1x8xi1>
    %291 = arith.extui %290 : vector<1x8xi1> to vector<1x8xi32>
    %292 = arith.sitofp %291 : vector<1x8xi32> to vector<1x8xf32>
    %293 = vector.broadcast %292 : vector<1x8xf32> to vector<16x8xf32>
    %294 = arith.mulf %281, %293 : vector<16x8xf32>
    %295 = tpu.transpose %282, [1, 0] : vector<16x8xf32> -> vector<8x16xf32>
    %cst_76 = arith.constant dense<0.000000e+00> : vector<16x16xf32>
    %296 = tpu.matmul %294, %295, %cst_76 {dimension_numbers = #tpu.dot_dimension_numbers<[1], [0], [0], [1], [0, 0, 1, 1], [], []>} : vector<16x8xf32>, vector<8x16xf32>, vector<16x16xf32> -> vector<16x16xf32>
    %297 = vector.broadcast %284 : vector<1x16xf32> to vector<16x16xf32>
    %298 = arith.addf %296, %297 : vector<16x16xf32>
    %cst_77 = arith.constant dense<0xFF800000> : vector<16xf32>
    %299 = vector.multi_reduction <maximumf>, %298, %cst_77 [1] : vector<16x16xf32> to vector<16xf32>
    %300 = vector.shape_cast %299 : vector<16xf32> to vector<16x1xf32>
    %301 = vector.broadcast %300 : vector<16x1xf32> to vector<16x16xf32>
    %302 = arith.subf %298, %301 : vector<16x16xf32>
    %303 = math.exp %302 : vector<16x16xf32>
    %cst_78 = arith.constant dense<0.000000e+00> : vector<16xf32>
    %304 = vector.multi_reduction <add>, %303, %cst_78 [1] : vector<16x16xf32> to vector<16xf32>
    %305 = vector.shape_cast %304 : vector<16xf32> to vector<16x1xf32>
    %306 = tpu.reciprocal %305 {approx = true} : vector<16x1xf32> -> vector<16x1xf32>
    %307 = vector.broadcast %306 : vector<16x1xf32> to vector<16x16xf32>
    %308 = arith.mulf %303, %307 : vector<16x16xf32>
    %cst_79 = arith.constant dense<0.000000e+00> : vector<16x8xf32>
    %309 = tpu.matmul %308, %283, %cst_79 {dimension_numbers = #tpu.dot_dimension_numbers<[1], [0], [0], [1], [0, 0, 1, 1], [], []>} : vector<16x16xf32>, vector<16x8xf32>, vector<16x8xf32> -> vector<16x8xf32>
    %310 = vector.broadcast %292 : vector<1x8xf32> to vector<16x8xf32>
    %311 = arith.mulf %309, %310 : vector<16x8xf32>
    %312 = arith.addf %285, %311 : vector<16x8xf32>
    %c4_i32_80 = arith.constant 4 : i32
    %313 = vector.broadcast %c4_i32_80 : i32 to vector<1x8xi32>
    %314 = arith.cmpi sge, %221, %313 : vector<1x8xi32>
    %c8_i32_81 = arith.constant 8 : i32
    %315 = vector.broadcast %c8_i32_81 : i32 to vector<1x8xi32>
    %316 = arith.cmpi slt, %221, %315 : vector<1x8xi32>
    %317 = arith.andi %314, %316 : vector<1x8xi1>
    %318 = arith.extui %317 : vector<1x8xi1> to vector<1x8xi32>
    %319 = arith.sitofp %318 : vector<1x8xi32> to vector<1x8xf32>
    %320 = vector.broadcast %319 : vector<1x8xf32> to vector<16x8xf32>
    %321 = arith.mulf %281, %320 : vector<16x8xf32>
    %322 = tpu.transpose %282, [1, 0] : vector<16x8xf32> -> vector<8x16xf32>
    %cst_82 = arith.constant dense<0.000000e+00> : vector<16x16xf32>
    %323 = tpu.matmul %321, %322, %cst_82 {dimension_numbers = #tpu.dot_dimension_numbers<[1], [0], [0], [1], [0, 0, 1, 1], [], []>} : vector<16x8xf32>, vector<8x16xf32>, vector<16x16xf32> -> vector<16x16xf32>
    %324 = vector.broadcast %284 : vector<1x16xf32> to vector<16x16xf32>
    %325 = arith.addf %323, %324 : vector<16x16xf32>
    %cst_83 = arith.constant dense<0xFF800000> : vector<16xf32>
    %326 = vector.multi_reduction <maximumf>, %325, %cst_83 [1] : vector<16x16xf32> to vector<16xf32>
    %327 = vector.shape_cast %326 : vector<16xf32> to vector<16x1xf32>
    %328 = vector.broadcast %327 : vector<16x1xf32> to vector<16x16xf32>
    %329 = arith.subf %325, %328 : vector<16x16xf32>
    %330 = math.exp %329 : vector<16x16xf32>
    %cst_84 = arith.constant dense<0.000000e+00> : vector<16xf32>
    %331 = vector.multi_reduction <add>, %330, %cst_84 [1] : vector<16x16xf32> to vector<16xf32>
    %332 = vector.shape_cast %331 : vector<16xf32> to vector<16x1xf32>
    %333 = tpu.reciprocal %332 {approx = true} : vector<16x1xf32> -> vector<16x1xf32>
    %334 = vector.broadcast %333 : vector<16x1xf32> to vector<16x16xf32>
    %335 = arith.mulf %330, %334 : vector<16x16xf32>
    %cst_85 = arith.constant dense<0.000000e+00> : vector<16x8xf32>
    %336 = tpu.matmul %335, %283, %cst_85 {dimension_numbers = #tpu.dot_dimension_numbers<[1], [0], [0], [1], [0, 0, 1, 1], [], []>} : vector<16x16xf32>, vector<16x8xf32>, vector<16x8xf32> -> vector<16x8xf32>
    %337 = vector.broadcast %319 : vector<1x8xf32> to vector<16x8xf32>
    %338 = arith.mulf %336, %337 : vector<16x8xf32>
    %339 = arith.addf %312, %338 : vector<16x8xf32>
    %340 = tpu.concatenate %280, %339 in 0 : vector<16x8xf32>, vector<16x8xf32> -> vector<32x8xf32>
    %c0_86 = arith.constant 0 : index
    %c0_87 = arith.constant 0 : index
    %341 = vector.load %arg11[%c0_86, %c0_87] : memref<8x8xf32, #tpu.memory_space<vmem>>, vector<8x8xf32>
    %cst_88 = arith.constant dense<0.000000e+00> : vector<32x8xf32>
    %342 = tpu.matmul %340, %341, %cst_88 {dimension_numbers = #tpu.dot_dimension_numbers<[1], [0], [0], [1], [0, 0, 1, 1], [], []>} : vector<32x8xf32>, vector<8x8xf32>, vector<32x8xf32> -> vector<32x8xf32>
    %343 = arith.addf %203, %342 : vector<32x8xf32>
    %344 = vector.broadcast %207 : vector<1x8xf32> to vector<32x8xf32>
    %345 = arith.addf %343, %344 : vector<32x8xf32>
    %cst_89 = arith.constant dense<0.000000e+00> : vector<32xf32>
    %346 = vector.multi_reduction <add>, %345, %cst_89 [1] : vector<32x8xf32> to vector<32xf32>
    %347 = vector.shape_cast %346 : vector<32xf32> to vector<32x1xf32>
    %cst_90 = arith.constant 8.000000e+00 : f32
    %348 = vector.broadcast %cst_90 : f32 to vector<32x1xf32>
    %349 = arith.divf %347, %348 : vector<32x1xf32>
    %350 = vector.broadcast %349 : vector<32x1xf32> to vector<32x8xf32>
    %351 = arith.subf %345, %350 : vector<32x8xf32>
    %352 = vector.broadcast %349 : vector<32x1xf32> to vector<32x8xf32>
    %353 = arith.subf %345, %352 : vector<32x8xf32>
    %354 = arith.mulf %351, %353 : vector<32x8xf32>
    %cst_91 = arith.constant dense<0.000000e+00> : vector<32xf32>
    %355 = vector.multi_reduction <add>, %354, %cst_91 [1] : vector<32x8xf32> to vector<32xf32>
    %356 = vector.shape_cast %355 : vector<32xf32> to vector<32x1xf32>
    %cst_92 = arith.constant 8.000000e+00 : f32
    %357 = vector.broadcast %cst_92 : f32 to vector<32x1xf32>
    %358 = arith.divf %356, %357 : vector<32x1xf32>
    %359 = vector.broadcast %349 : vector<32x1xf32> to vector<32x8xf32>
    %360 = arith.subf %345, %359 : vector<32x8xf32>
    %cst_93 = arith.constant 9.99999974E-6 : f32
    %361 = vector.broadcast %cst_93 : f32 to vector<32x1xf32>
    %362 = arith.addf %358, %361 : vector<32x1xf32>
    %363 = math.rsqrt %362 : vector<32x1xf32>
    %364 = vector.broadcast %363 : vector<32x1xf32> to vector<32x8xf32>
    %365 = arith.mulf %360, %364 : vector<32x8xf32>
    %366 = vector.broadcast %208 : vector<1x8xf32> to vector<32x8xf32>
    %367 = arith.mulf %365, %366 : vector<32x8xf32>
    %368 = vector.broadcast %209 : vector<1x8xf32> to vector<32x8xf32>
    %369 = arith.addf %367, %368 : vector<32x8xf32>
    %c0_94 = arith.constant 0 : index
    %c0_95 = arith.constant 0 : index
    %370 = vector.load %arg12[%c0_94, %c0_95] : memref<8x32xf32, #tpu.memory_space<vmem>>, vector<8x32xf32>
    %cst_96 = arith.constant dense<0.000000e+00> : vector<32x32xf32>
    %371 = tpu.matmul %369, %370, %cst_96 {dimension_numbers = #tpu.dot_dimension_numbers<[1], [0], [0], [1], [0, 0, 1, 1], [], []>} : vector<32x8xf32>, vector<8x32xf32>, vector<32x32xf32> -> vector<32x32xf32>
    %372 = vector.broadcast %210 : vector<1x32xf32> to vector<32x32xf32>
    %373 = arith.addf %371, %372 : vector<32x32xf32>
    %cst_97 = arith.constant 0.000000e+00 : f32
    %374 = vector.broadcast %cst_97 : f32 to vector<32x32xf32>
    %375 = arith.maximumf %373, %374 : vector<32x32xf32>
    %c0_98 = arith.constant 0 : index
    %c0_99 = arith.constant 0 : index
    %376 = vector.load %arg13[%c0_98, %c0_99] : memref<32x8xf32, #tpu.memory_space<vmem>>, vector<32x8xf32>
    %cst_100 = arith.constant dense<0.000000e+00> : vector<32x8xf32>
    %377 = tpu.matmul %375, %376, %cst_100 {dimension_numbers = #tpu.dot_dimension_numbers<[1], [0], [0], [1], [0, 0, 1, 1], [], []>} : vector<32x32xf32>, vector<32x8xf32>, vector<32x8xf32> -> vector<32x8xf32>
    %378 = arith.addf %369, %377 : vector<32x8xf32>
    %379 = vector.broadcast %211 : vector<1x8xf32> to vector<32x8xf32>
    %380 = arith.addf %378, %379 : vector<32x8xf32>
    %cst_101 = arith.constant dense<0.000000e+00> : vector<32xf32>
    %381 = vector.multi_reduction <add>, %380, %cst_101 [1] : vector<32x8xf32> to vector<32xf32>
    %382 = vector.shape_cast %381 : vector<32xf32> to vector<32x1xf32>
    %cst_102 = arith.constant 8.000000e+00 : f32
    %383 = vector.broadcast %cst_102 : f32 to vector<32x1xf32>
    %384 = arith.divf %382, %383 : vector<32x1xf32>
    %385 = vector.broadcast %384 : vector<32x1xf32> to vector<32x8xf32>
    %386 = arith.subf %380, %385 : vector<32x8xf32>
    %387 = vector.broadcast %384 : vector<32x1xf32> to vector<32x8xf32>
    %388 = arith.subf %380, %387 : vector<32x8xf32>
    %389 = arith.mulf %386, %388 : vector<32x8xf32>
    %cst_103 = arith.constant dense<0.000000e+00> : vector<32xf32>
    %390 = vector.multi_reduction <add>, %389, %cst_103 [1] : vector<32x8xf32> to vector<32xf32>
    %391 = vector.shape_cast %390 : vector<32xf32> to vector<32x1xf32>
    %cst_104 = arith.constant 8.000000e+00 : f32
    %392 = vector.broadcast %cst_104 : f32 to vector<32x1xf32>
    %393 = arith.divf %391, %392 : vector<32x1xf32>
    %394 = vector.broadcast %384 : vector<32x1xf32> to vector<32x8xf32>
    %395 = arith.subf %380, %394 : vector<32x8xf32>
    %cst_105 = arith.constant 9.99999974E-6 : f32
    %396 = vector.broadcast %cst_105 : f32 to vector<32x1xf32>
    %397 = arith.addf %393, %396 : vector<32x1xf32>
    %398 = math.rsqrt %397 : vector<32x1xf32>
    %399 = vector.broadcast %398 : vector<32x1xf32> to vector<32x8xf32>
    %400 = arith.mulf %395, %399 : vector<32x8xf32>
    %401 = vector.broadcast %212 : vector<1x8xf32> to vector<32x8xf32>
    %402 = arith.mulf %400, %401 : vector<32x8xf32>
    %403 = vector.broadcast %213 : vector<1x8xf32> to vector<32x8xf32>
    %404 = arith.addf %402, %403 : vector<32x8xf32>
    %c0_106 = arith.constant 0 : index
    %c0_107 = arith.constant 0 : index
    %405 = vector.load %arg19[%c0_106, %c0_107] : memref<8x32xf32, #tpu.memory_space<vmem>>, vector<8x32xf32>
    %406 = vector.extract_strided_slice %405 {offsets = [0, 0], sizes = [1, 24], strides = [1, 1]} : vector<8x32xf32> to vector<1x24xf32>
    %407 = vector.extract_strided_slice %405 {offsets = [1, 0], sizes = [1, 8], strides = [1, 1]} : vector<8x32xf32> to vector<1x8xf32>
    %408 = vector.extract_strided_slice %405 {offsets = [2, 0], sizes = [1, 8], strides = [1, 1]} : vector<8x32xf32> to vector<1x8xf32>
    %409 = vector.extract_strided_slice %405 {offsets = [3, 0], sizes = [1, 8], strides = [1, 1]} : vector<8x32xf32> to vector<1x8xf32>
    %410 = vector.extract_strided_slice %405 {offsets = [4, 0], sizes = [1, 32], strides = [1, 1]} : vector<8x32xf32> to vector<1x32xf32>
    %411 = vector.extract_strided_slice %405 {offsets = [5, 0], sizes = [1, 8], strides = [1, 1]} : vector<8x32xf32> to vector<1x8xf32>
    %412 = vector.extract_strided_slice %405 {offsets = [6, 0], sizes = [1, 8], strides = [1, 1]} : vector<8x32xf32> to vector<1x8xf32>
    %413 = vector.extract_strided_slice %405 {offsets = [7, 0], sizes = [1, 8], strides = [1, 1]} : vector<8x32xf32> to vector<1x8xf32>
    %c0_108 = arith.constant 0 : index
    %c0_109 = arith.constant 0 : index
    %414 = vector.load %arg15[%c0_108, %c0_109] : memref<8x24xf32, #tpu.memory_space<vmem>>, vector<8x24xf32>
    %cst_110 = arith.constant dense<0.000000e+00> : vector<32x24xf32>
    %415 = tpu.matmul %404, %414, %cst_110 {dimension_numbers = #tpu.dot_dimension_numbers<[1], [0], [0], [1], [0, 0, 1, 1], [], []>} : vector<32x8xf32>, vector<8x24xf32>, vector<32x24xf32> -> vector<32x24xf32>
    %416 = vector.broadcast %406 : vector<1x24xf32> to vector<32x24xf32>
    %417 = arith.addf %415, %416 : vector<32x24xf32>
    %418 = vector.extract_strided_slice %417 {offsets = [0, 0], sizes = [32, 8], strides = [1, 1]} : vector<32x24xf32> to vector<32x8xf32>
    %419 = vector.extract_strided_slice %417 {offsets = [0, 8], sizes = [32, 8], strides = [1, 1]} : vector<32x24xf32> to vector<32x8xf32>
    %420 = vector.extract_strided_slice %417 {offsets = [0, 16], sizes = [32, 8], strides = [1, 1]} : vector<32x24xf32> to vector<32x8xf32>
    %421 = tpu.iota {dimensions = array<i32: 1>} : vector<1x8xi32>
    %422 = vector.extract_strided_slice %418 {offsets = [0, 0], sizes = [16, 8], strides = [1, 1]} : vector<32x8xf32> to vector<16x8xf32>
    %423 = vector.extract_strided_slice %419 {offsets = [0, 0], sizes = [16, 8], strides = [1, 1]} : vector<32x8xf32> to vector<16x8xf32>
    %424 = vector.extract_strided_slice %420 {offsets = [0, 0], sizes = [16, 8], strides = [1, 1]} : vector<32x8xf32> to vector<16x8xf32>
    %425 = vector.extract_strided_slice %204 {offsets = [0, 0], sizes = [1, 16], strides = [1, 1]} : vector<2x16xf32> to vector<1x16xf32>
    %cst_111 = arith.constant 0.000000e+00 : f32
    %426 = vector.broadcast %cst_111 : f32 to vector<16x8xf32>
    %c0_i32_112 = arith.constant 0 : i32
    %427 = vector.broadcast %c0_i32_112 : i32 to vector<1x8xi32>
    %428 = arith.cmpi sge, %421, %427 : vector<1x8xi32>
    %c4_i32_113 = arith.constant 4 : i32
    %429 = vector.broadcast %c4_i32_113 : i32 to vector<1x8xi32>
    %430 = arith.cmpi slt, %421, %429 : vector<1x8xi32>
    %431 = arith.andi %428, %430 : vector<1x8xi1>
    %432 = arith.extui %431 : vector<1x8xi1> to vector<1x8xi32>
    %433 = arith.sitofp %432 : vector<1x8xi32> to vector<1x8xf32>
    %434 = vector.broadcast %433 : vector<1x8xf32> to vector<16x8xf32>
    %435 = arith.mulf %422, %434 : vector<16x8xf32>
    %436 = tpu.transpose %423, [1, 0] : vector<16x8xf32> -> vector<8x16xf32>
    %cst_114 = arith.constant dense<0.000000e+00> : vector<16x16xf32>
    %437 = tpu.matmul %435, %436, %cst_114 {dimension_numbers = #tpu.dot_dimension_numbers<[1], [0], [0], [1], [0, 0, 1, 1], [], []>} : vector<16x8xf32>, vector<8x16xf32>, vector<16x16xf32> -> vector<16x16xf32>
    %438 = vector.broadcast %425 : vector<1x16xf32> to vector<16x16xf32>
    %439 = arith.addf %437, %438 : vector<16x16xf32>
    %cst_115 = arith.constant dense<0xFF800000> : vector<16xf32>
    %440 = vector.multi_reduction <maximumf>, %439, %cst_115 [1] : vector<16x16xf32> to vector<16xf32>
    %441 = vector.shape_cast %440 : vector<16xf32> to vector<16x1xf32>
    %442 = vector.broadcast %441 : vector<16x1xf32> to vector<16x16xf32>
    %443 = arith.subf %439, %442 : vector<16x16xf32>
    %444 = math.exp %443 : vector<16x16xf32>
    %cst_116 = arith.constant dense<0.000000e+00> : vector<16xf32>
    %445 = vector.multi_reduction <add>, %444, %cst_116 [1] : vector<16x16xf32> to vector<16xf32>
    %446 = vector.shape_cast %445 : vector<16xf32> to vector<16x1xf32>
    %447 = tpu.reciprocal %446 {approx = true} : vector<16x1xf32> -> vector<16x1xf32>
    %448 = vector.broadcast %447 : vector<16x1xf32> to vector<16x16xf32>
    %449 = arith.mulf %444, %448 : vector<16x16xf32>
    %cst_117 = arith.constant dense<0.000000e+00> : vector<16x8xf32>
    %450 = tpu.matmul %449, %424, %cst_117 {dimension_numbers = #tpu.dot_dimension_numbers<[1], [0], [0], [1], [0, 0, 1, 1], [], []>} : vector<16x16xf32>, vector<16x8xf32>, vector<16x8xf32> -> vector<16x8xf32>
    %451 = vector.broadcast %433 : vector<1x8xf32> to vector<16x8xf32>
    %452 = arith.mulf %450, %451 : vector<16x8xf32>
    %453 = arith.addf %426, %452 : vector<16x8xf32>
    %c4_i32_118 = arith.constant 4 : i32
    %454 = vector.broadcast %c4_i32_118 : i32 to vector<1x8xi32>
    %455 = arith.cmpi sge, %421, %454 : vector<1x8xi32>
    %c8_i32_119 = arith.constant 8 : i32
    %456 = vector.broadcast %c8_i32_119 : i32 to vector<1x8xi32>
    %457 = arith.cmpi slt, %421, %456 : vector<1x8xi32>
    %458 = arith.andi %455, %457 : vector<1x8xi1>
    %459 = arith.extui %458 : vector<1x8xi1> to vector<1x8xi32>
    %460 = arith.sitofp %459 : vector<1x8xi32> to vector<1x8xf32>
    %461 = vector.broadcast %460 : vector<1x8xf32> to vector<16x8xf32>
    %462 = arith.mulf %422, %461 : vector<16x8xf32>
    %463 = tpu.transpose %423, [1, 0] : vector<16x8xf32> -> vector<8x16xf32>
    %cst_120 = arith.constant dense<0.000000e+00> : vector<16x16xf32>
    %464 = tpu.matmul %462, %463, %cst_120 {dimension_numbers = #tpu.dot_dimension_numbers<[1], [0], [0], [1], [0, 0, 1, 1], [], []>} : vector<16x8xf32>, vector<8x16xf32>, vector<16x16xf32> -> vector<16x16xf32>
    %465 = vector.broadcast %425 : vector<1x16xf32> to vector<16x16xf32>
    %466 = arith.addf %464, %465 : vector<16x16xf32>
    %cst_121 = arith.constant dense<0xFF800000> : vector<16xf32>
    %467 = vector.multi_reduction <maximumf>, %466, %cst_121 [1] : vector<16x16xf32> to vector<16xf32>
    %468 = vector.shape_cast %467 : vector<16xf32> to vector<16x1xf32>
    %469 = vector.broadcast %468 : vector<16x1xf32> to vector<16x16xf32>
    %470 = arith.subf %466, %469 : vector<16x16xf32>
    %471 = math.exp %470 : vector<16x16xf32>
    %cst_122 = arith.constant dense<0.000000e+00> : vector<16xf32>
    %472 = vector.multi_reduction <add>, %471, %cst_122 [1] : vector<16x16xf32> to vector<16xf32>
    %473 = vector.shape_cast %472 : vector<16xf32> to vector<16x1xf32>
    %474 = tpu.reciprocal %473 {approx = true} : vector<16x1xf32> -> vector<16x1xf32>
    %475 = vector.broadcast %474 : vector<16x1xf32> to vector<16x16xf32>
    %476 = arith.mulf %471, %475 : vector<16x16xf32>
    %cst_123 = arith.constant dense<0.000000e+00> : vector<16x8xf32>
    %477 = tpu.matmul %476, %424, %cst_123 {dimension_numbers = #tpu.dot_dimension_numbers<[1], [0], [0], [1], [0, 0, 1, 1], [], []>} : vector<16x16xf32>, vector<16x8xf32>, vector<16x8xf32> -> vector<16x8xf32>
    %478 = vector.broadcast %460 : vector<1x8xf32> to vector<16x8xf32>
    %479 = arith.mulf %477, %478 : vector<16x8xf32>
    %480 = arith.addf %453, %479 : vector<16x8xf32>
    %481 = vector.extract_strided_slice %418 {offsets = [16, 0], sizes = [16, 8], strides = [1, 1]} : vector<32x8xf32> to vector<16x8xf32>
    %482 = vector.extract_strided_slice %419 {offsets = [16, 0], sizes = [16, 8], strides = [1, 1]} : vector<32x8xf32> to vector<16x8xf32>
    %483 = vector.extract_strided_slice %420 {offsets = [16, 0], sizes = [16, 8], strides = [1, 1]} : vector<32x8xf32> to vector<16x8xf32>
    %484 = vector.extract_strided_slice %204 {offsets = [1, 0], sizes = [1, 16], strides = [1, 1]} : vector<2x16xf32> to vector<1x16xf32>
    %cst_124 = arith.constant 0.000000e+00 : f32
    %485 = vector.broadcast %cst_124 : f32 to vector<16x8xf32>
    %c0_i32_125 = arith.constant 0 : i32
    %486 = vector.broadcast %c0_i32_125 : i32 to vector<1x8xi32>
    %487 = arith.cmpi sge, %421, %486 : vector<1x8xi32>
    %c4_i32_126 = arith.constant 4 : i32
    %488 = vector.broadcast %c4_i32_126 : i32 to vector<1x8xi32>
    %489 = arith.cmpi slt, %421, %488 : vector<1x8xi32>
    %490 = arith.andi %487, %489 : vector<1x8xi1>
    %491 = arith.extui %490 : vector<1x8xi1> to vector<1x8xi32>
    %492 = arith.sitofp %491 : vector<1x8xi32> to vector<1x8xf32>
    %493 = vector.broadcast %492 : vector<1x8xf32> to vector<16x8xf32>
    %494 = arith.mulf %481, %493 : vector<16x8xf32>
    %495 = tpu.transpose %482, [1, 0] : vector<16x8xf32> -> vector<8x16xf32>
    %cst_127 = arith.constant dense<0.000000e+00> : vector<16x16xf32>
    %496 = tpu.matmul %494, %495, %cst_127 {dimension_numbers = #tpu.dot_dimension_numbers<[1], [0], [0], [1], [0, 0, 1, 1], [], []>} : vector<16x8xf32>, vector<8x16xf32>, vector<16x16xf32> -> vector<16x16xf32>
    %497 = vector.broadcast %484 : vector<1x16xf32> to vector<16x16xf32>
    %498 = arith.addf %496, %497 : vector<16x16xf32>
    %cst_128 = arith.constant dense<0xFF800000> : vector<16xf32>
    %499 = vector.multi_reduction <maximumf>, %498, %cst_128 [1] : vector<16x16xf32> to vector<16xf32>
    %500 = vector.shape_cast %499 : vector<16xf32> to vector<16x1xf32>
    %501 = vector.broadcast %500 : vector<16x1xf32> to vector<16x16xf32>
    %502 = arith.subf %498, %501 : vector<16x16xf32>
    %503 = math.exp %502 : vector<16x16xf32>
    %cst_129 = arith.constant dense<0.000000e+00> : vector<16xf32>
    %504 = vector.multi_reduction <add>, %503, %cst_129 [1] : vector<16x16xf32> to vector<16xf32>
    %505 = vector.shape_cast %504 : vector<16xf32> to vector<16x1xf32>
    %506 = tpu.reciprocal %505 {approx = true} : vector<16x1xf32> -> vector<16x1xf32>
    %507 = vector.broadcast %506 : vector<16x1xf32> to vector<16x16xf32>
    %508 = arith.mulf %503, %507 : vector<16x16xf32>
    %cst_130 = arith.constant dense<0.000000e+00> : vector<16x8xf32>
    %509 = tpu.matmul %508, %483, %cst_130 {dimension_numbers = #tpu.dot_dimension_numbers<[1], [0], [0], [1], [0, 0, 1, 1], [], []>} : vector<16x16xf32>, vector<16x8xf32>, vector<16x8xf32> -> vector<16x8xf32>
    %510 = vector.broadcast %492 : vector<1x8xf32> to vector<16x8xf32>
    %511 = arith.mulf %509, %510 : vector<16x8xf32>
    %512 = arith.addf %485, %511 : vector<16x8xf32>
    %c4_i32_131 = arith.constant 4 : i32
    %513 = vector.broadcast %c4_i32_131 : i32 to vector<1x8xi32>
    %514 = arith.cmpi sge, %421, %513 : vector<1x8xi32>
    %c8_i32_132 = arith.constant 8 : i32
    %515 = vector.broadcast %c8_i32_132 : i32 to vector<1x8xi32>
    %516 = arith.cmpi slt, %421, %515 : vector<1x8xi32>
    %517 = arith.andi %514, %516 : vector<1x8xi1>
    %518 = arith.extui %517 : vector<1x8xi1> to vector<1x8xi32>
    %519 = arith.sitofp %518 : vector<1x8xi32> to vector<1x8xf32>
    %520 = vector.broadcast %519 : vector<1x8xf32> to vector<16x8xf32>
    %521 = arith.mulf %481, %520 : vector<16x8xf32>
    %522 = tpu.transpose %482, [1, 0] : vector<16x8xf32> -> vector<8x16xf32>
    %cst_133 = arith.constant dense<0.000000e+00> : vector<16x16xf32>
    %523 = tpu.matmul %521, %522, %cst_133 {dimension_numbers = #tpu.dot_dimension_numbers<[1], [0], [0], [1], [0, 0, 1, 1], [], []>} : vector<16x8xf32>, vector<8x16xf32>, vector<16x16xf32> -> vector<16x16xf32>
    %524 = vector.broadcast %484 : vector<1x16xf32> to vector<16x16xf32>
    %525 = arith.addf %523, %524 : vector<16x16xf32>
    %cst_134 = arith.constant dense<0xFF800000> : vector<16xf32>
    %526 = vector.multi_reduction <maximumf>, %525, %cst_134 [1] : vector<16x16xf32> to vector<16xf32>
    %527 = vector.shape_cast %526 : vector<16xf32> to vector<16x1xf32>
    %528 = vector.broadcast %527 : vector<16x1xf32> to vector<16x16xf32>
    %529 = arith.subf %525, %528 : vector<16x16xf32>
    %530 = math.exp %529 : vector<16x16xf32>
    %cst_135 = arith.constant dense<0.000000e+00> : vector<16xf32>
    %531 = vector.multi_reduction <add>, %530, %cst_135 [1] : vector<16x16xf32> to vector<16xf32>
    %532 = vector.shape_cast %531 : vector<16xf32> to vector<16x1xf32>
    %533 = tpu.reciprocal %532 {approx = true} : vector<16x1xf32> -> vector<16x1xf32>
    %534 = vector.broadcast %533 : vector<16x1xf32> to vector<16x16xf32>
    %535 = arith.mulf %530, %534 : vector<16x16xf32>
    %cst_136 = arith.constant dense<0.000000e+00> : vector<16x8xf32>
    %536 = tpu.matmul %535, %483, %cst_136 {dimension_numbers = #tpu.dot_dimension_numbers<[1], [0], [0], [1], [0, 0, 1, 1], [], []>} : vector<16x16xf32>, vector<16x8xf32>, vector<16x8xf32> -> vector<16x8xf32>
    %537 = vector.broadcast %519 : vector<1x8xf32> to vector<16x8xf32>
    %538 = arith.mulf %536, %537 : vector<16x8xf32>
    %539 = arith.addf %512, %538 : vector<16x8xf32>
    %540 = tpu.concatenate %480, %539 in 0 : vector<16x8xf32>, vector<16x8xf32> -> vector<32x8xf32>
    %c0_137 = arith.constant 0 : index
    %c0_138 = arith.constant 0 : index
    %541 = vector.load %arg16[%c0_137, %c0_138] : memref<8x8xf32, #tpu.memory_space<vmem>>, vector<8x8xf32>
    %cst_139 = arith.constant dense<0.000000e+00> : vector<32x8xf32>
    %542 = tpu.matmul %540, %541, %cst_139 {dimension_numbers = #tpu.dot_dimension_numbers<[1], [0], [0], [1], [0, 0, 1, 1], [], []>} : vector<32x8xf32>, vector<8x8xf32>, vector<32x8xf32> -> vector<32x8xf32>
    %543 = arith.addf %404, %542 : vector<32x8xf32>
    %544 = vector.broadcast %407 : vector<1x8xf32> to vector<32x8xf32>
    %545 = arith.addf %543, %544 : vector<32x8xf32>
    %cst_140 = arith.constant dense<0.000000e+00> : vector<32xf32>
    %546 = vector.multi_reduction <add>, %545, %cst_140 [1] : vector<32x8xf32> to vector<32xf32>
    %547 = vector.shape_cast %546 : vector<32xf32> to vector<32x1xf32>
    %cst_141 = arith.constant 8.000000e+00 : f32
    %548 = vector.broadcast %cst_141 : f32 to vector<32x1xf32>
    %549 = arith.divf %547, %548 : vector<32x1xf32>
    %550 = vector.broadcast %549 : vector<32x1xf32> to vector<32x8xf32>
    %551 = arith.subf %545, %550 : vector<32x8xf32>
    %552 = vector.broadcast %549 : vector<32x1xf32> to vector<32x8xf32>
    %553 = arith.subf %545, %552 : vector<32x8xf32>
    %554 = arith.mulf %551, %553 : vector<32x8xf32>
    %cst_142 = arith.constant dense<0.000000e+00> : vector<32xf32>
    %555 = vector.multi_reduction <add>, %554, %cst_142 [1] : vector<32x8xf32> to vector<32xf32>
    %556 = vector.shape_cast %555 : vector<32xf32> to vector<32x1xf32>
    %cst_143 = arith.constant 8.000000e+00 : f32
    %557 = vector.broadcast %cst_143 : f32 to vector<32x1xf32>
    %558 = arith.divf %556, %557 : vector<32x1xf32>
    %559 = vector.broadcast %549 : vector<32x1xf32> to vector<32x8xf32>
    %560 = arith.subf %545, %559 : vector<32x8xf32>
    %cst_144 = arith.constant 9.99999974E-6 : f32
    %561 = vector.broadcast %cst_144 : f32 to vector<32x1xf32>
    %562 = arith.addf %558, %561 : vector<32x1xf32>
    %563 = math.rsqrt %562 : vector<32x1xf32>
    %564 = vector.broadcast %563 : vector<32x1xf32> to vector<32x8xf32>
    %565 = arith.mulf %560, %564 : vector<32x8xf32>
    %566 = vector.broadcast %408 : vector<1x8xf32> to vector<32x8xf32>
    %567 = arith.mulf %565, %566 : vector<32x8xf32>
    %568 = vector.broadcast %409 : vector<1x8xf32> to vector<32x8xf32>
    %569 = arith.addf %567, %568 : vector<32x8xf32>
    %c0_145 = arith.constant 0 : index
    %c0_146 = arith.constant 0 : index
    %570 = vector.load %arg17[%c0_145, %c0_146] : memref<8x32xf32, #tpu.memory_space<vmem>>, vector<8x32xf32>
    %cst_147 = arith.constant dense<0.000000e+00> : vector<32x32xf32>
    %571 = tpu.matmul %569, %570, %cst_147 {dimension_numbers = #tpu.dot_dimension_numbers<[1], [0], [0], [1], [0, 0, 1, 1], [], []>} : vector<32x8xf32>, vector<8x32xf32>, vector<32x32xf32> -> vector<32x32xf32>
    %572 = vector.broadcast %410 : vector<1x32xf32> to vector<32x32xf32>
    %573 = arith.addf %571, %572 : vector<32x32xf32>
    %cst_148 = arith.constant 0.000000e+00 : f32
    %574 = vector.broadcast %cst_148 : f32 to vector<32x32xf32>
    %575 = arith.maximumf %573, %574 : vector<32x32xf32>
    %c0_149 = arith.constant 0 : index
    %c0_150 = arith.constant 0 : index
    %576 = vector.load %arg18[%c0_149, %c0_150] : memref<32x8xf32, #tpu.memory_space<vmem>>, vector<32x8xf32>
    %cst_151 = arith.constant dense<0.000000e+00> : vector<32x8xf32>
    %577 = tpu.matmul %575, %576, %cst_151 {dimension_numbers = #tpu.dot_dimension_numbers<[1], [0], [0], [1], [0, 0, 1, 1], [], []>} : vector<32x32xf32>, vector<32x8xf32>, vector<32x8xf32> -> vector<32x8xf32>
    %578 = arith.addf %569, %577 : vector<32x8xf32>
    %579 = vector.broadcast %411 : vector<1x8xf32> to vector<32x8xf32>
    %580 = arith.addf %578, %579 : vector<32x8xf32>
    %cst_152 = arith.constant dense<0.000000e+00> : vector<32xf32>
    %581 = vector.multi_reduction <add>, %580, %cst_152 [1] : vector<32x8xf32> to vector<32xf32>
    %582 = vector.shape_cast %581 : vector<32xf32> to vector<32x1xf32>
    %cst_153 = arith.constant 8.000000e+00 : f32
    %583 = vector.broadcast %cst_153 : f32 to vector<32x1xf32>
    %584 = arith.divf %582, %583 : vector<32x1xf32>
    %585 = vector.broadcast %584 : vector<32x1xf32> to vector<32x8xf32>
    %586 = arith.subf %580, %585 : vector<32x8xf32>
    %587 = vector.broadcast %584 : vector<32x1xf32> to vector<32x8xf32>
    %588 = arith.subf %580, %587 : vector<32x8xf32>
    %589 = arith.mulf %586, %588 : vector<32x8xf32>
    %cst_154 = arith.constant dense<0.000000e+00> : vector<32xf32>
    %590 = vector.multi_reduction <add>, %589, %cst_154 [1] : vector<32x8xf32> to vector<32xf32>
    %591 = vector.shape_cast %590 : vector<32xf32> to vector<32x1xf32>
    %cst_155 = arith.constant 8.000000e+00 : f32
    %592 = vector.broadcast %cst_155 : f32 to vector<32x1xf32>
    %593 = arith.divf %591, %592 : vector<32x1xf32>
    %594 = vector.broadcast %584 : vector<32x1xf32> to vector<32x8xf32>
    %595 = arith.subf %580, %594 : vector<32x8xf32>
    %cst_156 = arith.constant 9.99999974E-6 : f32
    %596 = vector.broadcast %cst_156 : f32 to vector<32x1xf32>
    %597 = arith.addf %593, %596 : vector<32x1xf32>
    %598 = math.rsqrt %597 : vector<32x1xf32>
    %599 = vector.broadcast %598 : vector<32x1xf32> to vector<32x8xf32>
    %600 = arith.mulf %595, %599 : vector<32x8xf32>
    %601 = vector.broadcast %412 : vector<1x8xf32> to vector<32x8xf32>
    %602 = arith.mulf %600, %601 : vector<32x8xf32>
    %603 = vector.broadcast %413 : vector<1x8xf32> to vector<32x8xf32>
    %604 = arith.addf %602, %603 : vector<32x8xf32>
    %c0_157 = arith.constant 0 : index
    %c0_158 = arith.constant 0 : index
    %605 = vector.load %arg21[%c0_157, %c0_158] : memref<32x8xf32, #tpu.memory_space<vmem>>, vector<32x8xf32>
    tpu.vector_store %arg21[%c0_157, %c0_158], %604 {strides = array<i32>} : memref<32x8xf32, #tpu.memory_space<vmem>>, vector<32x8xf32>,
    return
  }
  func.func @transform_0(%arg0: i32) -> (i32, i32) {
    %c0_i32 = arith.constant 0 : i32
    %c0_i32_0 = arith.constant 0 : i32
    %c0_i32_1 = arith.constant 0 : i32
    return %c0_i32, %c0_i32_0 : i32, i32
  }
  func.func @transform_1(%arg0: i32) -> (i32, i32) {
    %c0_i32 = arith.constant 0 : i32
    %c0_i32_0 = arith.constant 0 : i32
    %c0_i32_1 = arith.constant 0 : i32
    return %c0_i32, %c0_i32_0 : i32, i32
  }
  func.func @transform_2(%arg0: i32) -> (i32, i32) {
    %c0_i32 = arith.constant 0 : i32
    %c0_i32_0 = arith.constant 0 : i32
    %c0_i32_1 = arith.constant 0 : i32
    return %c0_i32, %c0_i32_0 : i32, i32
  }
  func.func @transform_3(%arg0: i32) -> (i32, i32) {
    %c0_i32 = arith.constant 0 : i32
    %c0_i32_0 = arith.constant 0 : i32
    %c0_i32_1 = arith.constant 0 : i32
    return %c0_i32, %c0_i32_0 : i32, i32
  }
  func.func @transform_4(%arg0: i32) -> (i32, i32) {
    %c0_i32 = arith.constant 0 : i32
    %c0_i32_0 = arith.constant 0 : i32
    %c0_i32_1 = arith.constant 0 : i32
    return %c0_i32, %c0_i32_0 : i32, i32
  }
  func.func @transform_5(%arg0: i32) -> (i32, i32) {
    %c0_i32 = arith.constant 0 : i32
    %c0_i32_0 = arith.constant 0 : i32
    %c0_i32_1 = arith.constant 0 : i32
    return %c0_i32, %c0_i32_0 : i32, i32
  }
  func.func @transform_6(%arg0: i32) -> (i32, i32) {
    %c0_i32 = arith.constant 0 : i32
    %c0_i32_0 = arith.constant 0 : i32
    %c0_i32_1 = arith.constant 0 : i32
    return %c0_i32, %c0_i32_0 : i32, i32
  }
  func.func @transform_7(%arg0: i32) -> (i32, i32) {
    %c0_i32 = arith.constant 0 : i32
    %c0_i32_0 = arith.constant 0 : i32
    %c0_i32_1 = arith.constant 0 : i32
    return %c0_i32, %c0_i32_0 : i32, i32
  }
  func.func @transform_8(%arg0: i32) -> (i32, i32) {
    %c0_i32 = arith.constant 0 : i32
    %c0_i32_0 = arith.constant 0 : i32
    %c0_i32_1 = arith.constant 0 : i32
    return %c0_i32, %c0_i32_0 : i32, i32
  }
  func.func @transform_9(%arg0: i32) -> (i32, i32) {
    %c0_i32 = arith.constant 0 : i32
    %c0_i32_0 = arith.constant 0 : i32
    %c0_i32_1 = arith.constant 0 : i32
    return %c0_i32, %c0_i32_0 : i32, i32
  }
  func.func @transform_10(%arg0: i32) -> (i32, i32) {
    %c0_i32 = arith.constant 0 : i32
    %c0_i32_0 = arith.constant 0 : i32
    %c0_i32_1 = arith.constant 0 : i32
    return %c0_i32, %c0_i32_0 : i32, i32
  }
  func.func @transform_11(%arg0: i32) -> (i32, i32) {
    %c0_i32 = arith.constant 0 : i32
    %c0_i32_0 = arith.constant 0 : i32
    %c0_i32_1 = arith.constant 0 : i32
    return %c0_i32, %c0_i32_0 : i32, i32
  }
  func.func @transform_12(%arg0: i32) -> (i32, i32) {
    %c0_i32 = arith.constant 0 : i32
    %c0_i32_0 = arith.constant 0 : i32
    %c0_i32_1 = arith.constant 0 : i32
    return %c0_i32, %c0_i32_0 : i32, i32
  }
  func.func @transform_13(%arg0: i32) -> (i32, i32) {
    %c0_i32 = arith.constant 0 : i32
    %c0_i32_0 = arith.constant 0 : i32
    %c0_i32_1 = arith.constant 0 : i32
    return %c0_i32, %c0_i32_0 : i32, i32
  }
  func.func @transform_14(%arg0: i32) -> (i32, i32) {
    %c0_i32 = arith.constant 0 : i32
    %c0_i32_0 = arith.constant 0 : i32
    %c0_i32_1 = arith.constant 0 : i32
    return %c0_i32, %c0_i32_0 : i32, i32
  }
  func.func @transform_15(%arg0: i32) -> (i32, i32) {
    %c0_i32 = arith.constant 0 : i32
    %c0_i32_0 = arith.constant 0 : i32
    %c0_i32_1 = arith.constant 0 : i32
    return %c0_i32, %c0_i32_0 : i32, i32
  }
  func.func @transform_16(%arg0: i32) -> (i32, i32) {
    %c0_i32 = arith.constant 0 : i32
    %c0_i32_0 = arith.constant 0 : i32
    %c0_i32_1 = arith.constant 0 : i32
    return %c0_i32, %c0_i32_0 : i32, i32
  }
  func.func @transform_17(%arg0: i32) -> (i32, i32) {
    %c0_i32 = arith.constant 0 : i32
    %c0_i32_0 = arith.constant 0 : i32
    %c0_i32_1 = arith.constant 0 : i32
    return %c0_i32, %c0_i32_0 : i32, i32
  }
  func.func @transform_18(%arg0: i32) -> (i32, i32) {
    %c0_i32 = arith.constant 0 : i32
    %c0_i32_0 = arith.constant 0 : i32
    %c0_i32_1 = arith.constant 0 : i32
    return %c0_i32, %c0_i32_0 : i32, i32
  }
  func.func @transform_19(%arg0: i32) -> (i32, i32) {
    %c0_i32 = arith.constant 0 : i32
    %c0_i32_0 = arith.constant 0 : i32
    %c0_i32_1 = arith.constant 0 : i32
    return %c0_i32, %c0_i32_0 : i32, i32
  }
  func.func @transform_20(%arg0: i32) -> (i32, i32) {
    %c0_i32 = arith.constant 0 : i32
    %c0_i32_0 = arith.constant 0 : i32
    %c0_i32_1 = arith.constant 0 : i32
    return %c0_i32, %c0_i32_0 : i32, i32
  }
}

module attributes {stable_mosaic.version = 11 : i64} {
  func.func @fused_head_kernel(%arg0: i32, %arg1: memref<2x256xf32, #tpu.memory_space<vmem>>, %arg2: memref<2x128xf32, #tpu.memory_space<vmem>>, %arg3: memref<256x2xf32, #tpu.memory_space<vmem>>, %arg4: memref<128x2xf32, #tpu.memory_space<vmem>>, %arg5: memref<2x8xf32, #tpu.memory_space<vmem>>, %arg6: memref<2x8xf32, #tpu.memory_space<vmem>>, %arg7: memref<8x8xf32, #tpu.memory_space<vmem>>, %arg8: memref<2x8xf32, #tpu.memory_space<vmem>>) attributes {dimension_semantics = [#tpu.dimension_semantics<arbitrary>], iteration_bounds = array<i64: 1>, scalar_prefetch = 0 : i64, scratch_operands = 0 : i64, tpu.core_type = #tpu.core_type<tc>, window_params = [{pipeline_mode = #tpu.pipeline_mode<synchronous>, transform_indices = @transform_0, window_bounds = array<i64: 2, 256>}, {pipeline_mode = #tpu.pipeline_mode<synchronous>, transform_indices = @transform_1, window_bounds = array<i64: 2, 128>}, {pipeline_mode = #tpu.pipeline_mode<synchronous>, transform_indices = @transform_2, window_bounds = array<i64: 256, 2>}, {pipeline_mode = #tpu.pipeline_mode<synchronous>, transform_indices = @transform_3, window_bounds = array<i64: 128, 2>}, {pipeline_mode = #tpu.pipeline_mode<synchronous>, transform_indices = @transform_4, window_bounds = array<i64: 2, 8>}, {pipeline_mode = #tpu.pipeline_mode<synchronous>, transform_indices = @transform_5, window_bounds = array<i64: 2, 8>}, {pipeline_mode = #tpu.pipeline_mode<synchronous>, transform_indices = @transform_6, window_bounds = array<i64: 8, 8>}, {pipeline_mode = #tpu.pipeline_mode<synchronous>, transform_indices = @transform_7, window_bounds = array<i64: 2, 8>}]} {
    %c0 = arith.constant 0 : index
    %c0_0 = arith.constant 0 : index
    %0 = vector.load %arg7[%c0, %c0_0] : memref<8x8xf32, #tpu.memory_space<vmem>>, vector<8x8xf32>
    %1 = vector.extract_strided_slice %0 {offsets = [0, 0], sizes = [1, 2], strides = [1, 1]} : vector<8x8xf32> to vector<1x2xf32>
    %2 = vector.extract_strided_slice %0 {offsets = [1, 0], sizes = [1, 2], strides = [1, 1]} : vector<8x8xf32> to vector<1x2xf32>
    %3 = vector.extract_strided_slice %0 {offsets = [2, 0], sizes = [1, 8], strides = [1, 1]} : vector<8x8xf32> to vector<1x8xf32>
    %c0_1 = arith.constant 0 : index
    %c0_2 = arith.constant 0 : index
    %4 = vector.load %arg1[%c0_1, %c0_2] : memref<2x256xf32, #tpu.memory_space<vmem>>, vector<2x256xf32>
    %c0_3 = arith.constant 0 : index
    %c0_4 = arith.constant 0 : index
    %5 = vector.load %arg3[%c0_3, %c0_4] : memref<256x2xf32, #tpu.memory_space<vmem>>, vector<256x2xf32>
    %cst = arith.constant dense<0.000000e+00> : vector<2x2xf32>
    %6 = tpu.matmul %4, %5, %cst {dimension_numbers = #tpu.dot_dimension_numbers<[1], [0], [0], [1], [0, 0, 1, 1], [], []>} : vector<2x256xf32>, vector<256x2xf32>, vector<2x2xf32> -> vector<2x2xf32>
    %7 = vector.broadcast %1 : vector<1x2xf32> to vector<2x2xf32>
    %8 = arith.addf %6, %7 : vector<2x2xf32>
    %c0_5 = arith.constant 0 : index
    %c0_6 = arith.constant 0 : index
    %9 = vector.load %arg2[%c0_5, %c0_6] : memref<2x128xf32, #tpu.memory_space<vmem>>, vector<2x128xf32>
    %c0_7 = arith.constant 0 : index
    %c0_8 = arith.constant 0 : index
    %10 = vector.load %arg4[%c0_7, %c0_8] : memref<128x2xf32, #tpu.memory_space<vmem>>, vector<128x2xf32>
    %cst_9 = arith.constant dense<0.000000e+00> : vector<2x2xf32>
    %11 = tpu.matmul %9, %10, %cst_9 {dimension_numbers = #tpu.dot_dimension_numbers<[1], [0], [0], [1], [0, 0, 1, 1], [], []>} : vector<2x128xf32>, vector<128x2xf32>, vector<2x2xf32> -> vector<2x2xf32>
    %12 = vector.broadcast %2 : vector<1x2xf32> to vector<2x2xf32>
    %13 = arith.addf %11, %12 : vector<2x2xf32>
    %c0_10 = arith.constant 0 : index
    %c0_11 = arith.constant 0 : index
    %14 = vector.load %arg5[%c0_10, %c0_11] : memref<2x8xf32, #tpu.memory_space<vmem>>, vector<2x8xf32>
    %cst_12 = arith.constant dense<0.000000e+00> : vector<2x8xf32>
    %15 = tpu.matmul %8, %14, %cst_12 {dimension_numbers = #tpu.dot_dimension_numbers<[1], [0], [0], [1], [0, 0, 1, 1], [], []>} : vector<2x2xf32>, vector<2x8xf32>, vector<2x8xf32> -> vector<2x8xf32>
    %c0_13 = arith.constant 0 : index
    %c0_14 = arith.constant 0 : index
    %16 = vector.load %arg6[%c0_13, %c0_14] : memref<2x8xf32, #tpu.memory_space<vmem>>, vector<2x8xf32>
    %cst_15 = arith.constant dense<0.000000e+00> : vector<2x8xf32>
    %17 = tpu.matmul %13, %16, %cst_15 {dimension_numbers = #tpu.dot_dimension_numbers<[1], [0], [0], [1], [0, 0, 1, 1], [], []>} : vector<2x2xf32>, vector<2x8xf32>, vector<2x8xf32> -> vector<2x8xf32>
    %18 = arith.addf %15, %17 : vector<2x8xf32>
    %19 = vector.broadcast %3 : vector<1x8xf32> to vector<2x8xf32>
    %20 = arith.addf %18, %19 : vector<2x8xf32>
    %c0_16 = arith.constant 0 : index
    %c0_17 = arith.constant 0 : index
    %21 = vector.load %arg8[%c0_16, %c0_17] : memref<2x8xf32, #tpu.memory_space<vmem>>, vector<2x8xf32>
    tpu.vector_store %arg8[%c0_16, %c0_17], %20 {strides = array<i32>} : memref<2x8xf32, #tpu.memory_space<vmem>>, vector<2x8xf32>,
    return
  }
  func.func @transform_0(%arg0: i32) -> (i32, i32) {
    %c0_i32 = arith.constant 0 : i32
    %c0_i32_0 = arith.constant 0 : i32
    %c0_i32_1 = arith.constant 0 : i32
    return %c0_i32, %c0_i32_0 : i32, i32
  }
  func.func @transform_1(%arg0: i32) -> (i32, i32) {
    %c0_i32 = arith.constant 0 : i32
    %c0_i32_0 = arith.constant 0 : i32
    %c0_i32_1 = arith.constant 0 : i32
    return %c0_i32, %c0_i32_0 : i32, i32
  }
  func.func @transform_2(%arg0: i32) -> (i32, i32) {
    %c0_i32 = arith.constant 0 : i32
    %c0_i32_0 = arith.constant 0 : i32
    %c0_i32_1 = arith.constant 0 : i32
    return %c0_i32, %c0_i32_0 : i32, i32
  }
  func.func @transform_3(%arg0: i32) -> (i32, i32) {
    %c0_i32 = arith.constant 0 : i32
    %c0_i32_0 = arith.constant 0 : i32
    %c0_i32_1 = arith.constant 0 : i32
    return %c0_i32, %c0_i32_0 : i32, i32
  }
  func.func @transform_4(%arg0: i32) -> (i32, i32) {
    %c0_i32 = arith.constant 0 : i32
    %c0_i32_0 = arith.constant 0 : i32
    %c0_i32_1 = arith.constant 0 : i32
    return %c0_i32, %c0_i32_0 : i32, i32
  }
  func.func @transform_5(%arg0: i32) -> (i32, i32) {
    %c0_i32 = arith.constant 0 : i32
    %c0_i32_0 = arith.constant 0 : i32
    %c0_i32_1 = arith.constant 0 : i32
    return %c0_i32, %c0_i32_0 : i32, i32
  }
  func.func @transform_6(%arg0: i32) -> (i32, i32) {
    %c0_i32 = arith.constant 0 : i32
    %c0_i32_0 = arith.constant 0 : i32
    %c0_i32_1 = arith.constant 0 : i32
    return %c0_i32, %c0_i32_0 : i32, i32
  }
  func.func @transform_7(%arg0: i32) -> (i32, i32) {
    %c0_i32 = arith.constant 0 : i32
    %c0_i32_0 = arith.constant 0 : i32
    %c0_i32_1 = arith.constant 0 : i32
    return %c0_i32, %c0_i32_0 : i32, i32
  }
}

</mosaic_0001>

<llo_original>
// kernel: _lambda_.3
$region0: #{_lambda_.3}
  #allocation0 [shape = 'u32[]', space=smem, size = 0x4, offset = 0x4, fixed_abs, tag = 'smem constant byte address 0x4 - core index']
  #allocation1 [shape = 'u32[144,128]{1,0:T(1,128)}', space=vmem, size = 0x12000, scoped, tag = 'internal scratch']
  %s0 = inlined_call_operand.vmem [shape: f32[2,256], index: 0, kind: input, shape index: {}]
  %s1 = inlined_call_operand.vmem [shape: f32[2,128], index: 1, kind: input, shape index: {}]
  %s2 = inlined_call_operand.vmem [shape: f32[256,2], index: 2, kind: input, shape index: {}]
  %s3 = inlined_call_operand.vmem [shape: f32[128,2], index: 3, kind: input, shape index: {}]
  %s4 = inlined_call_operand.hbm [shape: f32[2,8], index: 4, kind: input, shape index: {}]
  %s5 = inlined_call_operand.hbm [shape: f32[2,8], index: 5, kind: input, shape index: {}]
  %s6 = inlined_call_operand.hbm [shape: f32[8,8], index: 6, kind: input, shape index: {}]
  %s7 = inlined_call_operand.hbm [shape: f32[2,8], index: 7, kind: output, shape index: {}]
  %s8 = sld [smem:[#allocation0]]
  $region50: #{_lambda_.3} parent=0
    _
  %s10 = ssub.s32 1, %s8
  %s11 = scalar_select 0, %s10, %s8
  $region1: #{_lambda_.3} parent=0
    #allocation2 [shape = 'u8[1024]{0}', space=vmem, size = 0x400, scoped, tag = 'input window, operand 4, single buffered']
    #allocation3 [shape = 's32[1]{0}', space=sflag, size = 0x4, scoped, tag = 'scoped memory for _lambda_.3']
    #allocation4 [shape = 's32[1]{0}', space=sflag, size = 0x4, scoped, tag = 'scoped memory for _lambda_.3']
    #allocation5 [shape = 'u8[1024]{0}', space=vmem, size = 0x400, scoped, tag = 'input window, operand 5, single buffered']
    #allocation6 [shape = 's32[1]{0}', space=sflag, size = 0x4, scoped, tag = 'scoped memory for _lambda_.3']
    #allocation7 [shape = 'u8[4096]{0}', space=vmem, size = 0x1000, scoped, tag = 'input window, operand 6, single buffered']
    #allocation8 [shape = 'u8[1024]{0}', space=vmem, size = 0x400, scoped, tag = 'output window, operand 0, single buffered']
    %12 = vsyncpa [#allocation3], 0
    %13 = vsyncpa [#allocation6], 0
    %14 = vsyncpa [#allocation4], 0
    // Predicated region
    $region2: #{_lambda_.3} parent=1 // pred_check
      _
    $region3: #{_lambda_.3} parent=1 // pred_check_branch
      %16 = sbr.rel (0) target = $region5
    $region4: #{_lambda_.3} parent=1 // pred_region
      _
    $region5: #{_lambda_.3} parent=1 // pred_fallthru
      _
    // Predicated region
    $region6: #{_lambda_.3} parent=1 // pred_check
      _
    $region7: #{_lambda_.3} parent=1 // pred_check_branch
      %18 = sbr.rel (0) target = $region9
    $region8: #{_lambda_.3} parent=1 // pred_region
      _
    $region9: #{_lambda_.3} parent=1 // pred_fallthru
      _
    // Predicated region
    $region10: #{_lambda_.3} parent=1 // pred_check
      _
    $region11: #{_lambda_.3} parent=1 // pred_check_branch
      %20 = sbr.rel (0) target = $region13
    $region12: #{_lambda_.3} parent=1 // pred_region
      _
    $region13: #{_lambda_.3} parent=1 // pred_fallthru
      _
    // Predicated region
    $region14: #{_lambda_.3} parent=1 // pred_check
      _
    $region15: #{_lambda_.3} parent=1 // pred_check_branch
      %22 = sbr.rel (0) target = $region17
    $region16: #{_lambda_.3} parent=1 // pred_region
      _
    $region17: #{_lambda_.3} parent=1 // pred_fallthru
      _
    // Predicated region
    $region18: #{_lambda_.3} parent=1 // pred_check
      _
    $region19: #{_lambda_.3} parent=1 // pred_check_branch
      %24 = sbr.rel (0) target = $region21
    $region20: #{_lambda_.3} parent=1 // pred_region
      %s26 = ssub.s32 32, 32
      %27 = vsyncadd [#allocation3], %s26
      %s29 = sshll.u32 [#allocation2], 4
      %s30 = int_to_ptr.vmem [resolvable:$true] %s29
      %32 = dma.hbm_to_vmem [thread:$0]  %s4, 32, %s30, [#allocation3]
    $region21: #{_lambda_.3} parent=1 // pred_fallthru
      _
    // Predicated region
    $region22: #{_lambda_.3} parent=1 // pred_check
      _
    $region23: #{_lambda_.3} parent=1 // pred_check_branch
      %34 = sbr.rel (0) target = $region25
    $region24: #{_lambda_.3} parent=1 // pred_region
      %s36 = ssub.s32 32, 32
      %37 = vsyncadd [#allocation6], %s36
      %s39 = sshll.u32 [#allocation5], 4
      %s40 = int_to_ptr.vmem [resolvable:$true] %s39
      %42 = dma.hbm_to_vmem [thread:$0]  %s5, 32, %s40, [#allocation6]
    $region25: #{_lambda_.3} parent=1 // pred_fallthru
      _
    // Predicated region
    $region26: #{_lambda_.3} parent=1 // pred_check
      _
    $region27: #{_lambda_.3} parent=1 // pred_check_branch
      %44 = sbr.rel (0) target = $region29
    $region28: #{_lambda_.3} parent=1 // pred_region
      %s46 = ssub.s32 128, 128
      %47 = vsyncadd [#allocation6], %s46
      %s49 = sshll.u32 [#allocation7], 4
      %s50 = int_to_ptr.vmem [resolvable:$true] %s49
      %52 = dma.hbm_to_vmem [thread:$0]  %s6, 128, %s50, [#allocation6]
    $region29: #{_lambda_.3} parent=1 // pred_fallthru
      _
    // Predicated region
    $region30: #{_lambda_.3} parent=1 // pred_check
      _
    $region31: #{_lambda_.3} parent=1 // pred_check_branch
      %54 = sbr.rel (0) target = $region33
    $region32: #{_lambda_.3} parent=1 // pred_region
      %55 = dma.done [#allocation3], 32
    $region33: #{_lambda_.3} parent=1 // pred_fallthru
      _
    // Predicated region
    $region34: #{_lambda_.3} parent=1 // pred_check
      _
    $region35: #{_lambda_.3} parent=1 // pred_check_branch
      %57 = sbr.rel (0) target = $region37
    $region36: #{_lambda_.3} parent=1 // pred_region
      %58 = dma.done [#allocation6], 32
    $region37: #{_lambda_.3} parent=1 // pred_fallthru
      _
    // Predicated region
    $region38: #{_lambda_.3} parent=1 // pred_check
      _
    $region39: #{_lambda_.3} parent=1 // pred_check_branch
      %60 = sbr.rel (0) target = $region41
    $region40: #{_lambda_.3} parent=1 // pred_region
      %61 = dma.done [#allocation6], 128
    $region41: #{_lambda_.3} parent=1 // pred_fallthru
      _
    %v62 = vld [vmem:[#allocation7] sm:$0xff]
    %v63 = vld [vmem:[%s0] sm:$0xf]
    %v64 = vld [vmem:[%s2] sm:$0xff]
    %v65 = vld [vmem:[%s2 + $0x8] sm:$0xff]
    %v66 = vld [vmem:[%s2 + $0x10] sm:$0xff]
    %v67 = vld [vmem:[%s2 + $0x18] sm:$0xff]
    %v68 = vld [vmem:[%s2 + $0x20] sm:$0xff]
    %v69 = vld [vmem:[%s2 + $0x28] sm:$0xff]
    %v70 = vld [vmem:[%s2 + $0x30] sm:$0xff]
    %v71 = vld [vmem:[%s2 + $0x38] sm:$0xff]
    %v72 = vld [vmem:[%s2 + $0x40] sm:$0xff]
    %v73 = vld [vmem:[%s2 + $0x48] sm:$0xff]
    %v74 = vld [vmem:[%s2 + $0x50] sm:$0xff]
    %v75 = vld [vmem:[%s2 + $0x58] sm:$0xff]
    %v76 = vld [vmem:[%s2 + $0x60] sm:$0xff]
    %v77 = vld [vmem:[%s2 + $0x68] sm:$0xff]
    %v78 = vld [vmem:[%s2 + $0x70] sm:$0xff]
    %v79 = vld [vmem:[%s2 + $0x78] sm:$0xff]
    %v80 = vld [vmem:[%s2 + $0x80] sm:$0xff]
    %v81 = vld [vmem:[%s2 + $0x88] sm:$0xff]
    %v82 = vld [vmem:[%s2 + $0x90] sm:$0xff]
    %v83 = vld [vmem:[%s2 + $0x98] sm:$0xff]
    %v84 = vld [vmem:[%s2 + $0xa0] sm:$0xff]
    %v85 = vld [vmem:[%s2 + $0xa8] sm:$0xff]
    %v86 = vld [vmem:[%s2 + $0xb0] sm:$0xff]
    %v87 = vld [vmem:[%s2 + $0xb8] sm:$0xff]
    %v88 = vld [vmem:[%s2 + $0xc0] sm:$0xff]
    %v89 = vld [vmem:[%s2 + $0xc8] sm:$0xff]
    %v90 = vld [vmem:[%s2 + $0xd0] sm:$0xff]
    %v91 = vld [vmem:[%s2 + $0xd8] sm:$0xff]
    %v92 = vld [vmem:[%s2 + $0xe0] sm:$0xff]
    %v93 = vld [vmem:[%s2 + $0xe8] sm:$0xff]
    %v94 = vld [vmem:[%s2 + $0xf0] sm:$0xff]
    %v95 = vld [vmem:[%s2 + $0xf8] sm:$0xff]
    %v96 = vlaneseq
    %v97 = vshrl.u32 %v96, 7
    %v98 = vsub.s32 0, %v97
    %v99 = vrot.slane %v62, %v98
    %v102 = vunpack.c.l.s4 1983009808
    %v103 = vunpack.c.0.s8 %v102
    %v104 = vlaneseq
    %v105 = vshrl.u32 %v104, 7
    %v106 = vsub.s32 %v103, %v105
    %v107 = vrot.slane %v63, %v106
    %v108 = vcombine.high %v107, %v107
    %111 = vmatprep.subr.mxu0 0.0
    %112 = vmatpush1.msra.mxu0 %v79
    %113 = vmatprep.subr.mxu0 0.0
    %114 = vmatpush1.msra.mxu0 %v78
    %115 = vmatprep.subr.mxu0 0.0
    %116 = vmatpush1.msra.mxu0 %v77
    %117 = vmatprep.subr.mxu0 0.0
    %118 = vmatpush1.msra.mxu0 %v76
    %119 = vmatprep.subr.mxu0 0.0
    %120 = vmatpush1.msra.mxu0 %v75
    %121 = vmatprep.subr.mxu0 0.0
    %122 = vmatpush1.msra.mxu0 %v74
    %123 = vmatprep.subr.mxu0 0.0
    %124 = vmatpush1.msra.mxu0 %v73
    %125 = vmatprep.subr.mxu0 0.0
    %126 = vmatpush1.msra.mxu0 %v72
    %127 = vmatprep.subr.mxu0 0.0
    %128 = vmatpush1.msra.mxu0 %v71
    %129 = vmatprep.subr.mxu0 0.0
    %130 = vmatpush1.msra.mxu0 %v70
    %131 = vmatprep.subr.mxu0 0.0
    %132 = vmatpush1.msra.mxu0 %v69
    %133 = vmatprep.subr.mxu0 0.0
    %134 = vmatpush1.msra.mxu0 %v68
    %135 = vmatprep.subr.mxu0 0.0
    %136 = vmatpush1.msra.mxu0 %v67
    %137 = vmatprep.subr.mxu0 0.0
    %138 = vmatpush1.msra.mxu0 %v66
    %139 = vmatprep.subr.mxu0 0.0
    %140 = vmatpush1.msra.mxu0 %v65
    %141 = vmatprep.subr.mxu0 0.0
    %142 = vmatpush1.msra.mxu0 %v64
    %143 = vmatprep.subr.mxu0 0.0
    %144 = vmatpush2.msra.mxu0 %v95
    %145 = vmatprep.subr.mxu0 0.0
    %146 = vmatpush2.msra.mxu0 %v94
    %147 = vmatprep.subr.mxu0 0.0
    %148 = vmatpush2.msra.mxu0 %v93
    %149 = vmatprep.subr.mxu0 0.0
    %150 = vmatpush2.msra.mxu0 %v92
    %151 = vmatprep.subr.mxu0 0.0
    %152 = vmatpush2.msra.mxu0 %v91
    %153 = vmatprep.subr.mxu0 0.0
    %154 = vmatpush2.msra.mxu0 %v90
    %155 = vmatprep.subr.mxu0 0.0
    %156 = vmatpush2.msra.mxu0 %v89
    %157 = vmatprep.subr.mxu0 0.0
    %158 = vmatpush2.msra.mxu0 %v88
    %159 = vmatprep.subr.mxu0 0.0
    %160 = vmatpush2.msra.mxu0 %v87
    %161 = vmatprep.subr.mxu0 0.0
    %162 = vmatpush2.msra.mxu0 %v86
    %163 = vmatprep.subr.mxu0 0.0
    %164 = vmatpush2.msra.mxu0 %v85
    %165 = vmatprep.subr.mxu0 0.0
    %166 = vmatpush2.msra.mxu0 %v84
    %167 = vmatprep.subr.mxu0 0.0
    %168 = vmatpush2.msra.mxu0 %v83
    %169 = vmatprep.subr.mxu0 0.0
    %170 = vmatpush2.msra.mxu0 %v82
    %171 = vmatprep.subr.mxu0 0.0
    %172 = vmatpush2.msra.mxu0 %v81
    %173 = vmatprep.subr.mxu0 0.0
    %174 = vmatpush2.msra.mxu0 %v80
    %175 = vmatprep.mubr.f32.mxu0 %v108
    %176 = vmatmul.mubr.f32.gmra.mxu0 %v107
    %v177 = vpop.f32.mrf.mxu0
    %v178 = vadd.f32 %v99, %v177
    %v179 = vpop.f32.mrf.mxu0
    %180 = vdwg.mxu0
    %v181 = vld [vmem:[%s1] sm:$0x3]
    %v182 = vld [vmem:[%s3] sm:$0xff]
    %v183 = vld [vmem:[%s3 + $0x8] sm:$0xff]
    %v184 = vld [vmem:[%s3 + $0x10] sm:$0xff]
    %v185 = vld [vmem:[%s3 + $0x18] sm:$0xff]
    %v186 = vld [vmem:[%s3 + $0x20] sm:$0xff]
    %v187 = vld [vmem:[%s3 + $0x28] sm:$0xff]
    %v188 = vld [vmem:[%s3 + $0x30] sm:$0xff]
    %v189 = vld [vmem:[%s3 + $0x38] sm:$0xff]
    %v190 = vld [vmem:[%s3 + $0x40] sm:$0xff]
    %v191 = vld [vmem:[%s3 + $0x48] sm:$0xff]
    %v192 = vld [vmem:[%s3 + $0x50] sm:$0xff]
    %v193 = vld [vmem:[%s3 + $0x58] sm:$0xff]
    %v194 = vld [vmem:[%s3 + $0x60] sm:$0xff]
    %v195 = vld [vmem:[%s3 + $0x68] sm:$0xff]
    %v196 = vld [vmem:[%s3 + $0x70] sm:$0xff]
    %v197 = vld [vmem:[%s3 + $0x78] sm:$0xff]
    %v198 = vlaneseq
    %v199 = vshrl.u32 %v198, 7
    %v200 = vsub.s32 1, %v199
    %v201 = vrot.slane %v62, %v200
    %202 = vmatprep.subr.mxu0 0.0
    %203 = vmatpush1.msra.mxu0 %v197
    %204 = vmatprep.subr.mxu0 0.0
    %205 = vmatpush1.msra.mxu0 %v196
    %206 = vmatprep.subr.mxu0 0.0
    %207 = vmatpush1.msra.mxu0 %v195
    %208 = vmatprep.subr.mxu0 0.0
    %209 = vmatpush1.msra.mxu0 %v194
    %210 = vmatprep.subr.mxu0 0.0
    %211 = vmatpush1.msra.mxu0 %v193
    %212 = vmatprep.subr.mxu0 0.0
    %213 = vmatpush1.msra.mxu0 %v192
    %214 = vmatprep.subr.mxu0 0.0
    %215 = vmatpush1.msra.mxu0 %v191
    %216 = vmatprep.subr.mxu0 0.0
    %217 = vmatpush1.msra.mxu0 %v190
    %218 = vmatprep.subr.mxu0 0.0
    %219 = vmatpush1.msra.mxu0 %v189
    %220 = vmatprep.subr.mxu0 0.0
    %221 = vmatpush1.msra.mxu0 %v188
    %222 = vmatprep.subr.mxu0 0.0
    %223 = vmatpush1.msra.mxu0 %v187
    %224 = vmatprep.subr.mxu0 0.0
    %225 = vmatpush1.msra.mxu0 %v186
    %226 = vmatprep.subr.mxu0 0.0
    %227 = vmatpush1.msra.mxu0 %v185
    %228 = vmatprep.subr.mxu0 0.0
    %229 = vmatpush1.msra.mxu0 %v184
    %230 = vmatprep.subr.mxu0 0.0
    %231 = vmatpush1.msra.mxu0 %v183
    %232 = vmatprep.subr.mxu0 0.0
    %233 = vmatpush1.msra.mxu0 %v182
    %234 = vmatprep.subr.mxu0 0.0
    %235 = vmatpush2.msra.mxu0 0.0
    %236 = vmatprep.subr.mxu0 0.0
    %237 = vmatpush2.msra.mxu0 0.0
    %238 = vmatprep.subr.mxu0 0.0
    %239 = vmatpush2.msra.mxu0 0.0
    %240 = vmatprep.subr.mxu0 0.0
    %241 = vmatpush2.msra.mxu0 0.0
    %242 = vmatprep.subr.mxu0 0.0
    %243 = vmatpush2.msra.mxu0 0.0
    %244 = vmatprep.subr.mxu0 0.0
    %245 = vmatpush2.msra.mxu0 0.0
    %246 = vmatprep.subr.mxu0 0.0
    %247 = vmatpush2.msra.mxu0 0.0
    %248 = vmatprep.subr.mxu0 0.0
    %249 = vmatpush2.msra.mxu0 0.0
    %250 = vmatprep.subr.mxu0 0.0
    %251 = vmatpush2.msra.mxu0 0.0
    %252 = vmatprep.subr.mxu0 0.0
    %253 = vmatpush2.msra.mxu0 0.0
    %254 = vmatprep.subr.mxu0 0.0
    %255 = vmatpush2.msra.mxu0 0.0
    %256 = vmatprep.subr.mxu0 0.0
    %257 = vmatpush2.msra.mxu0 0.0
    %258 = vmatprep.subr.mxu0 0.0
    %259 = vmatpush2.msra.mxu0 0.0
    %260 = vmatprep.subr.mxu0 0.0
    %261 = vmatpush2.msra.mxu0 0.0
    %262 = vmatprep.subr.mxu0 0.0
    %263 = vmatpush2.msra.mxu0 0.0
    %264 = vmatprep.subr.mxu0 0.0
    %265 = vmatpush2.msra.mxu0 0.0
    %266 = vmatprep.mubr.f32.mxu0 0.0
    %267 = vmatmul.mubr.f32.gmra.mxu0 %v181
    %v268 = vpop.f32.mrf.mxu0
    %v269 = vadd.f32 %v201, %v268
    %v270 = vpop.f32.mrf.mxu0
    %271 = vdwg.mxu0
    %v272 = vld [vmem:[#allocation2] sm:$0x3]
    %v273 = vld [vmem:[#allocation5] sm:$0x3]
    %vm274 = vcmask 15360
    %v276 = vsel %vm274, %v269, 0
    %vm278 = vcmask 1041408
    %v280 = vsel %vm278, %v273, 0
    %282 = vmatprep.subr.mxu0 0.0
    %283 = vmatpush1.msra.mxu0 0.0
    %284 = vmatprep.subr.mxu0 0.0
    %285 = vmatpush1.msra.mxu0 0.0
    %286 = vmatprep.subr.mxu0 0.0
    %287 = vmatpush1.msra.mxu0 0.0
    %288 = vmatprep.subr.mxu0 0.0
    %289 = vmatpush1.msra.mxu0 0.0
    %290 = vmatprep.subr.mxu0 0.0
    %291 = vmatpush1.msra.mxu0 0.0
    %292 = vmatprep.subr.mxu0 0.0
    %293 = vmatpush1.msra.mxu0 0.0
    %294 = vmatprep.subr.mxu0 0.0
    %295 = vmatpush1.msra.mxu0 0.0
    %296 = vmatprep.subr.mxu0 0.0
    %297 = vmatpush1.msra.mxu0 0.0
    %298 = vmatprep.subr.mxu0 0.0
    %299 = vmatpush1.msra.mxu0 0.0
    %300 = vmatprep.subr.mxu0 0.0
    %301 = vmatpush1.msra.mxu0 0.0
    %302 = vmatprep.subr.mxu0 0.0
    %303 = vmatpush1.msra.mxu0 0.0
    %304 = vmatprep.subr.mxu0 0.0
    %305 = vmatpush1.msra.mxu0 0.0
    %306 = vmatprep.subr.mxu0 0.0
    %307 = vmatpush1.msra.mxu0 0.0
    %308 = vmatprep.subr.mxu0 0.0
    %309 = vmatpush1.msra.mxu0 0.0
    %310 = vmatprep.subr.mxu0 0.0
    %311 = vmatpush1.msra.mxu0 0.0
    %312 = vmatprep.subr.mxu0 0.0
    %313 = vmatpush1.msra.mxu0 %v280
    %314 = vmatprep.subr.mxu0 0.0
    %315 = vmatpush2.msra.mxu0 0.0
    %316 = vmatprep.subr.mxu0 0.0
    %317 = vmatpush2.msra.mxu0 0.0
    %318 = vmatprep.subr.mxu0 0.0
    %319 = vmatpush2.msra.mxu0 0.0
    %320 = vmatprep.subr.mxu0 0.0
    %321 = vmatpush2.msra.mxu0 0.0
    %322 = vmatprep.subr.mxu0 0.0
    %323 = vmatpush2.msra.mxu0 0.0
    %324 = vmatprep.subr.mxu0 0.0
    %325 = vmatpush2.msra.mxu0 0.0
    %326 = vmatprep.subr.mxu0 0.0
    %327 = vmatpush2.msra.mxu0 0.0
    %328 = vmatprep.subr.mxu0 0.0
    %329 = vmatpush2.msra.mxu0 0.0
    %330 = vmatprep.subr.mxu0 0.0
    %331 = vmatpush2.msra.mxu0 0.0
    %332 = vmatprep.subr.mxu0 0.0
    %333 = vmatpush2.msra.mxu0 0.0
    %334 = vmatprep.subr.mxu0 0.0
    %335 = vmatpush2.msra.mxu0 0.0
    %336 = vmatprep.subr.mxu0 0.0
    %337 = vmatpush2.msra.mxu0 0.0
    %338 = vmatprep.subr.mxu0 0.0
    %339 = vmatpush2.msra.mxu0 0.0
    %340 = vmatprep.subr.mxu0 0.0
    %341 = vmatpush2.msra.mxu0 0.0
    %342 = vmatprep.subr.mxu0 0.0
    %343 = vmatpush2.msra.mxu0 0.0
    %344 = vmatprep.subr.mxu0 0.0
    %345 = vmatpush2.msra.mxu0 0.0
    %346 = vmatprep.mubr.f32.mxu0 0.0
    %347 = vmatmul.mubr.f32.gmra.mxu0 %v276
    %v348 = vpop.f32.mrf.mxu0
    %v349 = vadd.f32 0.0, %v348
    %v350 = vpop.f32.mrf.mxu0
    %351 = vdwg.mxu0
    %v353 = vsel %vm274, %v178, 0
    %v356 = vsel %vm278, %v272, 0
    %358 = vmatprep.subr.mxu0 0.0
    %359 = vmatpush1.msra.mxu0 0.0
    %360 = vmatprep.subr.mxu0 0.0
    %361 = vmatpush1.msra.mxu0 0.0
    %362 = vmatprep.subr.mxu0 0.0
    %363 = vmatpush1.msra.mxu0 0.0
    %364 = vmatprep.subr.mxu0 0.0
    %365 = vmatpush1.msra.mxu0 0.0
    %366 = vmatprep.subr.mxu0 0.0
    %367 = vmatpush1.msra.mxu0 0.0
    %368 = vmatprep.subr.mxu0 0.0
    %369 = vmatpush1.msra.mxu0 0.0
    %370 = vmatprep.subr.mxu0 0.0
    %371 = vmatpush1.msra.mxu0 0.0
    %372 = vmatprep.subr.mxu0 0.0
    %373 = vmatpush1.msra.mxu0 0.0
    %374 = vmatprep.subr.mxu0 0.0
    %375 = vmatpush1.msra.mxu0 0.0
    %376 = vmatprep.subr.mxu0 0.0
    %377 = vmatpush1.msra.mxu0 0.0
    %378 = vmatprep.subr.mxu0 0.0
    %379 = vmatpush1.msra.mxu0 0.0
    %380 = vmatprep.subr.mxu0 0.0
    %381 = vmatpush1.msra.mxu0 0.0
    %382 = vmatprep.subr.mxu0 0.0
    %383 = vmatpush1.msra.mxu0 0.0
    %384 = vmatprep.subr.mxu0 0.0
    %385 = vmatpush1.msra.mxu0 0.0
    %386 = vmatprep.subr.mxu0 0.0
    %387 = vmatpush1.msra.mxu0 0.0
    %388 = vmatprep.subr.mxu0 0.0
    %389 = vmatpush1.msra.mxu0 %v356
    %390 = vmatprep.subr.mxu0 0.0
    %391 = vmatpush2.msra.mxu0 0.0
    %392 = vmatprep.subr.mxu0 0.0
    %393 = vmatpush2.msra.mxu0 0.0
    %394 = vmatprep.subr.mxu0 0.0
    %395 = vmatpush2.msra.mxu0 0.0
    %396 = vmatprep.subr.mxu0 0.0
    %397 = vmatpush2.msra.mxu0 0.0
    %398 = vmatprep.subr.mxu0 0.0
    %399 = vmatpush2.msra.mxu0 0.0
    %400 = vmatprep.subr.mxu0 0.0
    %401 = vmatpush2.msra.mxu0 0.0
    %402 = vmatprep.subr.mxu0 0.0
    %403 = vmatpush2.msra.mxu0 0.0
    %404 = vmatprep.subr.mxu0 0.0
    %405 = vmatpush2.msra.mxu0 0.0
    %406 = vmatprep.subr.mxu0 0.0
    %407 = vmatpush2.msra.mxu0 0.0
    %408 = vmatprep.subr.mxu0 0.0
    %409 = vmatpush2.msra.mxu0 0.0
    %410 = vmatprep.subr.mxu0 0.0
    %411 = vmatpush2.msra.mxu0 0.0
    %412 = vmatprep.subr.mxu0 0.0
    %413 = vmatpush2.msra.mxu0 0.0
    %414 = vmatprep.subr.mxu0 0.0
    %415 = vmatpush2.msra.mxu0 0.0
    %416 = vmatprep.subr.mxu0 0.0
    %417 = vmatpush2.msra.mxu0 0.0
    %418 = vmatprep.subr.mxu0 0.0
    %419 = vmatpush2.msra.mxu0 0.0
    %420 = vmatprep.subr.mxu0 0.0
    %421 = vmatpush2.msra.mxu0 0.0
    %422 = vmatprep.mubr.f32.mxu0 0.0
    %423 = vmatmul.mubr.f32.gmra.mxu0 %v353
    %v424 = vpop.f32.mrf.mxu0
    %v425 = vadd.f32 %v349, %v424
    %v426 = vpop.f32.mrf.mxu0
    %427 = vdwg.mxu0
    %v428 = vlaneseq
    %v429 = vshrl.u32 %v428, 7
    %v430 = vsub.s32 2, %v429
    %v431 = vrot.slane %v62, %v430
    %v432 = vadd.f32 %v425, %v431
    %vm433 = vcmask 58368
    %434 = vst.msk [vmem:[#allocation8] sm:$0x3] %vm433, %v432
    // Predicated region
    $region42: #{_lambda_.3} parent=1 // pred_check
      _
    $region43: #{_lambda_.3} parent=1 // pred_check_branch
      %436 = sbr.rel (0) target = $region45
    $region44: #{_lambda_.3} parent=1 // pred_region
      %s438 = ssub.s32 32, 32
      %439 = vsyncadd [#allocation4], %s438
      %s441 = sshll.u32 [#allocation8], 4
      %s442 = int_to_ptr.vmem [resolvable:$true] %s441
      %444 = dma.vmem_to_hbm [thread:$0]  %s442, 32, %s7, [#allocation4]
    $region45: #{_lambda_.3} parent=1 // pred_fallthru
      _
    // Predicated region
    $region46: #{_lambda_.3} parent=1 // pred_check
      _
    $region47: #{_lambda_.3} parent=1 // pred_check_branch
      %446 = sbr.rel (0) target = $region49
    $region48: #{_lambda_.3} parent=1 // pred_region
      %447 = dma.done [#allocation4], 32
    $region49: #{_lambda_.3} parent=1 // pred_fallthru
      _
    %448 = vsyncpa [#allocation3], 1
    %449 = vsyncpa [#allocation6], 1
    %450 = vsyncpa [#allocation4], 1

// kernel: _lambda_.2
$region0: #{_lambda_.2}
  #allocation0 [shape = 'u32[]', space=smem, size = 0x4, offset = 0x4, fixed_abs, tag = 'smem constant byte address 0x4 - core index']
  #allocation1 [shape = 'u32[144,128]{1,0:T(1,128)}', space=vmem, size = 0x12000, scoped, tag = 'internal scratch']
  %s0 = inlined_call_operand.hbm [shape: f32[32,16], index: 0, kind: input, shape index: {}]
  %s1 = inlined_call_operand.vmem [shape: f32[32,8], index: 1, kind: input, shape index: {}]
  %s2 = inlined_call_operand.vmem [shape: f32[2,16], index: 2, kind: input, shape index: {}]
  %s3 = inlined_call_operand.vmem [shape: f32[2,16], index: 3, kind: input, shape index: {}]
  %s4 = inlined_call_operand.hbm [shape: f32[16,48], index: 4, kind: input, shape index: {}]
  %s5 = inlined_call_operand.hbm [shape: f32[16,16], index: 5, kind: input, shape index: {}]
  %s6 = inlined_call_operand.hbm [shape: f32[16,32], index: 6, kind: input, shape index: {}]
  %s7 = inlined_call_operand.hbm [shape: f32[32,16], index: 7, kind: input, shape index: {}]
  %s8 = inlined_call_operand.hbm [shape: f32[8,48], index: 8, kind: input, shape index: {}]
  %s9 = inlined_call_operand.hbm [shape: f32[8,24], index: 9, kind: input, shape index: {}]
  %s10 = inlined_call_operand.hbm [shape: f32[8,8], index: 10, kind: input, shape index: {}]
  %s11 = inlined_call_operand.hbm [shape: f32[8,32], index: 11, kind: input, shape index: {}]
  %s12 = inlined_call_operand.vmem [shape: f32[32,8], index: 12, kind: input, shape index: {}]
  %s13 = inlined_call_operand.hbm [shape: f32[8,32], index: 13, kind: input, shape index: {}]
  %s14 = inlined_call_operand.hbm [shape: f32[8,24], index: 14, kind: input, shape index: {}]
  %s15 = inlined_call_operand.hbm [shape: f32[8,8], index: 15, kind: input, shape index: {}]
  %s16 = inlined_call_operand.hbm [shape: f32[8,32], index: 16, kind: input, shape index: {}]
  %s17 = inlined_call_operand.vmem [shape: f32[32,8], index: 17, kind: input, shape index: {}]
  %s18 = inlined_call_operand.vmem [shape: f32[8,32], index: 18, kind: input, shape index: {}]
  %s19 = inlined_call_operand.vmem [shape: f32[32,16], index: 19, kind: output, shape index: {0}]
  %s20 = inlined_call_operand.vmem [shape: f32[32,8], index: 20, kind: output, shape index: {1}]
  %21 = xla_tuple %s19, %s20
  %s22 = sld [smem:[#allocation0]]
  $region146: #{_lambda_.2} parent=0
    _
  %s24 = ssub.s32 1, %s22
  %s25 = scalar_select 0, %s24, %s22
  $region1: #{_lambda_.2} parent=0
    #allocation2 [shape = 'u8[16384]{0}', space=vmem, size = 0x4000, scoped, tag = 'input window, operand 0, single buffered']
    #allocation3 [shape = 's32[1]{0}', space=sflag, size = 0x4, scoped, tag = 'scoped memory for _lambda_.2']
    #allocation4 [shape = 'u8[8192]{0}', space=vmem, size = 0x2000, scoped, tag = 'input window, operand 4, single buffered']
    #allocation5 [shape = 's32[1]{0}', space=sflag, size = 0x4, scoped, tag = 'scoped memory for _lambda_.2']
    #allocation6 [shape = 'u8[8192]{0}', space=vmem, size = 0x2000, scoped, tag = 'input window, operand 5, single buffered']
    #allocation7 [shape = 'u8[8192]{0}', space=vmem, size = 0x2000, scoped, tag = 'input window, operand 6, single buffered']
    #allocation8 [shape = 's32[1]{0}', space=sflag, size = 0x4, scoped, tag = 'scoped memory for _lambda_.2']
    #allocation9 [shape = 'u8[16384]{0}', space=vmem, size = 0x4000, scoped, tag = 'input window, operand 7, single buffered']
    #allocation10 [shape = 'u8[4096]{0}', space=vmem, size = 0x1000, scoped, tag = 'input window, operand 8, single buffered']
    #allocation11 [shape = 's32[1]{0}', space=sflag, size = 0x4, scoped, tag = 'scoped memory for _lambda_.2']
    #allocation12 [shape = 'u8[4096]{0}', space=vmem, size = 0x1000, scoped, tag = 'input window, operand 9, single buffered']
    #allocation13 [shape = 'u8[4096]{0}', space=vmem, size = 0x1000, scoped, tag = 'input window, operand 10, single buffered']
    #allocation14 [shape = 's32[1]{0}', space=sflag, size = 0x4, scoped, tag = 'scoped memory for _lambda_.2']
    #allocation15 [shape = 'u8[4096]{0}', space=vmem, size = 0x1000, scoped, tag = 'input window, operand 11, single buffered']
    #allocation16 [shape = 'u8[4096]{0}', space=vmem, size = 0x1000, scoped, tag = 'input window, operand 13, single buffered']
    #allocation17 [shape = 's32[1]{0}', space=sflag, size = 0x4, scoped, tag = 'scoped memory for _lambda_.2']
    #allocation18 [shape = 'u8[4096]{0}', space=vmem, size = 0x1000, scoped, tag = 'input window, operand 14, single buffered']
    #allocation19 [shape = 'u8[4096]{0}', space=vmem, size = 0x1000, scoped, tag = 'input window, operand 15, single buffered']
    #allocation20 [shape = 's32[1]{0}', space=sflag, size = 0x4, scoped, tag = 'scoped memory for _lambda_.2']
    #allocation21 [shape = 'u8[4096]{0}', space=vmem, size = 0x1000, scoped, tag = 'input window, operand 16, single buffered']
    %26 = vsyncpa [#allocation3], 0
    %27 = vsyncpa [#allocation5], 0
    %28 = vsyncpa [#allocation8], 0
    %29 = vsyncpa [#allocation11], 0
    %30 = vsyncpa [#allocation14], 0
    %31 = vsyncpa [#allocation17], 0
    %32 = vsyncpa [#allocation20], 0
    // Predicated region
    $region2: #{_lambda_.2} parent=1 // pred_check
      _
    $region3: #{_lambda_.2} parent=1 // pred_check_branch
      %34 = sbr.rel (0) target = $region5
    $region4: #{_lambda_.2} parent=1 // pred_region
      %s36 = ssub.s32 512, 512
      %37 = vsyncadd [#allocation3], %s36
      %s38 = sshll.u32 [#allocation2], 4
      %s39 = int_to_ptr.vmem [resolvable:$true] %s38
      %44 = dma.hbm_to_vmem [thread:$0]  %s0, 512, %s39, [#allocation3], 128, 128, 8
    $region5: #{_lambda_.2} parent=1 // pred_fallthru
      _
    // Predicated region
    $region6: #{_lambda_.2} parent=1 // pred_check
      _
    $region7: #{_lambda_.2} parent=1 // pred_check_branch
      %46 = sbr.rel (0) target = $region9
    $region8: #{_lambda_.2} parent=1 // pred_region
      _
    $region9: #{_lambda_.2} parent=1 // pred_fallthru
      _
    // Predicated region
    $region10: #{_lambda_.2} parent=1 // pred_check
      _
    $region11: #{_lambda_.2} parent=1 // pred_check_branch
      %48 = sbr.rel (0) target = $region13
    $region12: #{_lambda_.2} parent=1 // pred_region
      _
    $region13: #{_lambda_.2} parent=1 // pred_fallthru
      _
    // Predicated region
    $region14: #{_lambda_.2} parent=1 // pred_check
      _
    $region15: #{_lambda_.2} parent=1 // pred_check_branch
      %50 = sbr.rel (0) target = $region17
    $region16: #{_lambda_.2} parent=1 // pred_region
      _
    $region17: #{_lambda_.2} parent=1 // pred_fallthru
      _
    // Predicated region
    $region18: #{_lambda_.2} parent=1 // pred_check
      _
    $region19: #{_lambda_.2} parent=1 // pred_check_branch
      %52 = sbr.rel (0) target = $region21
    $region20: #{_lambda_.2} parent=1 // pred_region
      %s54 = ssub.s32 256, 256
      %55 = vsyncadd [#allocation5], %s54
      %s56 = sshll.u32 [#allocation4], 4
      %s57 = int_to_ptr.vmem [resolvable:$true] %s56
      %62 = dma.hbm_to_vmem [thread:$0]  %s4, 256, %s57, [#allocation5], 128, 128, 8
    $region21: #{_lambda_.2} parent=1 // pred_fallthru
      _
    // Predicated region
    $region22: #{_lambda_.2} parent=1 // pred_check
      _
    $region23: #{_lambda_.2} parent=1 // pred_check_branch
      %64 = sbr.rel (0) target = $region25
    $region24: #{_lambda_.2} parent=1 // pred_region
      %s66 = ssub.s32 256, 256
      %67 = vsyncadd [#allocation5], %s66
      %s68 = sshll.u32 [#allocation6], 4
      %s69 = int_to_ptr.vmem [resolvable:$true] %s68
      %74 = dma.hbm_to_vmem [thread:$0]  %s5, 256, %s69, [#allocation5], 128, 128, 8
    $region25: #{_lambda_.2} parent=1 // pred_fallthru
      _
    // Predicated region
    $region26: #{_lambda_.2} parent=1 // pred_check
      _
    $region27: #{_lambda_.2} parent=1 // pred_check_branch
      %76 = sbr.rel (0) target = $region29
    $region28: #{_lambda_.2} parent=1 // pred_region
      %s78 = ssub.s32 256, 256
      %79 = vsyncadd [#allocation8], %s78
      %s80 = sshll.u32 [#allocation7], 4
      %s81 = int_to_ptr.vmem [resolvable:$true] %s80
      %86 = dma.hbm_to_vmem [thread:$0]  %s6, 256, %s81, [#allocation8], 128, 128, 8
    $region29: #{_lambda_.2} parent=1 // pred_fallthru
      _
    // Predicated region
    $region30: #{_lambda_.2} parent=1 // pred_check
      _
    $region31: #{_lambda_.2} parent=1 // pred_check_branch
      %88 = sbr.rel (0) target = $region33
    $region32: #{_lambda_.2} parent=1 // pred_region
      %s90 = ssub.s32 512, 512
      %91 = vsyncadd [#allocation8], %s90
      %s92 = sshll.u32 [#allocation9], 4
      %s93 = int_to_ptr.vmem [resolvable:$true] %s92
      %98 = dma.hbm_to_vmem [thread:$0]  %s7, 512, %s93, [#allocation8], 128, 128, 8
    $region33: #{_lambda_.2} parent=1 // pred_fallthru
      _
    // Predicated region
    $region34: #{_lambda_.2} parent=1 // pred_check
      _
    $region35: #{_lambda_.2} parent=1 // pred_check_branch
      %100 = sbr.rel (0) target = $region37
    $region36: #{_lambda_.2} parent=1 // pred_region
      %s102 = ssub.s32 128, 128
      %103 = vsyncadd [#allocation11], %s102
      %s105 = sshll.u32 [#allocation10], 4
      %s106 = int_to_ptr.vmem [resolvable:$true] %s105
      %108 = dma.hbm_to_vmem [thread:$0]  %s8, 128, %s106, [#allocation11]
    $region37: #{_lambda_.2} parent=1 // pred_fallthru
      _
    // Predicated region
    $region38: #{_lambda_.2} parent=1 // pred_check
      _
    $region39: #{_lambda_.2} parent=1 // pred_check_branch
      %110 = sbr.rel (0) target = $region41
    $region40: #{_lambda_.2} parent=1 // pred_region
      %s112 = ssub.s32 128, 128
      %113 = vsyncadd [#allocation11], %s112
      %s115 = sshll.u32 [#allocation12], 4
      %s116 = int_to_ptr.vmem [resolvable:$true] %s115
      %118 = dma.hbm_to_vmem [thread:$0]  %s9, 128, %s116, [#allocation11]
    $region41: #{_lambda_.2} parent=1 // pred_fallthru
      _
    // Predicated region
    $region42: #{_lambda_.2} parent=1 // pred_check
      _
    $region43: #{_lambda_.2} parent=1 // pred_check_branch
      %120 = sbr.rel (0) target = $region45
    $region44: #{_lambda_.2} parent=1 // pred_region
      %s122 = ssub.s32 128, 128
      %123 = vsyncadd [#allocation14], %s122
      %s125 = sshll.u32 [#allocation13], 4
      %s126 = int_to_ptr.vmem [resolvable:$true] %s125
      %128 = dma.hbm_to_vmem [thread:$0]  %s10, 128, %s126, [#allocation14]
    $region45: #{_lambda_.2} parent=1 // pred_fallthru
      _
    // Predicated region
    $region46: #{_lambda_.2} parent=1 // pred_check
      _
    $region47: #{_lambda_.2} parent=1 // pred_check_branch
      %130 = sbr.rel (0) target = $region49
    $region48: #{_lambda_.2} parent=1 // pred_region
      %s132 = ssub.s32 128, 128
      %133 = vsyncadd [#allocation14], %s132
      %s135 = sshll.u32 [#allocation15], 4
      %s136 = int_to_ptr.vmem [resolvable:$true] %s135
      %138 = dma.hbm_to_vmem [thread:$0]  %s11, 128, %s136, [#allocation14]
    $region49: #{_lambda_.2} parent=1 // pred_fallthru
      _
    // Predicated region
    $region50: #{_lambda_.2} parent=1 // pred_check
      _
    $region51: #{_lambda_.2} parent=1 // pred_check_branch
      %140 = sbr.rel (0) target = $region53
    $region52: #{_lambda_.2} parent=1 // pred_region
      _
    $region53: #{_lambda_.2} parent=1 // pred_fallthru
      _
    // Predicated region
    $region54: #{_lambda_.2} parent=1 // pred_check
      _
    $region55: #{_lambda_.2} parent=1 // pred_check_branch
      %142 = sbr.rel (0) target = $region57
    $region56: #{_lambda_.2} parent=1 // pred_region
      %s144 = ssub.s32 128, 128
      %145 = vsyncadd [#allocation17], %s144
      %s147 = sshll.u32 [#allocation16], 4
      %s148 = int_to_ptr.vmem [resolvable:$true] %s147
      %150 = dma.hbm_to_vmem [thread:$0]  %s13, 128, %s148, [#allocation17]
    $region57: #{_lambda_.2} parent=1 // pred_fallthru
      _
    // Predicated region
    $region58: #{_lambda_.2} parent=1 // pred_check
      _
    $region59: #{_lambda_.2} parent=1 // pred_check_branch
      %152 = sbr.rel (0) target = $region61
    $region60: #{_lambda_.2} parent=1 // pred_region
      %s154 = ssub.s32 128, 128
      %155 = vsyncadd [#allocation17], %s154
      %s157 = sshll.u32 [#allocation18], 4
      %s158 = int_to_ptr.vmem [resolvable:$true] %s157
      %160 = dma.hbm_to_vmem [thread:$0]  %s14, 128, %s158, [#allocation17]
    $region61: #{_lambda_.2} parent=1 // pred_fallthru
      _
    // Predicated region
    $region62: #{_lambda_.2} parent=1 // pred_check
      _
    $region63: #{_lambda_.2} parent=1 // pred_check_branch
      %162 = sbr.rel (0) target = $region65
    $region64: #{_lambda_.2} parent=1 // pred_region
      %s164 = ssub.s32 128, 128
      %165 = vsyncadd [#allocation20], %s164
      %s167 = sshll.u32 [#allocation19], 4
      %s168 = int_to_ptr.vmem [resolvable:$true] %s167
      %170 = dma.hbm_to_vmem [thread:$0]  %s15, 128, %s168, [#allocation20]
    $region65: #{_lambda_.2} parent=1 // pred_fallthru
      _
    // Predicated region
    $region66: #{_lambda_.2} parent=1 // pred_check
      _
    $region67: #{_lambda_.2} parent=1 // pred_check_branch
      %172 = sbr.rel (0) target = $region69
    $region68: #{_lambda_.2} parent=1 // pred_region
      %s174 = ssub.s32 128, 128
      %175 = vsyncadd [#allocation20], %s174
      %s177 = sshll.u32 [#allocation21], 4
      %s178 = int_to_ptr.vmem [resolvable:$true] %s177
      %180 = dma.hbm_to_vmem [thread:$0]  %s16, 128, %s178, [#allocation20]
    $region69: #{_lambda_.2} parent=1 // pred_fallthru
      _
    // Predicated region
    $region70: #{_lambda_.2} parent=1 // pred_check
      _
    $region71: #{_lambda_.2} parent=1 // pred_check_branch
      %182 = sbr.rel (0) target = $region73
    $region72: #{_lambda_.2} parent=1 // pred_region
      _
    $region73: #{_lambda_.2} parent=1 // pred_fallthru
      _
    // Predicated region
    $region74: #{_lambda_.2} parent=1 // pred_check
      _
    $region75: #{_lambda_.2} parent=1 // pred_check_branch
      %184 = sbr.rel (0) target = $region77
    $region76: #{_lambda_.2} parent=1 // pred_region
      _
    $region77: #{_lambda_.2} parent=1 // pred_fallthru
      _
    // Predicated region
    $region78: #{_lambda_.2} parent=1 // pred_check
      _
    $region79: #{_lambda_.2} parent=1 // pred_check_branch
      %186 = sbr.rel (0) target = $region81
    $region80: #{_lambda_.2} parent=1 // pred_region
      %187 = dma.done [#allocation3], 512
    $region81: #{_lambda_.2} parent=1 // pred_fallthru
      _
    // Predicated region
    $region82: #{_lambda_.2} parent=1 // pred_check
      _
    $region83: #{_lambda_.2} parent=1 // pred_check_branch
      %189 = sbr.rel (0) target = $region85
    $region84: #{_lambda_.2} parent=1 // pred_region
      %190 = dma.done [#allocation5], 256
    $region85: #{_lambda_.2} parent=1 // pred_fallthru
      _
    // Predicated region
    $region86: #{_lambda_.2} parent=1 // pred_check
      _
    $region87: #{_lambda_.2} parent=1 // pred_check_branch
      %192 = sbr.rel (0) target = $region89
    $region88: #{_lambda_.2} parent=1 // pred_region
      %193 = dma.done [#allocation5], 256
    $region89: #{_lambda_.2} parent=1 // pred_fallthru
      _
    // Predicated region
    $region90: #{_lambda_.2} parent=1 // pred_check
      _
    $region91: #{_lambda_.2} parent=1 // pred_check_branch
      %195 = sbr.rel (0) target = $region93
    $region92: #{_lambda_.2} parent=1 // pred_region
      %196 = dma.done [#allocation8], 256
    $region93: #{_lambda_.2} parent=1 // pred_fallthru
      _
    // Predicated region
    $region94: #{_lambda_.2} parent=1 // pred_check
      _
    $region95: #{_lambda_.2} parent=1 // pred_check_branch
      %198 = sbr.rel (0) target = $region97
    $region96: #{_lambda_.2} parent=1 // pred_region
      %199 = dma.done [#allocation8], 512
    $region97: #{_lambda_.2} parent=1 // pred_fallthru
      _
    // Predicated region
    $region98: #{_lambda_.2} parent=1 // pred_check
      _
    $region99: #{_lambda_.2} parent=1 // pred_check_branch
      %201 = sbr.rel (0) target = $region101
    $region100: #{_lambda_.2} parent=1 // pred_region
      %202 = dma.done [#allocation11], 128
    $region101: #{_lambda_.2} parent=1 // pred_fallthru
      _
    // Predicated region
    $region102: #{_lambda_.2} parent=1 // pred_check
      _
    $region103: #{_lambda_.2} parent=1 // pred_check_branch
      %204 = sbr.rel (0) target = $region105
    $region104: #{_lambda_.2} parent=1 // pred_region
      %205 = dma.done [#allocation11], 128
    $region105: #{_lambda_.2} parent=1 // pred_fallthru
      _
    // Predicated region
    $region106: #{_lambda_.2} parent=1 // pred_check
      _
    $region107: #{_lambda_.2} parent=1 // pred_check_branch
      %207 = sbr.rel (0) target = $region109
    $region108: #{_lambda_.2} parent=1 // pred_region
      %208 = dma.done [#allocation14], 128
    $region109: #{_lambda_.2} parent=1 // pred_fallthru
      _
    // Predicated region
    $region110: #{_lambda_.2} parent=1 // pred_check
      _
    $region111: #{_lambda_.2} parent=1 // pred_check_branch
      %210 = sbr.rel (0) target = $region113
    $region112: #{_lambda_.2} parent=1 // pred_region
      %211 = dma.done [#allocation14], 128
    $region113: #{_lambda_.2} parent=1 // pred_fallthru
      _
    // Predicated region
    $region114: #{_lambda_.2} parent=1 // pred_check
      _
    $region115: #{_lambda_.2} parent=1 // pred_check_branch
      %213 = sbr.rel (0) target = $region117
    $region116: #{_lambda_.2} parent=1 // pred_region
      %214 = dma.done [#allocation17], 128
    $region117: #{_lambda_.2} parent=1 // pred_fallthru
      _
    // Predicated region
    $region118: #{_lambda_.2} parent=1 // pred_check
      _
    $region119: #{_lambda_.2} parent=1 // pred_check_branch
      %216 = sbr.rel (0) target = $region121
    $region120: #{_lambda_.2} parent=1 // pred_region
      %217 = dma.done [#allocation17], 128
    $region121: #{_lambda_.2} parent=1 // pred_fallthru
      _
    // Predicated region
    $region122: #{_lambda_.2} parent=1 // pred_check
      _
    $region123: #{_lambda_.2} parent=1 // pred_check_branch
      %219 = sbr.rel (0) target = $region125
    $region124: #{_lambda_.2} parent=1 // pred_region
      %220 = dma.done [#allocation20], 128
    $region125: #{_lambda_.2} parent=1 // pred_fallthru
      _
    // Predicated region
    $region126: #{_lambda_.2} parent=1 // pred_check
      _
    $region127: #{_lambda_.2} parent=1 // pred_check_branch
      %222 = sbr.rel (0) target = $region129
    $region128: #{_lambda_.2} parent=1 // pred_region
      %223 = dma.done [#allocation20], 128
    $region129: #{_lambda_.2} parent=1 // pred_fallthru
      _
    %v224 = vld [vmem:[#allocation2] sm:$0xff]
    %v225 = vld [vmem:[#allocation2 + $0x8] sm:$0xff]
    %v226 = vld [vmem:[#allocation2 + $0x10] sm:$0xff]
    %v227 = vld [vmem:[#allocation2 + $0x18] sm:$0xff]
    %v228 = vld [vmem:[%s2] sm:$0x3]
    %v229 = vld [vmem:[#allocation10] sm:$0xff]
    %v230 = vld [vmem:[#allocation4] sm:$0xff]
    %v231 = vld [vmem:[#allocation4 + $0x8] sm:$0xff]
    %v232 = vlaneseq
    %v233 = vshrl.u32 %v232, 7
    %v234 = vsub.s32 0, %v233
    %v235 = vrot.slane %v229, %v234
    %vm236 = vcmask 130048
    %v238 = vsel %vm236, %v224, 0
    %v241 = vsel %vm236, %v225, 0
    %v244 = vsel %vm236, %v226, 0
    %v247 = vsel %vm236, %v227, 0
    %249 = vmatprep.subr.mxu0 0.0
    %250 = vmatpush1.msra.mxu0 0.0
    %251 = vmatprep.subr.mxu0 0.0
    %252 = vmatpush1.msra.mxu0 0.0
    %253 = vmatprep.subr.mxu0 0.0
    %254 = vmatpush1.msra.mxu0 0.0
    %255 = vmatprep.subr.mxu0 0.0
    %256 = vmatpush1.msra.mxu0 0.0
    %257 = vmatprep.subr.mxu0 0.0
    %258 = vmatpush1.msra.mxu0 0.0
    %259 = vmatprep.subr.mxu0 0.0
    %260 = vmatpush1.msra.mxu0 0.0
    %261 = vmatprep.subr.mxu0 0.0
    %262 = vmatpush1.msra.mxu0 0.0
    %263 = vmatprep.subr.mxu0 0.0
    %264 = vmatpush1.msra.mxu0 0.0
    %265 = vmatprep.subr.mxu0 0.0
    %266 = vmatpush1.msra.mxu0 0.0
    %267 = vmatprep.subr.mxu0 0.0
    %268 = vmatpush1.msra.mxu0 0.0
    %269 = vmatprep.subr.mxu0 0.0
    %270 = vmatpush1.msra.mxu0 0.0
    %271 = vmatprep.subr.mxu0 0.0
    %272 = vmatpush1.msra.mxu0 0.0
    %273 = vmatprep.subr.mxu0 0.0
    %274 = vmatpush1.msra.mxu0 0.0
    %275 = vmatprep.subr.mxu0 0.0
    %276 = vmatpush1.msra.mxu0 0.0
    %277 = vmatprep.subr.mxu0 0.0
    %278 = vmatpush1.msra.mxu0 %v231
    %279 = vmatprep.subr.mxu0 0.0
    %280 = vmatpush1.msra.mxu0 %v230
    %281 = vmatprep.subr.mxu0 0.0
    %282 = vmatpush2.msra.mxu0 0.0
    %283 = vmatprep.subr.mxu0 0.0
    %284 = vmatpush2.msra.mxu0 0.0
    %285 = vmatprep.subr.mxu0 0.0
    %286 = vmatpush2.msra.mxu0 0.0
    %287 = vmatprep.subr.mxu0 0.0
    %288 = vmatpush2.msra.mxu0 0.0
    %289 = vmatprep.subr.mxu0 0.0
    %290 = vmatpush2.msra.mxu0 0.0
    %291 = vmatprep.subr.mxu0 0.0
    %292 = vmatpush2.msra.mxu0 0.0
    %293 = vmatprep.subr.mxu0 0.0
    %294 = vmatpush2.msra.mxu0 0.0
    %295 = vmatprep.subr.mxu0 0.0
    %296 = vmatpush2.msra.mxu0 0.0
    %297 = vmatprep.subr.mxu0 0.0
    %298 = vmatpush2.msra.mxu0 0.0
    %299 = vmatprep.subr.mxu0 0.0
    %300 = vmatpush2.msra.mxu0 0.0
    %301 = vmatprep.subr.mxu0 0.0
    %302 = vmatpush2.msra.mxu0 0.0
    %303 = vmatprep.subr.mxu0 0.0
    %304 = vmatpush2.msra.mxu0 0.0
    %305 = vmatprep.subr.mxu0 0.0
    %306 = vmatpush2.msra.mxu0 0.0
    %307 = vmatprep.subr.mxu0 0.0
    %308 = vmatpush2.msra.mxu0 0.0
    %309 = vmatprep.subr.mxu0 0.0
    %310 = vmatpush2.msra.mxu0 0.0
    %311 = vmatprep.subr.mxu0 0.0
    %312 = vmatpush2.msra.mxu0 0.0
    %313 = vmatprep.mubr.f32.mxu0 0.0
    %314 = vmatmul.mubr.f32.gmra.mxu0 %v238
    %v315 = vpop.f32.mrf.mxu0
    %v316 = vadd.f32 %v235, %v315
    %v317 = vpop.f32.mrf.mxu0
    %318 = vmatprep.mubr.f32.mxu0 0.0
    %319 = vmatmul.mubr.f32.gmra.mxu0 %v241
    %v320 = vpop.f32.mrf.mxu0
    %v321 = vadd.f32 %v235, %v320
    %v322 = vpop.f32.mrf.mxu0
    %323 = vmatprep.mubr.f32.mxu0 0.0
    %324 = vmatmul.mubr.f32.gmra.mxu0 %v244
    %v325 = vpop.f32.mrf.mxu0
    %v326 = vadd.f32 %v235, %v325
    %v327 = vpop.f32.mrf.mxu0
    %328 = vmatprep.mubr.f32.mxu0 0.0
    %329 = vmatmul.mubr.f32.gmra.mxu0 %v247
    %v330 = vpop.f32.mrf.mxu0
    %v331 = vadd.f32 %v235, %v330
    %v332 = vpop.f32.mrf.mxu0
    %333 = vdwg.mxu0
    %v334 = vlaneseq
    %v335 = vand.u32 %v334, 127
    %vm336 = vcmp.ge.s32.totalorder %v335, 0
    %vm337 = vcmp.lt.s32.totalorder %v335, 8
    %vm338 = vmand %vm336, %vm337
    %v339 = vsel %vm338, 1, 0
    %v340 = vcvt.s32.f32 %v339
    %v341 = vmul.f32 %v316, %v340
    %v342 = vmul.f32 %v321, %v340
    %v343 = vlaneseq
    %v344 = vshrl.u32 %v343, 7
    %v345 = vsub.s32 0, %v344
    %v346 = vrot.slane %v228, %v345
    %349 = vrot.lane.b32.xlu0 %v316, 112
    %v350 = vpop.permute.xlu0 %349
    %351 = vrot.lane.b32.xlu0 %v321, 112
    %v352 = vpop.permute.xlu0 %351
    %v354 = vsel %vm236, %v341, 0
    %v357 = vsel %vm236, %v342, 0
    %v359 = vsel %vm236, %v350, 0
    %v361 = vsel %vm236, %v352, 0
    %363 = vmatprep.subr.mxu0 0.0
    %364 = vmatpush1.xpose.msra.mxu0 0.0
    %365 = vmatprep.subr.mxu0 0.0
    %366 = vmatpush1.xpose.msra.mxu0 0.0
    %367 = vmatprep.subr.mxu0 0.0
    %368 = vmatpush1.xpose.msra.mxu0 0.0
    %369 = vmatprep.subr.mxu0 0.0
    %370 = vmatpush1.xpose.msra.mxu0 0.0
    %371 = vmatprep.subr.mxu0 0.0
    %372 = vmatpush1.xpose.msra.mxu0 0.0
    %373 = vmatprep.subr.mxu0 0.0
    %374 = vmatpush1.xpose.msra.mxu0 0.0
    %375 = vmatprep.subr.mxu0 0.0
    %376 = vmatpush1.xpose.msra.mxu0 0.0
    %377 = vmatprep.subr.mxu0 0.0
    %378 = vmatpush1.xpose.msra.mxu0 0.0
    %379 = vmatprep.subr.mxu0 0.0
    %380 = vmatpush1.xpose.msra.mxu0 0.0
    %381 = vmatprep.subr.mxu0 0.0
    %382 = vmatpush1.xpose.msra.mxu0 0.0
    %383 = vmatprep.subr.mxu0 0.0
    %384 = vmatpush1.xpose.msra.mxu0 0.0
    %385 = vmatprep.subr.mxu0 0.0
    %386 = vmatpush1.xpose.msra.mxu0 0.0
    %387 = vmatprep.subr.mxu0 0.0
    %388 = vmatpush1.xpose.msra.mxu0 0.0
    %389 = vmatprep.subr.mxu0 0.0
    %390 = vmatpush1.xpose.msra.mxu0 0.0
    %391 = vmatprep.subr.mxu0 0.0
    %392 = vmatpush1.xpose.msra.mxu0 %v361
    %393 = vmatprep.subr.mxu0 0.0
    %394 = vmatpush1.xpose.msra.mxu0 %v359
    %395 = vmatprep.subr.mxu0 0.0
    %396 = vmatpush2.xpose.msra.mxu0 0.0
    %397 = vmatprep.subr.mxu0 0.0
    %398 = vmatpush2.xpose.msra.mxu0 0.0
    %399 = vmatprep.subr.mxu0 0.0
    %400 = vmatpush2.xpose.msra.mxu0 0.0
    %401 = vmatprep.subr.mxu0 0.0
    %402 = vmatpush2.xpose.msra.mxu0 0.0
    %403 = vmatprep.subr.mxu0 0.0
    %404 = vmatpush2.xpose.msra.mxu0 0.0
    %405 = vmatprep.subr.mxu0 0.0
    %406 = vmatpush2.xpose.msra.mxu0 0.0
    %407 = vmatprep.subr.mxu0 0.0
    %408 = vmatpush2.xpose.msra.mxu0 0.0
    %409 = vmatprep.subr.mxu0 0.0
    %410 = vmatpush2.xpose.msra.mxu0 0.0
    %411 = vmatprep.subr.mxu0 0.0
    %412 = vmatpush2.xpose.msra.mxu0 0.0
    %413 = vmatprep.subr.mxu0 0.0
    %414 = vmatpush2.xpose.msra.mxu0 0.0
    %415 = vmatprep.subr.mxu0 0.0
    %416 = vmatpush2.xpose.msra.mxu0 0.0
    %417 = vmatprep.subr.mxu0 0.0
    %418 = vmatpush2.xpose.msra.mxu0 0.0
    %419 = vmatprep.subr.mxu0 0.0
    %420 = vmatpush2.xpose.msra.mxu0 0.0
    %421 = vmatprep.subr.mxu0 0.0
    %422 = vmatpush2.xpose.msra.mxu0 0.0
    %423 = vmatprep.subr.mxu0 0.0
    %424 = vmatpush2.xpose.msra.mxu0 0.0
    %425 = vmatprep.subr.mxu0 0.0
    %426 = vmatpush2.xpose.msra.mxu0 0.0
    %427 = vmatprep.mubr.f32.mxu0 0.0
    %428 = vmatmul.mubr.f32.gmra.mxu0 %v354
    %v429 = vpop.f32.mrf.mxu0
    %v430 = vadd.f32 %v346, %v429
    %v431 = vpop.f32.mrf.mxu0
    %432 = vmatprep.mubr.f32.mxu0 0.0
    %433 = vmatmul.mubr.f32.gmra.mxu0 %v357
    %v434 = vpop.f32.mrf.mxu0
    %v435 = vadd.f32 %v346, %v434
    %v436 = vpop.f32.mrf.mxu0
    %437 = vdwg.mxu0
    %v438 = vsel %vm236, %v430, -inf
    %439 = vmax.xlane.f32.xlu0 %v438
    %v440 = vpop.xlane.xlu0 %439
    %v441 = vsel %vm236, %v435, -inf
    %442 = vmax.xlane.f32.xlu0 %v441
    %v443 = vpop.xlane.xlu0 %442
    %v444 = vsub.f32 %v430, %v440
    %v445 = vsub.f32 %v435, %v443
    %v446 = vmul.f32 %v444, 1.442695
    %v447 = vpow.pop %v446
    %v448 = vmul.f32 %v445, 1.442695
    %v449 = vpow.pop %v448
    %v450 = vsel %vm236, %v447, 0.0
    %451 = vadd.xlane.f32.xlu0 %v450
    %v452 = vpop.xlane.xlu0 %451
    %v453 = vsel %vm236, %v449, 0.0
    %454 = vadd.xlane.f32.xlu0 %v453
    %v455 = vpop.xlane.xlu0 %454
    %v456 = vrcp.pop %v452
    %v457 = vrcp.pop %v455
    %v458 = vmul.f32 %v447, %v456
    %v459 = vmul.f32 %v449, %v457
    %460 = vrot.lane.b32.xlu0 %v316, 96
    %v461 = vpop.permute.xlu0 %460
    %462 = vrot.lane.b32.xlu0 %v321, 96
    %v463 = vpop.permute.xlu0 %462
    %v467 = vsel %vm236, %v458, 0
    %v470 = vsel %vm236, %v459, 0
    %472 = vmatprep.subr.mxu0 0.0
    %473 = vmatpush1.msra.mxu0 0.0
    %474 = vmatprep.subr.mxu0 0.0
    %475 = vmatpush1.msra.mxu0 0.0
    %476 = vmatprep.subr.mxu0 0.0
    %477 = vmatpush1.msra.mxu0 0.0
    %478 = vmatprep.subr.mxu0 0.0
    %479 = vmatpush1.msra.mxu0 0.0
    %480 = vmatprep.subr.mxu0 0.0
    %481 = vmatpush1.msra.mxu0 0.0
    %482 = vmatprep.subr.mxu0 0.0
    %483 = vmatpush1.msra.mxu0 0.0
    %484 = vmatprep.subr.mxu0 0.0
    %485 = vmatpush1.msra.mxu0 0.0
    %486 = vmatprep.subr.mxu0 0.0
    %487 = vmatpush1.msra.mxu0 0.0
    %488 = vmatprep.subr.mxu0 0.0
    %489 = vmatpush1.msra.mxu0 0.0
    %490 = vmatprep.subr.mxu0 0.0
    %491 = vmatpush1.msra.mxu0 0.0
    %492 = vmatprep.subr.mxu0 0.0
    %493 = vmatpush1.msra.mxu0 0.0
    %494 = vmatprep.subr.mxu0 0.0
    %495 = vmatpush1.msra.mxu0 0.0
    %496 = vmatprep.subr.mxu0 0.0
    %497 = vmatpush1.msra.mxu0 0.0
    %498 = vmatprep.subr.mxu0 0.0
    %499 = vmatpush1.msra.mxu0 0.0
    %500 = vmatprep.subr.mxu0 0.0
    %501 = vmatpush1.msra.mxu0 %v463
    %502 = vmatprep.subr.mxu0 0.0
    %503 = vmatpush1.msra.mxu0 %v461
    %504 = vmatprep.subr.mxu0 0.0
    %505 = vmatpush2.msra.mxu0 0.0
    %506 = vmatprep.subr.mxu0 0.0
    %507 = vmatpush2.msra.mxu0 0.0
    %508 = vmatprep.subr.mxu0 0.0
    %509 = vmatpush2.msra.mxu0 0.0
    %510 = vmatprep.subr.mxu0 0.0
    %511 = vmatpush2.msra.mxu0 0.0
    %512 = vmatprep.subr.mxu0 0.0
    %513 = vmatpush2.msra.mxu0 0.0
    %514 = vmatprep.subr.mxu0 0.0
    %515 = vmatpush2.msra.mxu0 0.0
    %516 = vmatprep.subr.mxu0 0.0
    %517 = vmatpush2.msra.mxu0 0.0
    %518 = vmatprep.subr.mxu0 0.0
    %519 = vmatpush2.msra.mxu0 0.0
    %520 = vmatprep.subr.mxu0 0.0
    %521 = vmatpush2.msra.mxu0 0.0
    %522 = vmatprep.subr.mxu0 0.0
    %523 = vmatpush2.msra.mxu0 0.0
    %524 = vmatprep.subr.mxu0 0.0
    %525 = vmatpush2.msra.mxu0 0.0
    %526 = vmatprep.subr.mxu0 0.0
    %527 = vmatpush2.msra.mxu0 0.0
    %528 = vmatprep.subr.mxu0 0.0
    %529 = vmatpush2.msra.mxu0 0.0
    %530 = vmatprep.subr.mxu0 0.0
    %531 = vmatpush2.msra.mxu0 0.0
    %532 = vmatprep.subr.mxu0 0.0
    %533 = vmatpush2.msra.mxu0 0.0
    %534 = vmatprep.subr.mxu0 0.0
    %535 = vmatpush2.msra.mxu0 0.0
    %536 = vmatprep.mubr.f32.mxu0 0.0
    %537 = vmatmul.mubr.f32.gmra.mxu0 %v467
    %v538 = vpop.f32.mrf.mxu0
    %v539 = vadd.f32 0.0, %v538
    %v540 = vpop.f32.mrf.mxu0
    %541 = vmatprep.mubr.f32.mxu0 0.0
    %542 = vmatmul.mubr.f32.gmra.mxu0 %v470
    %v543 = vpop.f32.mrf.mxu0
    %v544 = vadd.f32 0.0, %v543
    %v545 = vpop.f32.mrf.mxu0
    %546 = vdwg.mxu0
    %v547 = vmul.f32 %v539, %v340
    %v548 = vmul.f32 %v544, %v340
    %v549 = vadd.f32 %v547, 0.0
    %v550 = vadd.f32 %v548, 0.0
    %vm551 = vcmp.ge.s32.totalorder %v335, 8
    %vm552 = vcmp.lt.s32.totalorder %v335, 16
    %vm553 = vmand %vm551, %vm552
    %v554 = vsel %vm553, 1, 0
    %v555 = vcvt.s32.f32 %v554
    %v556 = vmul.f32 %v316, %v555
    %v557 = vmul.f32 %v321, %v555
    %v559 = vsel %vm236, %v556, 0
    %v562 = vsel %vm236, %v557, 0
    %564 = vmatprep.subr.mxu0 0.0
    %565 = vmatpush1.xpose.msra.mxu0 0.0
    %566 = vmatprep.subr.mxu0 0.0
    %567 = vmatpush1.xpose.msra.mxu0 0.0
    %568 = vmatprep.subr.mxu0 0.0
    %569 = vmatpush1.xpose.msra.mxu0 0.0
    %570 = vmatprep.subr.mxu0 0.0
    %571 = vmatpush1.xpose.msra.mxu0 0.0
    %572 = vmatprep.subr.mxu0 0.0
    %573 = vmatpush1.xpose.msra.mxu0 0.0
    %574 = vmatprep.subr.mxu0 0.0
    %575 = vmatpush1.xpose.msra.mxu0 0.0
    %576 = vmatprep.subr.mxu0 0.0
    %577 = vmatpush1.xpose.msra.mxu0 0.0
    %578 = vmatprep.subr.mxu0 0.0
    %579 = vmatpush1.xpose.msra.mxu0 0.0
    %580 = vmatprep.subr.mxu0 0.0
    %581 = vmatpush1.xpose.msra.mxu0 0.0
    %582 = vmatprep.subr.mxu0 0.0
    %583 = vmatpush1.xpose.msra.mxu0 0.0
    %584 = vmatprep.subr.mxu0 0.0
    %585 = vmatpush1.xpose.msra.mxu0 0.0
    %586 = vmatprep.subr.mxu0 0.0
    %587 = vmatpush1.xpose.msra.mxu0 0.0
    %588 = vmatprep.subr.mxu0 0.0
    %589 = vmatpush1.xpose.msra.mxu0 0.0
    %590 = vmatprep.subr.mxu0 0.0
    %591 = vmatpush1.xpose.msra.mxu0 0.0
    %592 = vmatprep.subr.mxu0 0.0
    %593 = vmatpush1.xpose.msra.mxu0 %v361
    %594 = vmatprep.subr.mxu0 0.0
    %595 = vmatpush1.xpose.msra.mxu0 %v359
    %596 = vmatprep.subr.mxu0 0.0
    %597 = vmatpush2.xpose.msra.mxu0 0.0
    %598 = vmatprep.subr.mxu0 0.0
    %599 = vmatpush2.xpose.msra.mxu0 0.0
    %600 = vmatprep.subr.mxu0 0.0
    %601 = vmatpush2.xpose.msra.mxu0 0.0
    %602 = vmatprep.subr.mxu0 0.0
    %603 = vmatpush2.xpose.msra.mxu0 0.0
    %604 = vmatprep.subr.mxu0 0.0
    %605 = vmatpush2.xpose.msra.mxu0 0.0
    %606 = vmatprep.subr.mxu0 0.0
    %607 = vmatpush2.xpose.msra.mxu0 0.0
    %608 = vmatprep.subr.mxu0 0.0
    %609 = vmatpush2.xpose.msra.mxu0 0.0
    %610 = vmatprep.subr.mxu0 0.0
    %611 = vmatpush2.xpose.msra.mxu0 0.0
    %612 = vmatprep.subr.mxu0 0.0
    %613 = vmatpush2.xpose.msra.mxu0 0.0
    %614 = vmatprep.subr.mxu0 0.0
    %615 = vmatpush2.xpose.msra.mxu0 0.0
    %616 = vmatprep.subr.mxu0 0.0
    %617 = vmatpush2.xpose.msra.mxu0 0.0
    %618 = vmatprep.subr.mxu0 0.0
    %619 = vmatpush2.xpose.msra.mxu0 0.0
    %620 = vmatprep.subr.mxu0 0.0
    %621 = vmatpush2.xpose.msra.mxu0 0.0
    %622 = vmatprep.subr.mxu0 0.0
    %623 = vmatpush2.xpose.msra.mxu0 0.0
    %624 = vmatprep.subr.mxu0 0.0
    %625 = vmatpush2.xpose.msra.mxu0 0.0
    %626 = vmatprep.subr.mxu0 0.0
    %627 = vmatpush2.xpose.msra.mxu0 0.0
    %628 = vmatprep.mubr.f32.mxu0 0.0
    %629 = vmatmul.mubr.f32.gmra.mxu0 %v559
    %v630 = vpop.f32.mrf.mxu0
    %v631 = vadd.f32 %v346, %v630
    %v632 = vpop.f32.mrf.mxu0
    %633 = vmatprep.mubr.f32.mxu0 0.0
    %634 = vmatmul.mubr.f32.gmra.mxu0 %v562
    %v635 = vpop.f32.mrf.mxu0
    %v636 = vadd.f32 %v346, %v635
    %v637 = vpop.f32.mrf.mxu0
    %638 = vdwg.mxu0
    %v639 = vsel %vm236, %v631, -inf
    %640 = vmax.xlane.f32.xlu0 %v639
    %v641 = vpop.xlane.xlu0 %640
    %v642 = vsel %vm236, %v636, -inf
    %643 = vmax.xlane.f32.xlu0 %v642
    %v644 = vpop.xlane.xlu0 %643
    %v645 = vsub.f32 %v631, %v641
    %v646 = vsub.f32 %v636, %v644
    %v647 = vmul.f32 %v645, 1.442695
    %v648 = vpow.pop %v647
    %v649 = vmul.f32 %v646, 1.442695
    %v650 = vpow.pop %v649
    %v651 = vsel %vm236, %v648, 0.0
    %652 = vadd.xlane.f32.xlu0 %v651
    %v653 = vpop.xlane.xlu0 %652
    %v654 = vsel %vm236, %v650, 0.0
    %655 = vadd.xlane.f32.xlu0 %v654
    %v656 = vpop.xlane.xlu0 %655
    %v657 = vrcp.pop %v653
    %v658 = vrcp.pop %v656
    %v659 = vmul.f32 %v648, %v657
    %v660 = vmul.f32 %v650, %v658
    %v662 = vsel %vm236, %v659, 0
    %v665 = vsel %vm236, %v660, 0
    %667 = vmatprep.subr.mxu0 0.0
    %668 = vmatpush1.msra.mxu0 0.0
    %669 = vmatprep.subr.mxu0 0.0
    %670 = vmatpush1.msra.mxu0 0.0
    %671 = vmatprep.subr.mxu0 0.0
    %672 = vmatpush1.msra.mxu0 0.0
    %673 = vmatprep.subr.mxu0 0.0
    %674 = vmatpush1.msra.mxu0 0.0
    %675 = vmatprep.subr.mxu0 0.0
    %676 = vmatpush1.msra.mxu0 0.0
    %677 = vmatprep.subr.mxu0 0.0
    %678 = vmatpush1.msra.mxu0 0.0
    %679 = vmatprep.subr.mxu0 0.0
    %680 = vmatpush1.msra.mxu0 0.0
    %681 = vmatprep.subr.mxu0 0.0
    %682 = vmatpush1.msra.mxu0 0.0
    %683 = vmatprep.subr.mxu0 0.0
    %684 = vmatpush1.msra.mxu0 0.0
    %685 = vmatprep.subr.mxu0 0.0
    %686 = vmatpush1.msra.mxu0 0.0
    %687 = vmatprep.subr.mxu0 0.0
    %688 = vmatpush1.msra.mxu0 0.0
    %689 = vmatprep.subr.mxu0 0.0
    %690 = vmatpush1.msra.mxu0 0.0
    %691 = vmatprep.subr.mxu0 0.0
    %692 = vmatpush1.msra.mxu0 0.0
    %693 = vmatprep.subr.mxu0 0.0
    %694 = vmatpush1.msra.mxu0 0.0
    %695 = vmatprep.subr.mxu0 0.0
    %696 = vmatpush1.msra.mxu0 %v463
    %697 = vmatprep.subr.mxu0 0.0
    %698 = vmatpush1.msra.mxu0 %v461
    %699 = vmatprep.subr.mxu0 0.0
    %700 = vmatpush2.msra.mxu0 0.0
    %701 = vmatprep.subr.mxu0 0.0
    %702 = vmatpush2.msra.mxu0 0.0
    %703 = vmatprep.subr.mxu0 0.0
    %704 = vmatpush2.msra.mxu0 0.0
    %705 = vmatprep.subr.mxu0 0.0
    %706 = vmatpush2.msra.mxu0 0.0
    %707 = vmatprep.subr.mxu0 0.0
    %708 = vmatpush2.msra.mxu0 0.0
    %709 = vmatprep.subr.mxu0 0.0
    %710 = vmatpush2.msra.mxu0 0.0
    %711 = vmatprep.subr.mxu0 0.0
    %712 = vmatpush2.msra.mxu0 0.0
    %713 = vmatprep.subr.mxu0 0.0
    %714 = vmatpush2.msra.mxu0 0.0
    %715 = vmatprep.subr.mxu0 0.0
    %716 = vmatpush2.msra.mxu0 0.0
    %717 = vmatprep.subr.mxu0 0.0
    %718 = vmatpush2.msra.mxu0 0.0
    %719 = vmatprep.subr.mxu0 0.0
    %720 = vmatpush2.msra.mxu0 0.0
    %721 = vmatprep.subr.mxu0 0.0
    %722 = vmatpush2.msra.mxu0 0.0
    %723 = vmatprep.subr.mxu0 0.0
    %724 = vmatpush2.msra.mxu0 0.0
    %725 = vmatprep.subr.mxu0 0.0
    %726 = vmatpush2.msra.mxu0 0.0
    %727 = vmatprep.subr.mxu0 0.0
    %728 = vmatpush2.msra.mxu0 0.0
    %729 = vmatprep.subr.mxu0 0.0
    %730 = vmatpush2.msra.mxu0 0.0
    %731 = vmatprep.mubr.f32.mxu0 0.0
    %732 = vmatmul.mubr.f32.gmra.mxu0 %v662
    %v733 = vpop.f32.mrf.mxu0
    %v734 = vadd.f32 0.0, %v733
    %v735 = vpop.f32.mrf.mxu0
    %736 = vmatprep.mubr.f32.mxu0 0.0
    %737 = vmatmul.mubr.f32.gmra.mxu0 %v665
    %v738 = vpop.f32.mrf.mxu0
    %v739 = vadd.f32 0.0, %v738
    %v740 = vpop.f32.mrf.mxu0
    %741 = vdwg.mxu0
    %v742 = vmul.f32 %v734, %v555
    %v743 = vmul.f32 %v739, %v555
    %v744 = vadd.f32 %v549, %v742
    %v745 = vadd.f32 %v550, %v743
    %v746 = vmul.f32 %v326, %v340
    %v747 = vmul.f32 %v331, %v340
    %v748 = vlaneseq
    %v749 = vshrl.u32 %v748, 7
    %v750 = vsub.s32 1, %v749
    %v751 = vrot.slane %v228, %v750
    %754 = vrot.lane.b32.xlu0 %v326, 112
    %v755 = vpop.permute.xlu0 %754
    %756 = vrot.lane.b32.xlu0 %v331, 112
    %v757 = vpop.permute.xlu0 %756
    %v759 = vsel %vm236, %v746, 0
    %v762 = vsel %vm236, %v747, 0
    %v764 = vsel %vm236, %v755, 0
    %v766 = vsel %vm236, %v757, 0
    %768 = vmatprep.subr.mxu0 0.0
    %769 = vmatpush1.xpose.msra.mxu0 0.0
    %770 = vmatprep.subr.mxu0 0.0
    %771 = vmatpush1.xpose.msra.mxu0 0.0
    %772 = vmatprep.subr.mxu0 0.0
    %773 = vmatpush1.xpose.msra.mxu0 0.0
    %774 = vmatprep.subr.mxu0 0.0
    %775 = vmatpush1.xpose.msra.mxu0 0.0
    %776 = vmatprep.subr.mxu0 0.0
    %777 = vmatpush1.xpose.msra.mxu0 0.0
    %778 = vmatprep.subr.mxu0 0.0
    %779 = vmatpush1.xpose.msra.mxu0 0.0
    %780 = vmatprep.subr.mxu0 0.0
    %781 = vmatpush1.xpose.msra.mxu0 0.0
    %782 = vmatprep.subr.mxu0 0.0
    %783 = vmatpush1.xpose.msra.mxu0 0.0
    %784 = vmatprep.subr.mxu0 0.0
    %785 = vmatpush1.xpose.msra.mxu0 0.0
    %786 = vmatprep.subr.mxu0 0.0
    %787 = vmatpush1.xpose.msra.mxu0 0.0
    %788 = vmatprep.subr.mxu0 0.0
    %789 = vmatpush1.xpose.msra.mxu0 0.0
    %790 = vmatprep.subr.mxu0 0.0
    %791 = vmatpush1.xpose.msra.mxu0 0.0
    %792 = vmatprep.subr.mxu0 0.0
    %793 = vmatpush1.xpose.msra.mxu0 0.0
    %794 = vmatprep.subr.mxu0 0.0
    %795 = vmatpush1.xpose.msra.mxu0 0.0
    %796 = vmatprep.subr.mxu0 0.0
    %797 = vmatpush1.xpose.msra.mxu0 %v766
    %798 = vmatprep.subr.mxu0 0.0
    %799 = vmatpush1.xpose.msra.mxu0 %v764
    %800 = vmatprep.subr.mxu0 0.0
    %801 = vmatpush2.xpose.msra.mxu0 0.0
    %802 = vmatprep.subr.mxu0 0.0
    %803 = vmatpush2.xpose.msra.mxu0 0.0
    %804 = vmatprep.subr.mxu0 0.0
    %805 = vmatpush2.xpose.msra.mxu0 0.0
    %806 = vmatprep.subr.mxu0 0.0
    %807 = vmatpush2.xpose.msra.mxu0 0.0
    %808 = vmatprep.subr.mxu0 0.0
    %809 = vmatpush2.xpose.msra.mxu0 0.0
    %810 = vmatprep.subr.mxu0 0.0
    %811 = vmatpush2.xpose.msra.mxu0 0.0
    %812 = vmatprep.subr.mxu0 0.0
    %813 = vmatpush2.xpose.msra.mxu0 0.0
    %814 = vmatprep.subr.mxu0 0.0
    %815 = vmatpush2.xpose.msra.mxu0 0.0
    %816 = vmatprep.subr.mxu0 0.0
    %817 = vmatpush2.xpose.msra.mxu0 0.0
    %818 = vmatprep.subr.mxu0 0.0
    %819 = vmatpush2.xpose.msra.mxu0 0.0
    %820 = vmatprep.subr.mxu0 0.0
    %821 = vmatpush2.xpose.msra.mxu0 0.0
    %822 = vmatprep.subr.mxu0 0.0
    %823 = vmatpush2.xpose.msra.mxu0 0.0
    %824 = vmatprep.subr.mxu0 0.0
    %825 = vmatpush2.xpose.msra.mxu0 0.0
    %826 = vmatprep.subr.mxu0 0.0
    %827 = vmatpush2.xpose.msra.mxu0 0.0
    %828 = vmatprep.subr.mxu0 0.0
    %829 = vmatpush2.xpose.msra.mxu0 0.0
    %830 = vmatprep.subr.mxu0 0.0
    %831 = vmatpush2.xpose.msra.mxu0 0.0
    %832 = vmatprep.mubr.f32.mxu0 0.0
    %833 = vmatmul.mubr.f32.gmra.mxu0 %v759
    %v834 = vpop.f32.mrf.mxu0
    %v835 = vadd.f32 %v751, %v834
    %v836 = vpop.f32.mrf.mxu0
    %837 = vmatprep.mubr.f32.mxu0 0.0
    %838 = vmatmul.mubr.f32.gmra.mxu0 %v762
    %v839 = vpop.f32.mrf.mxu0
    %v840 = vadd.f32 %v751, %v839
    %v841 = vpop.f32.mrf.mxu0
    %842 = vdwg.mxu0
    %v843 = vsel %vm236, %v835, -inf
    %844 = vmax.xlane.f32.xlu0 %v843
    %v845 = vpop.xlane.xlu0 %844
    %v846 = vsel %vm236, %v840, -inf
    %847 = vmax.xlane.f32.xlu0 %v846
    %v848 = vpop.xlane.xlu0 %847
    %v849 = vsub.f32 %v835, %v845
    %v850 = vsub.f32 %v840, %v848
    %v851 = vmul.f32 %v849, 1.442695
    %v852 = vpow.pop %v851
    %v853 = vmul.f32 %v850, 1.442695
    %v854 = vpow.pop %v853
    %v855 = vsel %vm236, %v852, 0.0
    %856 = vadd.xlane.f32.xlu0 %v855
    %v857 = vpop.xlane.xlu0 %856
    %v858 = vsel %vm236, %v854, 0.0
    %859 = vadd.xlane.f32.xlu0 %v858
    %v860 = vpop.xlane.xlu0 %859
    %v861 = vrcp.pop %v857
    %v862 = vrcp.pop %v860
    %v863 = vmul.f32 %v852, %v861
    %v864 = vmul.f32 %v854, %v862
    %865 = vrot.lane.b32.xlu0 %v326, 96
    %v866 = vpop.permute.xlu0 %865
    %867 = vrot.lane.b32.xlu0 %v331, 96
    %v868 = vpop.permute.xlu0 %867
    %v872 = vsel %vm236, %v863, 0
    %v875 = vsel %vm236, %v864, 0
    %877 = vmatprep.subr.mxu0 0.0
    %878 = vmatpush1.msra.mxu0 0.0
    %879 = vmatprep.subr.mxu0 0.0
    %880 = vmatpush1.msra.mxu0 0.0
    %881 = vmatprep.subr.mxu0 0.0
    %882 = vmatpush1.msra.mxu0 0.0
    %883 = vmatprep.subr.mxu0 0.0
    %884 = vmatpush1.msra.mxu0 0.0
    %885 = vmatprep.subr.mxu0 0.0
    %886 = vmatpush1.msra.mxu0 0.0
    %887 = vmatprep.subr.mxu0 0.0
    %888 = vmatpush1.msra.mxu0 0.0
    %889 = vmatprep.subr.mxu0 0.0
    %890 = vmatpush1.msra.mxu0 0.0
    %891 = vmatprep.subr.mxu0 0.0
    %892 = vmatpush1.msra.mxu0 0.0
    %893 = vmatprep.subr.mxu0 0.0
    %894 = vmatpush1.msra.mxu0 0.0
    %895 = vmatprep.subr.mxu0 0.0
    %896 = vmatpush1.msra.mxu0 0.0
    %897 = vmatprep.subr.mxu0 0.0
    %898 = vmatpush1.msra.mxu0 0.0
    %899 = vmatprep.subr.mxu0 0.0
    %900 = vmatpush1.msra.mxu0 0.0
    %901 = vmatprep.subr.mxu0 0.0
    %902 = vmatpush1.msra.mxu0 0.0
    %903 = vmatprep.subr.mxu0 0.0
    %904 = vmatpush1.msra.mxu0 0.0
    %905 = vmatprep.subr.mxu0 0.0
    %906 = vmatpush1.msra.mxu0 %v868
    %907 = vmatprep.subr.mxu0 0.0
    %908 = vmatpush1.msra.mxu0 %v866
    %909 = vmatprep.subr.mxu0 0.0
    %910 = vmatpush2.msra.mxu0 0.0
    %911 = vmatprep.subr.mxu0 0.0
    %912 = vmatpush2.msra.mxu0 0.0
    %913 = vmatprep.subr.mxu0 0.0
    %914 = vmatpush2.msra.mxu0 0.0
    %915 = vmatprep.subr.mxu0 0.0
    %916 = vmatpush2.msra.mxu0 0.0
    %917 = vmatprep.subr.mxu0 0.0
    %918 = vmatpush2.msra.mxu0 0.0
    %919 = vmatprep.subr.mxu0 0.0
    %920 = vmatpush2.msra.mxu0 0.0
    %921 = vmatprep.subr.mxu0 0.0
    %922 = vmatpush2.msra.mxu0 0.0
    %923 = vmatprep.subr.mxu0 0.0
    %924 = vmatpush2.msra.mxu0 0.0
    %925 = vmatprep.subr.mxu0 0.0
    %926 = vmatpush2.msra.mxu0 0.0
    %927 = vmatprep.subr.mxu0 0.0
    %928 = vmatpush2.msra.mxu0 0.0
    %929 = vmatprep.subr.mxu0 0.0
    %930 = vmatpush2.msra.mxu0 0.0
    %931 = vmatprep.subr.mxu0 0.0
    %932 = vmatpush2.msra.mxu0 0.0
    %933 = vmatprep.subr.mxu0 0.0
    %934 = vmatpush2.msra.mxu0 0.0
    %935 = vmatprep.subr.mxu0 0.0
    %936 = vmatpush2.msra.mxu0 0.0
    %937 = vmatprep.subr.mxu0 0.0
    %938 = vmatpush2.msra.mxu0 0.0
    %939 = vmatprep.subr.mxu0 0.0
    %940 = vmatpush2.msra.mxu0 0.0
    %941 = vmatprep.mubr.f32.mxu0 0.0
    %942 = vmatmul.mubr.f32.gmra.mxu0 %v872
    %v943 = vpop.f32.mrf.mxu0
    %v944 = vadd.f32 0.0, %v943
    %v945 = vpop.f32.mrf.mxu0
    %946 = vmatprep.mubr.f32.mxu0 0.0
    %947 = vmatmul.mubr.f32.gmra.mxu0 %v875
    %v948 = vpop.f32.mrf.mxu0
    %v949 = vadd.f32 0.0, %v948
    %v950 = vpop.f32.mrf.mxu0
    %951 = vdwg.mxu0
    %v952 = vmul.f32 %v944, %v340
    %v953 = vmul.f32 %v949, %v340
    %v954 = vadd.f32 %v952, 0.0
    %v955 = vadd.f32 %v953, 0.0
    %v956 = vmul.f32 %v326, %v555
    %v957 = vmul.f32 %v331, %v555
    %v959 = vsel %vm236, %v956, 0
    %v962 = vsel %vm236, %v957, 0
    %964 = vmatprep.subr.mxu0 0.0
    %965 = vmatpush1.xpose.msra.mxu0 0.0
    %966 = vmatprep.subr.mxu0 0.0
    %967 = vmatpush1.xpose.msra.mxu0 0.0
    %968 = vmatprep.subr.mxu0 0.0
    %969 = vmatpush1.xpose.msra.mxu0 0.0
    %970 = vmatprep.subr.mxu0 0.0
    %971 = vmatpush1.xpose.msra.mxu0 0.0
    %972 = vmatprep.subr.mxu0 0.0
    %973 = vmatpush1.xpose.msra.mxu0 0.0
    %974 = vmatprep.subr.mxu0 0.0
    %975 = vmatpush1.xpose.msra.mxu0 0.0
    %976 = vmatprep.subr.mxu0 0.0
    %977 = vmatpush1.xpose.msra.mxu0 0.0
    %978 = vmatprep.subr.mxu0 0.0
    %979 = vmatpush1.xpose.msra.mxu0 0.0
    %980 = vmatprep.subr.mxu0 0.0
    %981 = vmatpush1.xpose.msra.mxu0 0.0
    %982 = vmatprep.subr.mxu0 0.0
    %983 = vmatpush1.xpose.msra.mxu0 0.0
    %984 = vmatprep.subr.mxu0 0.0
    %985 = vmatpush1.xpose.msra.mxu0 0.0
    %986 = vmatprep.subr.mxu0 0.0
    %987 = vmatpush1.xpose.msra.mxu0 0.0
    %988 = vmatprep.subr.mxu0 0.0
    %989 = vmatpush1.xpose.msra.mxu0 0.0
    %990 = vmatprep.subr.mxu0 0.0
    %991 = vmatpush1.xpose.msra.mxu0 0.0
    %992 = vmatprep.subr.mxu0 0.0
    %993 = vmatpush1.xpose.msra.mxu0 %v766
    %994 = vmatprep.subr.mxu0 0.0
    %995 = vmatpush1.xpose.msra.mxu0 %v764
    %996 = vmatprep.subr.mxu0 0.0
    %997 = vmatpush2.xpose.msra.mxu0 0.0
    %998 = vmatprep.subr.mxu0 0.0
    %999 = vmatpush2.xpose.msra.mxu0 0.0
    %1000 = vmatprep.subr.mxu0 0.0
    %1001 = vmatpush2.xpose.msra.mxu0 0.0
    %1002 = vmatprep.subr.mxu0 0.0
    %1003 = vmatpush2.xpose.msra.mxu0 0.0
    %1004 = vmatprep.subr.mxu0 0.0
    %1005 = vmatpush2.xpose.msra.mxu0 0.0
    %1006 = vmatprep.subr.mxu0 0.0
    %1007 = vmatpush2.xpose.msra.mxu0 0.0
    %1008 = vmatprep.subr.mxu0 0.0
    %1009 = vmatpush2.xpose.msra.mxu0 0.0
    %1010 = vmatprep.subr.mxu0 0.0
    %1011 = vmatpush2.xpose.msra.mxu0 0.0
    %1012 = vmatprep.subr.mxu0 0.0
    %1013 = vmatpush2.xpose.msra.mxu0 0.0
    %1014 = vmatprep.subr.mxu0 0.0
    %1015 = vmatpush2.xpose.msra.mxu0 0.0
    %1016 = vmatprep.subr.mxu0 0.0
    %1017 = vmatpush2.xpose.msra.mxu0 0.0
    %1018 = vmatprep.subr.mxu0 0.0
    %1019 = vmatpush2.xpose.msra.mxu0 0.0
    %1020 = vmatprep.subr.mxu0 0.0
    %1021 = vmatpush2.xpose.msra.mxu0 0.0
    %1022 = vmatprep.subr.mxu0 0.0
    %1023 = vmatpush2.xpose.msra.mxu0 0.0
    %1024 = vmatprep.subr.mxu0 0.0
    %1025 = vmatpush2.xpose.msra.mxu0 0.0
    %1026 = vmatprep.subr.mxu0 0.0
    %1027 = vmatpush2.xpose.msra.mxu0 0.0
    %1028 = vmatprep.mubr.f32.mxu0 0.0
    %1029 = vmatmul.mubr.f32.gmra.mxu0 %v959
    %v1030 = vpop.f32.mrf.mxu0
    %v1031 = vadd.f32 %v751, %v1030
    %v1032 = vpop.f32.mrf.mxu0
    %1033 = vmatprep.mubr.f32.mxu0 0.0
    %1034 = vmatmul.mubr.f32.gmra.mxu0 %v962
    %v1035 = vpop.f32.mrf.mxu0
    %v1036 = vadd.f32 %v751, %v1035
    %v1037 = vpop.f32.mrf.mxu0
    %1038 = vdwg.mxu0
    %v1039 = vsel %vm236, %v1031, -inf
    %1040 = vmax.xlane.f32.xlu0 %v1039
    %v1041 = vpop.xlane.xlu0 %1040
    %v1042 = vsel %vm236, %v1036, -inf
    %1043 = vmax.xlane.f32.xlu0 %v1042
    %v1044 = vpop.xlane.xlu0 %1043
    %v1045 = vsub.f32 %v1031, %v1041
    %v1046 = vsub.f32 %v1036, %v1044
    %v1047 = vmul.f32 %v1045, 1.442695
    %v1048 = vpow.pop %v1047
    %v1049 = vmul.f32 %v1046, 1.442695
    %v1050 = vpow.pop %v1049
    %v1051 = vsel %vm236, %v1048, 0.0
    %1052 = vadd.xlane.f32.xlu0 %v1051
    %v1053 = vpop.xlane.xlu0 %1052
    %v1054 = vsel %vm236, %v1050, 0.0
    %1055 = vadd.xlane.f32.xlu0 %v1054
    %v1056 = vpop.xlane.xlu0 %1055
    %v1057 = vrcp.pop %v1053
    %v1058 = vrcp.pop %v1056
    %v1059 = vmul.f32 %v1048, %v1057
    %v1060 = vmul.f32 %v1050, %v1058
    %v1062 = vsel %vm236, %v1059, 0
    %v1065 = vsel %vm236, %v1060, 0
    %1067 = vmatprep.subr.mxu0 0.0
    %1068 = vmatpush1.msra.mxu0 0.0
    %1069 = vmatprep.subr.mxu0 0.0
    %1070 = vmatpush1.msra.mxu0 0.0
    %1071 = vmatprep.subr.mxu0 0.0
    %1072 = vmatpush1.msra.mxu0 0.0
    %1073 = vmatprep.subr.mxu0 0.0
    %1074 = vmatpush1.msra.mxu0 0.0
    %1075 = vmatprep.subr.mxu0 0.0
    %1076 = vmatpush1.msra.mxu0 0.0
    %1077 = vmatprep.subr.mxu0 0.0
    %1078 = vmatpush1.msra.mxu0 0.0
    %1079 = vmatprep.subr.mxu0 0.0
    %1080 = vmatpush1.msra.mxu0 0.0
    %1081 = vmatprep.subr.mxu0 0.0
    %1082 = vmatpush1.msra.mxu0 0.0
    %1083 = vmatprep.subr.mxu0 0.0
    %1084 = vmatpush1.msra.mxu0 0.0
    %1085 = vmatprep.subr.mxu0 0.0
    %1086 = vmatpush1.msra.mxu0 0.0
    %1087 = vmatprep.subr.mxu0 0.0
    %1088 = vmatpush1.msra.mxu0 0.0
    %1089 = vmatprep.subr.mxu0 0.0
    %1090 = vmatpush1.msra.mxu0 0.0
    %1091 = vmatprep.subr.mxu0 0.0
    %1092 = vmatpush1.msra.mxu0 0.0
    %1093 = vmatprep.subr.mxu0 0.0
    %1094 = vmatpush1.msra.mxu0 0.0
    %1095 = vmatprep.subr.mxu0 0.0
    %1096 = vmatpush1.msra.mxu0 %v868
    %1097 = vmatprep.subr.mxu0 0.0
    %1098 = vmatpush1.msra.mxu0 %v866
    %1099 = vmatprep.subr.mxu0 0.0
    %1100 = vmatpush2.msra.mxu0 0.0
    %1101 = vmatprep.subr.mxu0 0.0
    %1102 = vmatpush2.msra.mxu0 0.0
    %1103 = vmatprep.subr.mxu0 0.0
    %1104 = vmatpush2.msra.mxu0 0.0
    %1105 = vmatprep.subr.mxu0 0.0
    %1106 = vmatpush2.msra.mxu0 0.0
    %1107 = vmatprep.subr.mxu0 0.0
    %1108 = vmatpush2.msra.mxu0 0.0
    %1109 = vmatprep.subr.mxu0 0.0
    %1110 = vmatpush2.msra.mxu0 0.0
    %1111 = vmatprep.subr.mxu0 0.0
    %1112 = vmatpush2.msra.mxu0 0.0
    %1113 = vmatprep.subr.mxu0 0.0
    %1114 = vmatpush2.msra.mxu0 0.0
    %1115 = vmatprep.subr.mxu0 0.0
    %1116 = vmatpush2.msra.mxu0 0.0
    %1117 = vmatprep.subr.mxu0 0.0
    %1118 = vmatpush2.msra.mxu0 0.0
    %1119 = vmatprep.subr.mxu0 0.0
    %1120 = vmatpush2.msra.mxu0 0.0
    %1121 = vmatprep.subr.mxu0 0.0
    %1122 = vmatpush2.msra.mxu0 0.0
    %1123 = vmatprep.subr.mxu0 0.0
    %1124 = vmatpush2.msra.mxu0 0.0
    %1125 = vmatprep.subr.mxu0 0.0
    %1126 = vmatpush2.msra.mxu0 0.0
    %1127 = vmatprep.subr.mxu0 0.0
    %1128 = vmatpush2.msra.mxu0 0.0
    %1129 = vmatprep.subr.mxu0 0.0
    %1130 = vmatpush2.msra.mxu0 0.0
    %1131 = vmatprep.mubr.f32.mxu0 0.0
    %1132 = vmatmul.mubr.f32.gmra.mxu0 %v1062
    %v1133 = vpop.f32.mrf.mxu0
    %v1134 = vadd.f32 0.0, %v1133
    %v1135 = vpop.f32.mrf.mxu0
    %1136 = vmatprep.mubr.f32.mxu0 0.0
    %1137 = vmatmul.mubr.f32.gmra.mxu0 %v1065
    %v1138 = vpop.f32.mrf.mxu0
    %v1139 = vadd.f32 0.0, %v1138
    %v1140 = vpop.f32.mrf.mxu0
    %1141 = vdwg.mxu0
    %v1142 = vmul.f32 %v1134, %v555
    %v1143 = vmul.f32 %v1139, %v555
    %v1144 = vadd.f32 %v954, %v1142
    %v1145 = vadd.f32 %v955, %v1143
    %v1146 = vld [vmem:[#allocation6] sm:$0xff]
    %v1147 = vld [vmem:[#allocation6 + $0x8] sm:$0xff]
    %v1149 = vsel %vm236, %v744, 0
    %v1152 = vsel %vm236, %v745, 0
    %v1155 = vsel %vm236, %v1144, 0
    %v1158 = vsel %vm236, %v1145, 0
    %1160 = vmatprep.subr.mxu0 0.0
    %1161 = vmatpush1.msra.mxu0 0.0
    %1162 = vmatprep.subr.mxu0 0.0
    %1163 = vmatpush1.msra.mxu0 0.0
    %1164 = vmatprep.subr.mxu0 0.0
    %1165 = vmatpush1.msra.mxu0 0.0
    %1166 = vmatprep.subr.mxu0 0.0
    %1167 = vmatpush1.msra.mxu0 0.0
    %1168 = vmatprep.subr.mxu0 0.0
    %1169 = vmatpush1.msra.mxu0 0.0
    %1170 = vmatprep.subr.mxu0 0.0
    %1171 = vmatpush1.msra.mxu0 0.0
    %1172 = vmatprep.subr.mxu0 0.0
    %1173 = vmatpush1.msra.mxu0 0.0
    %1174 = vmatprep.subr.mxu0 0.0
    %1175 = vmatpush1.msra.mxu0 0.0
    %1176 = vmatprep.subr.mxu0 0.0
    %1177 = vmatpush1.msra.mxu0 0.0
    %1178 = vmatprep.subr.mxu0 0.0
    %1179 = vmatpush1.msra.mxu0 0.0
    %1180 = vmatprep.subr.mxu0 0.0
    %1181 = vmatpush1.msra.mxu0 0.0
    %1182 = vmatprep.subr.mxu0 0.0
    %1183 = vmatpush1.msra.mxu0 0.0
    %1184 = vmatprep.subr.mxu0 0.0
    %1185 = vmatpush1.msra.mxu0 0.0
    %1186 = vmatprep.subr.mxu0 0.0
    %1187 = vmatpush1.msra.mxu0 0.0
    %1188 = vmatprep.subr.mxu0 0.0
    %1189 = vmatpush1.msra.mxu0 %v1147
    %1190 = vmatprep.subr.mxu0 0.0
    %1191 = vmatpush1.msra.mxu0 %v1146
    %1192 = vmatprep.subr.mxu0 0.0
    %1193 = vmatpush2.msra.mxu0 0.0
    %1194 = vmatprep.subr.mxu0 0.0
    %1195 = vmatpush2.msra.mxu0 0.0
    %1196 = vmatprep.subr.mxu0 0.0
    %1197 = vmatpush2.msra.mxu0 0.0
    %1198 = vmatprep.subr.mxu0 0.0
    %1199 = vmatpush2.msra.mxu0 0.0
    %1200 = vmatprep.subr.mxu0 0.0
    %1201 = vmatpush2.msra.mxu0 0.0
    %1202 = vmatprep.subr.mxu0 0.0
    %1203 = vmatpush2.msra.mxu0 0.0
    %1204 = vmatprep.subr.mxu0 0.0
    %1205 = vmatpush2.msra.mxu0 0.0
    %1206 = vmatprep.subr.mxu0 0.0
    %1207 = vmatpush2.msra.mxu0 0.0
    %1208 = vmatprep.subr.mxu0 0.0
    %1209 = vmatpush2.msra.mxu0 0.0
    %1210 = vmatprep.subr.mxu0 0.0
    %1211 = vmatpush2.msra.mxu0 0.0
    %1212 = vmatprep.subr.mxu0 0.0
    %1213 = vmatpush2.msra.mxu0 0.0
    %1214 = vmatprep.subr.mxu0 0.0
    %1215 = vmatpush2.msra.mxu0 0.0
    %1216 = vmatprep.subr.mxu0 0.0
    %1217 = vmatpush2.msra.mxu0 0.0
    %1218 = vmatprep.subr.mxu0 0.0
    %1219 = vmatpush2.msra.mxu0 0.0
    %1220 = vmatprep.subr.mxu0 0.0
    %1221 = vmatpush2.msra.mxu0 0.0
    %1222 = vmatprep.subr.mxu0 0.0
    %1223 = vmatpush2.msra.mxu0 0.0
    %1224 = vmatprep.mubr.f32.mxu0 0.0
    %1225 = vmatmul.mubr.f32.gmra.mxu0 %v1149
    %v1226 = vpop.f32.mrf.mxu0
    %v1227 = vadd.f32 0.0, %v1226
    %v1228 = vpop.f32.mrf.mxu0
    %1229 = vmatprep.mubr.f32.mxu0 0.0
    %1230 = vmatmul.mubr.f32.gmra.mxu0 %v1152
    %v1231 = vpop.f32.mrf.mxu0
    %v1232 = vadd.f32 0.0, %v1231
    %v1233 = vpop.f32.mrf.mxu0
    %1234 = vmatprep.mubr.f32.mxu0 0.0
    %1235 = vmatmul.mubr.f32.gmra.mxu0 %v1155
    %v1236 = vpop.f32.mrf.mxu0
    %v1237 = vadd.f32 0.0, %v1236
    %v1238 = vpop.f32.mrf.mxu0
    %1239 = vmatprep.mubr.f32.mxu0 0.0
    %1240 = vmatmul.mubr.f32.gmra.mxu0 %v1158
    %v1241 = vpop.f32.mrf.mxu0
    %v1242 = vadd.f32 0.0, %v1241
    %v1243 = vpop.f32.mrf.mxu0
    %1244 = vdwg.mxu0
    %v1245 = vadd.f32 %v224, %v1227
    %v1246 = vadd.f32 %v225, %v1232
    %v1247 = vadd.f32 %v226, %v1237
    %v1248 = vadd.f32 %v227, %v1242
    %v1249 = vlaneseq
    %v1250 = vshrl.u32 %v1249, 7
    %v1251 = vsub.s32 1, %v1250
    %v1252 = vrot.slane %v229, %v1251
    %v1253 = vadd.f32 %v1245, %v1252
    %v1254 = vadd.f32 %v1246, %v1252
    %v1255 = vadd.f32 %v1247, %v1252
    %v1256 = vadd.f32 %v1248, %v1252
    %v1257 = vsel %vm236, %v1253, 0.0
    %1258 = vadd.xlane.f32.xlu0 %v1257
    %v1259 = vpop.xlane.xlu0 %1258
    %v1260 = vsel %vm236, %v1254, 0.0
    %1261 = vadd.xlane.f32.xlu0 %v1260
    %v1262 = vpop.xlane.xlu0 %1261
    %v1263 = vsel %vm236, %v1255, 0.0
    %1264 = vadd.xlane.f32.xlu0 %v1263
    %v1265 = vpop.xlane.xlu0 %1264
    %v1266 = vsel %vm236, %v1256, 0.0
    %1267 = vadd.xlane.f32.xlu0 %v1266
    %v1268 = vpop.xlane.xlu0 %1267
    %v1269 = vrcp.pop 16.0
    %v1270 = vmul.f32 %v1259, %v1269
    %v1271 = vmul.f32 %v1262, %v1269
    %v1272 = vmul.f32 %v1265, %v1269
    %v1273 = vmul.f32 %v1268, %v1269
    %v1274 = vsub.f32 %v1253, %v1270
    %v1275 = vsub.f32 %v1254, %v1271
    %v1276 = vsub.f32 %v1255, %v1272
    %v1277 = vsub.f32 %v1256, %v1273
    %v1278 = vmul.f32 %v1274, %v1274
    %v1279 = vmul.f32 %v1275, %v1275
    %v1280 = vmul.f32 %v1276, %v1276
    %v1281 = vmul.f32 %v1277, %v1277
    %v1282 = vsel %vm236, %v1278, 0.0
    %1283 = vadd.xlane.f32.xlu0 %v1282
    %v1284 = vpop.xlane.xlu0 %1283
    %v1285 = vsel %vm236, %v1279, 0.0
    %1286 = vadd.xlane.f32.xlu0 %v1285
    %v1287 = vpop.xlane.xlu0 %1286
    %v1288 = vsel %vm236, %v1280, 0.0
    %1289 = vadd.xlane.f32.xlu0 %v1288
    %v1290 = vpop.xlane.xlu0 %1289
    %v1291 = vsel %vm236, %v1281, 0.0
    %1292 = vadd.xlane.f32.xlu0 %v1291
    %v1293 = vpop.xlane.xlu0 %1292
    %v1294 = vmul.f32 %v1284, %v1269
    %v1295 = vmul.f32 %v1287, %v1269
    %v1296 = vmul.f32 %v1290, %v1269
    %v1297 = vmul.f32 %v1293, %v1269
    %v1298 = vadd.f32 %v1294, 1e-05
    %v1299 = vadd.f32 %v1295, 1e-05
    %v1300 = vadd.f32 %v1296, 1e-05
    %v1301 = vadd.f32 %v1297, 1e-05
    %v1302 = vrsqrt.pop %v1298
    %v1303 = vrsqrt.pop %v1299
    %v1304 = vrsqrt.pop %v1300
    %v1305 = vrsqrt.pop %v1301
    %v1306 = vmul.f32 %v1274, %v1302
    %v1307 = vmul.f32 %v1275, %v1303
    %v1308 = vmul.f32 %v1276, %v1304
    %v1309 = vmul.f32 %v1277, %v1305
    %v1310 = vlaneseq
    %v1311 = vshrl.u32 %v1310, 7
    %v1312 = vsub.s32 2, %v1311
    %v1313 = vrot.slane %v229, %v1312
    %v1314 = vmul.f32 %v1306, %v1313
    %v1315 = vmul.f32 %v1307, %v1313
    %v1316 = vmul.f32 %v1308, %v1313
    %v1317 = vmul.f32 %v1309, %v1313
    %v1318 = vlaneseq
    %v1319 = vshrl.u32 %v1318, 7
    %v1320 = vsub.s32 3, %v1319
    %v1321 = vrot.slane %v229, %v1320
    %v1322 = vadd.f32 %v1314, %v1321
    %v1323 = vadd.f32 %v1315, %v1321
    %v1324 = vadd.f32 %v1316, %v1321
    %v1325 = vadd.f32 %v1317, %v1321
    %v1326 = vld [vmem:[#allocation7] sm:$0xff]
    %v1327 = vld [vmem:[#allocation7 + $0x8] sm:$0xff]
    %v1328 = vlaneseq
    %v1329 = vshrl.u32 %v1328, 7
    %v1330 = vsub.s32 4, %v1329
    %v1331 = vrot.slane %v229, %v1330
    %v1333 = vsel %vm236, %v1322, 0
    %v1336 = vsel %vm236, %v1323, 0
    %v1339 = vsel %vm236, %v1324, 0
    %v1342 = vsel %vm236, %v1325, 0
    %1344 = vmatprep.subr.mxu0 0.0
    %1345 = vmatpush1.msra.mxu0 0.0
    %1346 = vmatprep.subr.mxu0 0.0
    %1347 = vmatpush1.msra.mxu0 0.0
    %1348 = vmatprep.subr.mxu0 0.0
    %1349 = vmatpush1.msra.mxu0 0.0
    %1350 = vmatprep.subr.mxu0 0.0
    %1351 = vmatpush1.msra.mxu0 0.0
    %1352 = vmatprep.subr.mxu0 0.0
    %1353 = vmatpush1.msra.mxu0 0.0
    %1354 = vmatprep.subr.mxu0 0.0
    %1355 = vmatpush1.msra.mxu0 0.0
    %1356 = vmatprep.subr.mxu0 0.0
    %1357 = vmatpush1.msra.mxu0 0.0
    %1358 = vmatprep.subr.mxu0 0.0
    %1359 = vmatpush1.msra.mxu0 0.0
    %1360 = vmatprep.subr.mxu0 0.0
    %1361 = vmatpush1.msra.mxu0 0.0
    %1362 = vmatprep.subr.mxu0 0.0
    %1363 = vmatpush1.msra.mxu0 0.0
    %1364 = vmatprep.subr.mxu0 0.0
    %1365 = vmatpush1.msra.mxu0 0.0
    %1366 = vmatprep.subr.mxu0 0.0
    %1367 = vmatpush1.msra.mxu0 0.0
    %1368 = vmatprep.subr.mxu0 0.0
    %1369 = vmatpush1.msra.mxu0 0.0
    %1370 = vmatprep.subr.mxu0 0.0
    %1371 = vmatpush1.msra.mxu0 0.0
    %1372 = vmatprep.subr.mxu0 0.0
    %1373 = vmatpush1.msra.mxu0 %v1327
    %1374 = vmatprep.subr.mxu0 0.0
    %1375 = vmatpush1.msra.mxu0 %v1326
    %1376 = vmatprep.subr.mxu0 0.0
    %1377 = vmatpush2.msra.mxu0 0.0
    %1378 = vmatprep.subr.mxu0 0.0
    %1379 = vmatpush2.msra.mxu0 0.0
    %1380 = vmatprep.subr.mxu0 0.0
    %1381 = vmatpush2.msra.mxu0 0.0
    %1382 = vmatprep.subr.mxu0 0.0
    %1383 = vmatpush2.msra.mxu0 0.0
    %1384 = vmatprep.subr.mxu0 0.0
    %1385 = vmatpush2.msra.mxu0 0.0
    %1386 = vmatprep.subr.mxu0 0.0
    %1387 = vmatpush2.msra.mxu0 0.0
    %1388 = vmatprep.subr.mxu0 0.0
    %1389 = vmatpush2.msra.mxu0 0.0
    %1390 = vmatprep.subr.mxu0 0.0
    %1391 = vmatpush2.msra.mxu0 0.0
    %1392 = vmatprep.subr.mxu0 0.0
    %1393 = vmatpush2.msra.mxu0 0.0
    %1394 = vmatprep.subr.mxu0 0.0
    %1395 = vmatpush2.msra.mxu0 0.0
    %1396 = vmatprep.subr.mxu0 0.0
    %1397 = vmatpush2.msra.mxu0 0.0
    %1398 = vmatprep.subr.mxu0 0.0
    %1399 = vmatpush2.msra.mxu0 0.0
    %1400 = vmatprep.subr.mxu0 0.0
    %1401 = vmatpush2.msra.mxu0 0.0
    %1402 = vmatprep.subr.mxu0 0.0
    %1403 = vmatpush2.msra.mxu0 0.0
    %1404 = vmatprep.subr.mxu0 0.0
    %1405 = vmatpush2.msra.mxu0 0.0
    %1406 = vmatprep.subr.mxu0 0.0
    %1407 = vmatpush2.msra.mxu0 0.0
    %1408 = vmatprep.mubr.f32.mxu0 0.0
    %1409 = vmatmul.mubr.f32.gmra.mxu0 %v1333
    %v1410 = vpop.f32.mrf.mxu0
    %v1411 = vadd.f32 %v1331, %v1410
    %v1412 = vpop.f32.mrf.mxu0
    %1413 = vmatprep.mubr.f32.mxu0 0.0
    %1414 = vmatmul.mubr.f32.gmra.mxu0 %v1336
    %v1415 = vpop.f32.mrf.mxu0
    %v1416 = vadd.f32 %v1331, %v1415
    %v1417 = vpop.f32.mrf.mxu0
    %1418 = vmatprep.mubr.f32.mxu0 0.0
    %1419 = vmatmul.mubr.f32.gmra.mxu0 %v1339
    %v1420 = vpop.f32.mrf.mxu0
    %v1421 = vadd.f32 %v1331, %v1420
    %v1422 = vpop.f32.mrf.mxu0
    %1423 = vmatprep.mubr.f32.mxu0 0.0
    %1424 = vmatmul.mubr.f32.gmra.mxu0 %v1342
    %v1425 = vpop.f32.mrf.mxu0
    %v1426 = vadd.f32 %v1331, %v1425
    %v1427 = vpop.f32.mrf.mxu0
    %1428 = vdwg.mxu0
    %v1429 = vmax.f32 %v1411, 0.0
    %v1430 = vmax.f32 %v1416, 0.0
    %v1431 = vmax.f32 %v1421, 0.0
    %v1432 = vmax.f32 %v1426, 0.0
    %v1433 = vld [vmem:[#allocation9] sm:$0xff]
    %v1434 = vld [vmem:[#allocation9 + $0x8] sm:$0xff]
    %v1435 = vld [vmem:[#allocation9 + $0x10] sm:$0xff]
    %v1436 = vld [vmem:[#allocation9 + $0x18] sm:$0xff]
    %vm1437 = vcmask 261120
    %v1439 = vsel %vm1437, %v1429, 0
    %v1442 = vsel %vm1437, %v1430, 0
    %v1445 = vsel %vm1437, %v1431, 0
    %v1448 = vsel %vm1437, %v1432, 0
    %1450 = vmatprep.subr.mxu0 0.0
    %1451 = vmatpush1.msra.mxu0 0.0
    %1452 = vmatprep.subr.mxu0 0.0
    %1453 = vmatpush1.msra.mxu0 0.0
    %1454 = vmatprep.subr.mxu0 0.0
    %1455 = vmatpush1.msra.mxu0 0.0
    %1456 = vmatprep.subr.mxu0 0.0
    %1457 = vmatpush1.msra.mxu0 0.0
    %1458 = vmatprep.subr.mxu0 0.0
    %1459 = vmatpush1.msra.mxu0 0.0
    %1460 = vmatprep.subr.mxu0 0.0
    %1461 = vmatpush1.msra.mxu0 0.0
    %1462 = vmatprep.subr.mxu0 0.0
    %1463 = vmatpush1.msra.mxu0 0.0
    %1464 = vmatprep.subr.mxu0 0.0
    %1465 = vmatpush1.msra.mxu0 0.0
    %1466 = vmatprep.subr.mxu0 0.0
    %1467 = vmatpush1.msra.mxu0 0.0
    %1468 = vmatprep.subr.mxu0 0.0
    %1469 = vmatpush1.msra.mxu0 0.0
    %1470 = vmatprep.subr.mxu0 0.0
    %1471 = vmatpush1.msra.mxu0 0.0
    %1472 = vmatprep.subr.mxu0 0.0
    %1473 = vmatpush1.msra.mxu0 0.0
    %1474 = vmatprep.subr.mxu0 0.0
    %1475 = vmatpush1.msra.mxu0 %v1436
    %1476 = vmatprep.subr.mxu0 0.0
    %1477 = vmatpush1.msra.mxu0 %v1435
    %1478 = vmatprep.subr.mxu0 0.0
    %1479 = vmatpush1.msra.mxu0 %v1434
    %1480 = vmatprep.subr.mxu0 0.0
    %1481 = vmatpush1.msra.mxu0 %v1433
    %1482 = vmatprep.subr.mxu0 0.0
    %1483 = vmatpush2.msra.mxu0 0.0
    %1484 = vmatprep.subr.mxu0 0.0
    %1485 = vmatpush2.msra.mxu0 0.0
    %1486 = vmatprep.subr.mxu0 0.0
    %1487 = vmatpush2.msra.mxu0 0.0
    %1488 = vmatprep.subr.mxu0 0.0
    %1489 = vmatpush2.msra.mxu0 0.0
    %1490 = vmatprep.subr.mxu0 0.0
    %1491 = vmatpush2.msra.mxu0 0.0
    %1492 = vmatprep.subr.mxu0 0.0
    %1493 = vmatpush2.msra.mxu0 0.0
    %1494 = vmatprep.subr.mxu0 0.0
    %1495 = vmatpush2.msra.mxu0 0.0
    %1496 = vmatprep.subr.mxu0 0.0
    %1497 = vmatpush2.msra.mxu0 0.0
    %1498 = vmatprep.subr.mxu0 0.0
    %1499 = vmatpush2.msra.mxu0 0.0
    %1500 = vmatprep.subr.mxu0 0.0
    %1501 = vmatpush2.msra.mxu0 0.0
    %1502 = vmatprep.subr.mxu0 0.0
    %1503 = vmatpush2.msra.mxu0 0.0
    %1504 = vmatprep.subr.mxu0 0.0
    %1505 = vmatpush2.msra.mxu0 0.0
    %1506 = vmatprep.subr.mxu0 0.0
    %1507 = vmatpush2.msra.mxu0 0.0
    %1508 = vmatprep.subr.mxu0 0.0
    %1509 = vmatpush2.msra.mxu0 0.0
    %1510 = vmatprep.subr.mxu0 0.0
    %1511 = vmatpush2.msra.mxu0 0.0
    %1512 = vmatprep.subr.mxu0 0.0
    %1513 = vmatpush2.msra.mxu0 0.0
    %1514 = vmatprep.mubr.f32.mxu0 0.0
    %1515 = vmatmul.mubr.f32.gmra.mxu0 %v1439
    %v1516 = vpop.f32.mrf.mxu0
    %v1517 = vadd.f32 0.0, %v1516
    %v1518 = vpop.f32.mrf.mxu0
    %1519 = vmatprep.mubr.f32.mxu0 0.0
    %1520 = vmatmul.mubr.f32.gmra.mxu0 %v1442
    %v1521 = vpop.f32.mrf.mxu0
    %v1522 = vadd.f32 0.0, %v1521
    %v1523 = vpop.f32.mrf.mxu0
    %1524 = vmatprep.mubr.f32.mxu0 0.0
    %1525 = vmatmul.mubr.f32.gmra.mxu0 %v1445
    %v1526 = vpop.f32.mrf.mxu0
    %v1527 = vadd.f32 0.0, %v1526
    %v1528 = vpop.f32.mrf.mxu0
    %1529 = vmatprep.mubr.f32.mxu0 0.0
    %1530 = vmatmul.mubr.f32.gmra.mxu0 %v1448
    %v1531 = vpop.f32.mrf.mxu0
    %v1532 = vadd.f32 0.0, %v1531
    %v1533 = vpop.f32.mrf.mxu0
    %1534 = vdwg.mxu0
    %v1535 = vadd.f32 %v1322, %v1517
    %v1536 = vadd.f32 %v1323, %v1522
    %v1537 = vadd.f32 %v1324, %v1527
    %v1538 = vadd.f32 %v1325, %v1532
    %v1539 = vlaneseq
    %v1540 = vshrl.u32 %v1539, 7
    %v1541 = vsub.s32 5, %v1540
    %v1542 = vrot.slane %v229, %v1541
    %v1543 = vadd.f32 %v1535, %v1542
    %v1544 = vadd.f32 %v1536, %v1542
    %v1545 = vadd.f32 %v1537, %v1542
    %v1546 = vadd.f32 %v1538, %v1542
    %v1547 = vsel %vm236, %v1543, 0.0
    %1548 = vadd.xlane.f32.xlu0 %v1547
    %v1549 = vpop.xlane.xlu0 %1548
    %v1550 = vsel %vm236, %v1544, 0.0
    %1551 = vadd.xlane.f32.xlu0 %v1550
    %v1552 = vpop.xlane.xlu0 %1551
    %v1553 = vsel %vm236, %v1545, 0.0
    %1554 = vadd.xlane.f32.xlu0 %v1553
    %v1555 = vpop.xlane.xlu0 %1554
    %v1556 = vsel %vm236, %v1546, 0.0
    %1557 = vadd.xlane.f32.xlu0 %v1556
    %v1558 = vpop.xlane.xlu0 %1557
    %v1559 = vmul.f32 %v1549, %v1269
    %v1560 = vmul.f32 %v1552, %v1269
    %v1561 = vmul.f32 %v1555, %v1269
    %v1562 = vmul.f32 %v1558, %v1269
    %v1563 = vsub.f32 %v1543, %v1559
    %v1564 = vsub.f32 %v1544, %v1560
    %v1565 = vsub.f32 %v1545, %v1561
    %v1566 = vsub.f32 %v1546, %v1562
    %v1567 = vmul.f32 %v1563, %v1563
    %v1568 = vmul.f32 %v1564, %v1564
    %v1569 = vmul.f32 %v1565, %v1565
    %v1570 = vmul.f32 %v1566, %v1566
    %v1571 = vsel %vm236, %v1567, 0.0
    %1572 = vadd.xlane.f32.xlu0 %v1571
    %v1573 = vpop.xlane.xlu0 %1572
    %v1574 = vsel %vm236, %v1568, 0.0
    %1575 = vadd.xlane.f32.xlu0 %v1574
    %v1576 = vpop.xlane.xlu0 %1575
    %v1577 = vsel %vm236, %v1569, 0.0
    %1578 = vadd.xlane.f32.xlu0 %v1577
    %v1579 = vpop.xlane.xlu0 %1578
    %v1580 = vsel %vm236, %v1570, 0.0
    %1581 = vadd.xlane.f32.xlu0 %v1580
    %v1582 = vpop.xlane.xlu0 %1581
    %v1583 = vmul.f32 %v1573, %v1269
    %v1584 = vmul.f32 %v1576, %v1269
    %v1585 = vmul.f32 %v1579, %v1269
    %v1586 = vmul.f32 %v1582, %v1269
    %v1587 = vadd.f32 %v1583, 1e-05
    %v1588 = vadd.f32 %v1584, 1e-05
    %v1589 = vadd.f32 %v1585, 1e-05
    %v1590 = vadd.f32 %v1586, 1e-05
    %v1591 = vrsqrt.pop %v1587
    %v1592 = vrsqrt.pop %v1588
    %v1593 = vrsqrt.pop %v1589
    %v1594 = vrsqrt.pop %v1590
    %v1595 = vmul.f32 %v1563, %v1591
    %v1596 = vmul.f32 %v1564, %v1592
    %v1597 = vmul.f32 %v1565, %v1593
    %v1598 = vmul.f32 %v1566, %v1594
    %v1599 = vlaneseq
    %v1600 = vshrl.u32 %v1599, 7
    %v1601 = vsub.s32 6, %v1600
    %v1602 = vrot.slane %v229, %v1601
    %v1603 = vmul.f32 %v1595, %v1602
    %v1604 = vmul.f32 %v1596, %v1602
    %v1605 = vmul.f32 %v1597, %v1602
    %v1606 = vmul.f32 %v1598, %v1602
    %v1607 = vlaneseq
    %v1608 = vshrl.u32 %v1607, 7
    %v1609 = vsub.s32 7, %v1608
    %v1610 = vrot.slane %v229, %v1609
    %v1611 = vadd.f32 %v1603, %v1610
    %v1612 = vadd.f32 %v1604, %v1610
    %v1613 = vadd.f32 %v1605, %v1610
    %v1614 = vadd.f32 %v1606, %v1610
    %1615 = vst.msk [vmem:[%s19] sm:$0xff] %vm236, %v1611
    %1616 = vst.msk [vmem:[%s19 + $0x8] sm:$0xff] %vm236, %v1612
    %1617 = vst.msk [vmem:[%s19 + $0x10] sm:$0xff] %vm236, %v1613
    %1618 = vst.msk [vmem:[%s19 + $0x18] sm:$0xff] %vm236, %v1614
    %v1619 = vld [vmem:[%s1] sm:$0xff]
    %v1620 = vld [vmem:[%s1 + $0x8] sm:$0xff]
    %v1621 = vld [vmem:[%s1 + $0x10] sm:$0xff]
    %v1622 = vld [vmem:[%s1 + $0x18] sm:$0xff]
    %v1623 = vld [vmem:[%s3] sm:$0x3]
    %v1624 = vld [vmem:[#allocation16] sm:$0xff]
    %v1625 = vld [vmem:[#allocation12] sm:$0xff]
    %v1626 = vlaneseq
    %v1627 = vshrl.u32 %v1626, 7
    %v1628 = vsub.s32 0, %v1627
    %v1629 = vrot.slane %v1624, %v1628
    %vm1630 = vcmask 64512
    %v1632 = vsel %vm1630, %v1619, 0
    %v1635 = vsel %vm1630, %v1620, 0
    %v1638 = vsel %vm1630, %v1621, 0
    %v1641 = vsel %vm1630, %v1622, 0
    %1643 = vmatprep.subr.mxu0 0.0
    %1644 = vmatpush1.msra.mxu0 0.0
    %1645 = vmatprep.subr.mxu0 0.0
    %1646 = vmatpush1.msra.mxu0 0.0
    %1647 = vmatprep.subr.mxu0 0.0
    %1648 = vmatpush1.msra.mxu0 0.0
    %1649 = vmatprep.subr.mxu0 0.0
    %1650 = vmatpush1.msra.mxu0 0.0
    %1651 = vmatprep.subr.mxu0 0.0
    %1652 = vmatpush1.msra.mxu0 0.0
    %1653 = vmatprep.subr.mxu0 0.0
    %1654 = vmatpush1.msra.mxu0 0.0
    %1655 = vmatprep.subr.mxu0 0.0
    %1656 = vmatpush1.msra.mxu0 0.0
    %1657 = vmatprep.subr.mxu0 0.0
    %1658 = vmatpush1.msra.mxu0 0.0
    %1659 = vmatprep.subr.mxu0 0.0
    %1660 = vmatpush1.msra.mxu0 0.0
    %1661 = vmatprep.subr.mxu0 0.0
    %1662 = vmatpush1.msra.mxu0 0.0
    %1663 = vmatprep.subr.mxu0 0.0
    %1664 = vmatpush1.msra.mxu0 0.0
    %1665 = vmatprep.subr.mxu0 0.0
    %1666 = vmatpush1.msra.mxu0 0.0
    %1667 = vmatprep.subr.mxu0 0.0
    %1668 = vmatpush1.msra.mxu0 0.0
    %1669 = vmatprep.subr.mxu0 0.0
    %1670 = vmatpush1.msra.mxu0 0.0
    %1671 = vmatprep.subr.mxu0 0.0
    %1672 = vmatpush1.msra.mxu0 0.0
    %1673 = vmatprep.subr.mxu0 0.0
    %1674 = vmatpush1.msra.mxu0 %v1625
    %1675 = vmatprep.subr.mxu0 0.0
    %1676 = vmatpush2.msra.mxu0 0.0
    %1677 = vmatprep.subr.mxu0 0.0
    %1678 = vmatpush2.msra.mxu0 0.0
    %1679 = vmatprep.subr.mxu0 0.0
    %1680 = vmatpush2.msra.mxu0 0.0
    %1681 = vmatprep.subr.mxu0 0.0
    %1682 = vmatpush2.msra.mxu0 0.0
    %1683 = vmatprep.subr.mxu0 0.0
    %1684 = vmatpush2.msra.mxu0 0.0
    %1685 = vmatprep.subr.mxu0 0.0
    %1686 = vmatpush2.msra.mxu0 0.0
    %1687 = vmatprep.subr.mxu0 0.0
    %1688 = vmatpush2.msra.mxu0 0.0
    %1689 = vmatprep.subr.mxu0 0.0
    %1690 = vmatpush2.msra.mxu0 0.0
    %1691 = vmatprep.subr.mxu0 0.0
    %1692 = vmatpush2.msra.mxu0 0.0
    %1693 = vmatprep.subr.mxu0 0.0
    %1694 = vmatpush2.msra.mxu0 0.0
    %1695 = vmatprep.subr.mxu0 0.0
    %1696 = vmatpush2.msra.mxu0 0.0
    %1697 = vmatprep.subr.mxu0 0.0
    %1698 = vmatpush2.msra.mxu0 0.0
    %1699 = vmatprep.subr.mxu0 0.0
    %1700 = vmatpush2.msra.mxu0 0.0
    %1701 = vmatprep.subr.mxu0 0.0
    %1702 = vmatpush2.msra.mxu0 0.0
    %1703 = vmatprep.subr.mxu0 0.0
    %1704 = vmatpush2.msra.mxu0 0.0
    %1705 = vmatprep.subr.mxu0 0.0
    %1706 = vmatpush2.msra.mxu0 0.0
    %1707 = vmatprep.mubr.f32.mxu0 0.0
    %1708 = vmatmul.mubr.f32.gmra.mxu0 %v1632
    %v1709 = vpop.f32.mrf.mxu0
    %v1710 = vadd.f32 %v1629, %v1709
    %v1711 = vpop.f32.mrf.mxu0
    %1712 = vmatprep.mubr.f32.mxu0 0.0
    %1713 = vmatmul.mubr.f32.gmra.mxu0 %v1635
    %v1714 = vpop.f32.mrf.mxu0
    %v1715 = vadd.f32 %v1629, %v1714
    %v1716 = vpop.f32.mrf.mxu0
    %1717 = vmatprep.mubr.f32.mxu0 0.0
    %1718 = vmatmul.mubr.f32.gmra.mxu0 %v1638
    %v1719 = vpop.f32.mrf.mxu0
    %v1720 = vadd.f32 %v1629, %v1719
    %v1721 = vpop.f32.mrf.mxu0
    %1722 = vmatprep.mubr.f32.mxu0 0.0
    %1723 = vmatmul.mubr.f32.gmra.mxu0 %v1641
    %v1724 = vpop.f32.mrf.mxu0
    %v1725 = vadd.f32 %v1629, %v1724
    %v1726 = vpop.f32.mrf.mxu0
    %1727 = vdwg.mxu0
    %vm1728 = vcmp.lt.s32.totalorder %v335, 4
    %vm1729 = vmand %vm336, %vm1728
    %v1730 = vsel %vm1729, 1, 0
    %v1731 = vcvt.s32.f32 %v1730
    %v1732 = vmul.f32 %v1710, %v1731
    %v1733 = vmul.f32 %v1715, %v1731
    %v1734 = vlaneseq
    %v1735 = vshrl.u32 %v1734, 7
    %v1736 = vsub.s32 0, %v1735
    %v1737 = vrot.slane %v1623, %v1736
    %1740 = vrot.lane.b32.xlu0 %v1710, 120
    %v1741 = vpop.permute.xlu0 %1740
    %1742 = vrot.lane.b32.xlu0 %v1715, 120
    %v1743 = vpop.permute.xlu0 %1742
    %v1745 = vsel %vm1630, %v1732, 0
    %v1748 = vsel %vm1630, %v1733, 0
    %v1750 = vsel %vm1630, %v1741, 0
    %v1752 = vsel %vm1630, %v1743, 0
    %1754 = vmatprep.subr.mxu0 0.0
    %1755 = vmatpush1.xpose.msra.mxu0 0.0
    %1756 = vmatprep.subr.mxu0 0.0
    %1757 = vmatpush1.xpose.msra.mxu0 0.0
    %1758 = vmatprep.subr.mxu0 0.0
    %1759 = vmatpush1.xpose.msra.mxu0 0.0
    %1760 = vmatprep.subr.mxu0 0.0
    %1761 = vmatpush1.xpose.msra.mxu0 0.0
    %1762 = vmatprep.subr.mxu0 0.0
    %1763 = vmatpush1.xpose.msra.mxu0 0.0
    %1764 = vmatprep.subr.mxu0 0.0
    %1765 = vmatpush1.xpose.msra.mxu0 0.0
    %1766 = vmatprep.subr.mxu0 0.0
    %1767 = vmatpush1.xpose.msra.mxu0 0.0
    %1768 = vmatprep.subr.mxu0 0.0
    %1769 = vmatpush1.xpose.msra.mxu0 0.0
    %1770 = vmatprep.subr.mxu0 0.0
    %1771 = vmatpush1.xpose.msra.mxu0 0.0
    %1772 = vmatprep.subr.mxu0 0.0
    %1773 = vmatpush1.xpose.msra.mxu0 0.0
    %1774 = vmatprep.subr.mxu0 0.0
    %1775 = vmatpush1.xpose.msra.mxu0 0.0
    %1776 = vmatprep.subr.mxu0 0.0
    %1777 = vmatpush1.xpose.msra.mxu0 0.0
    %1778 = vmatprep.subr.mxu0 0.0
    %1779 = vmatpush1.xpose.msra.mxu0 0.0
    %1780 = vmatprep.subr.mxu0 0.0
    %1781 = vmatpush1.xpose.msra.mxu0 0.0
    %1782 = vmatprep.subr.mxu0 0.0
    %1783 = vmatpush1.xpose.msra.mxu0 %v1752
    %1784 = vmatprep.subr.mxu0 0.0
    %1785 = vmatpush1.xpose.msra.mxu0 %v1750
    %1786 = vmatprep.subr.mxu0 0.0
    %1787 = vmatpush2.xpose.msra.mxu0 0.0
    %1788 = vmatprep.subr.mxu0 0.0
    %1789 = vmatpush2.xpose.msra.mxu0 0.0
    %1790 = vmatprep.subr.mxu0 0.0
    %1791 = vmatpush2.xpose.msra.mxu0 0.0
    %1792 = vmatprep.subr.mxu0 0.0
    %1793 = vmatpush2.xpose.msra.mxu0 0.0
    %1794 = vmatprep.subr.mxu0 0.0
    %1795 = vmatpush2.xpose.msra.mxu0 0.0
    %1796 = vmatprep.subr.mxu0 0.0
    %1797 = vmatpush2.xpose.msra.mxu0 0.0
    %1798 = vmatprep.subr.mxu0 0.0
    %1799 = vmatpush2.xpose.msra.mxu0 0.0
    %1800 = vmatprep.subr.mxu0 0.0
    %1801 = vmatpush2.xpose.msra.mxu0 0.0
    %1802 = vmatprep.subr.mxu0 0.0
    %1803 = vmatpush2.xpose.msra.mxu0 0.0
    %1804 = vmatprep.subr.mxu0 0.0
    %1805 = vmatpush2.xpose.msra.mxu0 0.0
    %1806 = vmatprep.subr.mxu0 0.0
    %1807 = vmatpush2.xpose.msra.mxu0 0.0
    %1808 = vmatprep.subr.mxu0 0.0
    %1809 = vmatpush2.xpose.msra.mxu0 0.0
    %1810 = vmatprep.subr.mxu0 0.0
    %1811 = vmatpush2.xpose.msra.mxu0 0.0
    %1812 = vmatprep.subr.mxu0 0.0
    %1813 = vmatpush2.xpose.msra.mxu0 0.0
    %1814 = vmatprep.subr.mxu0 0.0
    %1815 = vmatpush2.xpose.msra.mxu0 0.0
    %1816 = vmatprep.subr.mxu0 0.0
    %1817 = vmatpush2.xpose.msra.mxu0 0.0
    %1818 = vmatprep.mubr.f32.mxu0 0.0
    %1819 = vmatmul.mubr.f32.gmra.mxu0 %v1745
    %v1820 = vpop.f32.mrf.mxu0
    %v1821 = vadd.f32 %v1737, %v1820
    %v1822 = vpop.f32.mrf.mxu0
    %1823 = vmatprep.mubr.f32.mxu0 0.0
    %1824 = vmatmul.mubr.f32.gmra.mxu0 %v1748
    %v1825 = vpop.f32.mrf.mxu0
    %v1826 = vadd.f32 %v1737, %v1825
    %v1827 = vpop.f32.mrf.mxu0
    %1828 = vdwg.mxu0
    %v1829 = vsel %vm236, %v1821, -inf
    %1830 = vmax.xlane.f32.xlu0 %v1829
    %v1831 = vpop.xlane.xlu0 %1830
    %v1832 = vsel %vm236, %v1826, -inf
    %1833 = vmax.xlane.f32.xlu0 %v1832
    %v1834 = vpop.xlane.xlu0 %1833
    %v1835 = vsub.f32 %v1821, %v1831
    %v1836 = vsub.f32 %v1826, %v1834
    %v1837 = vmul.f32 %v1835, 1.442695
    %v1838 = vpow.pop %v1837
    %v1839 = vmul.f32 %v1836, 1.442695
    %v1840 = vpow.pop %v1839
    %v1841 = vsel %vm236, %v1838, 0.0
    %1842 = vadd.xlane.f32.xlu0 %v1841
    %v1843 = vpop.xlane.xlu0 %1842
    %v1844 = vsel %vm236, %v1840, 0.0
    %1845 = vadd.xlane.f32.xlu0 %v1844
    %v1846 = vpop.xlane.xlu0 %1845
    %v1847 = vrcp.pop %v1843
    %v1848 = vrcp.pop %v1846
    %v1849 = vmul.f32 %v1838, %v1847
    %v1850 = vmul.f32 %v1840, %v1848
    %1851 = vrot.lane.b32.xlu0 %v1710, 112
    %v1852 = vpop.permute.xlu0 %1851
    %1853 = vrot.lane.b32.xlu0 %v1715, 112
    %v1854 = vpop.permute.xlu0 %1853
    %v1858 = vsel %vm236, %v1849, 0
    %v1861 = vsel %vm236, %v1850, 0
    %1863 = vmatprep.subr.mxu0 0.0
    %1864 = vmatpush1.msra.mxu0 0.0
    %1865 = vmatprep.subr.mxu0 0.0
    %1866 = vmatpush1.msra.mxu0 0.0
    %1867 = vmatprep.subr.mxu0 0.0
    %1868 = vmatpush1.msra.mxu0 0.0
    %1869 = vmatprep.subr.mxu0 0.0
    %1870 = vmatpush1.msra.mxu0 0.0
    %1871 = vmatprep.subr.mxu0 0.0
    %1872 = vmatpush1.msra.mxu0 0.0
    %1873 = vmatprep.subr.mxu0 0.0
    %1874 = vmatpush1.msra.mxu0 0.0
    %1875 = vmatprep.subr.mxu0 0.0
    %1876 = vmatpush1.msra.mxu0 0.0
    %1877 = vmatprep.subr.mxu0 0.0
    %1878 = vmatpush1.msra.mxu0 0.0
    %1879 = vmatprep.subr.mxu0 0.0
    %1880 = vmatpush1.msra.mxu0 0.0
    %1881 = vmatprep.subr.mxu0 0.0
    %1882 = vmatpush1.msra.mxu0 0.0
    %1883 = vmatprep.subr.mxu0 0.0
    %1884 = vmatpush1.msra.mxu0 0.0
    %1885 = vmatprep.subr.mxu0 0.0
    %1886 = vmatpush1.msra.mxu0 0.0
    %1887 = vmatprep.subr.mxu0 0.0
    %1888 = vmatpush1.msra.mxu0 0.0
    %1889 = vmatprep.subr.mxu0 0.0
    %1890 = vmatpush1.msra.mxu0 0.0
    %1891 = vmatprep.subr.mxu0 0.0
    %1892 = vmatpush1.msra.mxu0 %v1854
    %1893 = vmatprep.subr.mxu0 0.0
    %1894 = vmatpush1.msra.mxu0 %v1852
    %1895 = vmatprep.subr.mxu0 0.0
    %1896 = vmatpush2.msra.mxu0 0.0
    %1897 = vmatprep.subr.mxu0 0.0
    %1898 = vmatpush2.msra.mxu0 0.0
    %1899 = vmatprep.subr.mxu0 0.0
    %1900 = vmatpush2.msra.mxu0 0.0
    %1901 = vmatprep.subr.mxu0 0.0
    %1902 = vmatpush2.msra.mxu0 0.0
    %1903 = vmatprep.subr.mxu0 0.0
    %1904 = vmatpush2.msra.mxu0 0.0
    %1905 = vmatprep.subr.mxu0 0.0
    %1906 = vmatpush2.msra.mxu0 0.0
    %1907 = vmatprep.subr.mxu0 0.0
    %1908 = vmatpush2.msra.mxu0 0.0
    %1909 = vmatprep.subr.mxu0 0.0
    %1910 = vmatpush2.msra.mxu0 0.0
    %1911 = vmatprep.subr.mxu0 0.0
    %1912 = vmatpush2.msra.mxu0 0.0
    %1913 = vmatprep.subr.mxu0 0.0
    %1914 = vmatpush2.msra.mxu0 0.0
    %1915 = vmatprep.subr.mxu0 0.0
    %1916 = vmatpush2.msra.mxu0 0.0
    %1917 = vmatprep.subr.mxu0 0.0
    %1918 = vmatpush2.msra.mxu0 0.0
    %1919 = vmatprep.subr.mxu0 0.0
    %1920 = vmatpush2.msra.mxu0 0.0
    %1921 = vmatprep.subr.mxu0 0.0
    %1922 = vmatpush2.msra.mxu0 0.0
    %1923 = vmatprep.subr.mxu0 0.0
    %1924 = vmatpush2.msra.mxu0 0.0
    %1925 = vmatprep.subr.mxu0 0.0
    %1926 = vmatpush2.msra.mxu0 0.0
    %1927 = vmatprep.mubr.f32.mxu0 0.0
    %1928 = vmatmul.mubr.f32.gmra.mxu0 %v1858
    %v1929 = vpop.f32.mrf.mxu0
    %v1930 = vadd.f32 0.0, %v1929
    %v1931 = vpop.f32.mrf.mxu0
    %1932 = vmatprep.mubr.f32.mxu0 0.0
    %1933 = vmatmul.mubr.f32.gmra.mxu0 %v1861
    %v1934 = vpop.f32.mrf.mxu0
    %v1935 = vadd.f32 0.0, %v1934
    %v1936 = vpop.f32.mrf.mxu0
    %1937 = vdwg.mxu0
    %v1938 = vmul.f32 %v1930, %v1731
    %v1939 = vmul.f32 %v1935, %v1731
    %v1940 = vadd.f32 %v1938, 0.0
    %v1941 = vadd.f32 %v1939, 0.0
    %vm1942 = vcmp.ge.s32.totalorder %v335, 4
    %vm1943 = vmand %vm1942, %vm337
    %v1944 = vsel %vm1943, 1, 0
    %v1945 = vcvt.s32.f32 %v1944
    %v1946 = vmul.f32 %v1710, %v1945
    %v1947 = vmul.f32 %v1715, %v1945
    %v1949 = vsel %vm1630, %v1946, 0
    %v1952 = vsel %vm1630, %v1947, 0
    %1954 = vmatprep.subr.mxu0 0.0
    %1955 = vmatpush1.xpose.msra.mxu0 0.0
    %1956 = vmatprep.subr.mxu0 0.0
    %1957 = vmatpush1.xpose.msra.mxu0 0.0
    %1958 = vmatprep.subr.mxu0 0.0
    %1959 = vmatpush1.xpose.msra.mxu0 0.0
    %1960 = vmatprep.subr.mxu0 0.0
    %1961 = vmatpush1.xpose.msra.mxu0 0.0
    %1962 = vmatprep.subr.mxu0 0.0
    %1963 = vmatpush1.xpose.msra.mxu0 0.0
    %1964 = vmatprep.subr.mxu0 0.0
    %1965 = vmatpush1.xpose.msra.mxu0 0.0
    %1966 = vmatprep.subr.mxu0 0.0
    %1967 = vmatpush1.xpose.msra.mxu0 0.0
    %1968 = vmatprep.subr.mxu0 0.0
    %1969 = vmatpush1.xpose.msra.mxu0 0.0
    %1970 = vmatprep.subr.mxu0 0.0
    %1971 = vmatpush1.xpose.msra.mxu0 0.0
    %1972 = vmatprep.subr.mxu0 0.0
    %1973 = vmatpush1.xpose.msra.mxu0 0.0
    %1974 = vmatprep.subr.mxu0 0.0
    %1975 = vmatpush1.xpose.msra.mxu0 0.0
    %1976 = vmatprep.subr.mxu0 0.0
    %1977 = vmatpush1.xpose.msra.mxu0 0.0
    %1978 = vmatprep.subr.mxu0 0.0
    %1979 = vmatpush1.xpose.msra.mxu0 0.0
    %1980 = vmatprep.subr.mxu0 0.0
    %1981 = vmatpush1.xpose.msra.mxu0 0.0
    %1982 = vmatprep.subr.mxu0 0.0
    %1983 = vmatpush1.xpose.msra.mxu0 %v1752
    %1984 = vmatprep.subr.mxu0 0.0
    %1985 = vmatpush1.xpose.msra.mxu0 %v1750
    %1986 = vmatprep.subr.mxu0 0.0
    %1987 = vmatpush2.xpose.msra.mxu0 0.0
    %1988 = vmatprep.subr.mxu0 0.0
    %1989 = vmatpush2.xpose.msra.mxu0 0.0
    %1990 = vmatprep.subr.mxu0 0.0
    %1991 = vmatpush2.xpose.msra.mxu0 0.0
    %1992 = vmatprep.subr.mxu0 0.0
    %1993 = vmatpush2.xpose.msra.mxu0 0.0
    %1994 = vmatprep.subr.mxu0 0.0
    %1995 = vmatpush2.xpose.msra.mxu0 0.0
    %1996 = vmatprep.subr.mxu0 0.0
    %1997 = vmatpush2.xpose.msra.mxu0 0.0
    %1998 = vmatprep.subr.mxu0 0.0
    %1999 = vmatpush2.xpose.msra.mxu0 0.0
    %2000 = vmatprep.subr.mxu0 0.0
    %2001 = vmatpush2.xpose.msra.mxu0 0.0
    %2002 = vmatprep.subr.mxu0 0.0
    %2003 = vmatpush2.xpose.msra.mxu0 0.0
    %2004 = vmatprep.subr.mxu0 0.0
    %2005 = vmatpush2.xpose.msra.mxu0 0.0
    %2006 = vmatprep.subr.mxu0 0.0
    %2007 = vmatpush2.xpose.msra.mxu0 0.0
    %2008 = vmatprep.subr.mxu0 0.0
    %2009 = vmatpush2.xpose.msra.mxu0 0.0
    %2010 = vmatprep.subr.mxu0 0.0
    %2011 = vmatpush2.xpose.msra.mxu0 0.0
    %2012 = vmatprep.subr.mxu0 0.0
    %2013 = vmatpush2.xpose.msra.mxu0 0.0
    %2014 = vmatprep.subr.mxu0 0.0
    %2015 = vmatpush2.xpose.msra.mxu0 0.0
    %2016 = vmatprep.subr.mxu0 0.0
    %2017 = vmatpush2.xpose.msra.mxu0 0.0
    %2018 = vmatprep.mubr.f32.mxu0 0.0
    %2019 = vmatmul.mubr.f32.gmra.mxu0 %v1949
    %v2020 = vpop.f32.mrf.mxu0
    %v2021 = vadd.f32 %v1737, %v2020
    %v2022 = vpop.f32.mrf.mxu0
    %2023 = vmatprep.mubr.f32.mxu0 0.0
    %2024 = vmatmul.mubr.f32.gmra.mxu0 %v1952
    %v2025 = vpop.f32.mrf.mxu0
    %v2026 = vadd.f32 %v1737, %v2025
    %v2027 = vpop.f32.mrf.mxu0
    %2028 = vdwg.mxu0
    %v2029 = vsel %vm236, %v2021, -inf
    %2030 = vmax.xlane.f32.xlu0 %v2029
    %v2031 = vpop.xlane.xlu0 %2030
    %v2032 = vsel %vm236, %v2026, -inf
    %2033 = vmax.xlane.f32.xlu0 %v2032
    %v2034 = vpop.xlane.xlu0 %2033
    %v2035 = vsub.f32 %v2021, %v2031
    %v2036 = vsub.f32 %v2026, %v2034
    %v2037 = vmul.f32 %v2035, 1.442695
    %v2038 = vpow.pop %v2037
    %v2039 = vmul.f32 %v2036, 1.442695
    %v2040 = vpow.pop %v2039
    %v2041 = vsel %vm236, %v2038, 0.0
    %2042 = vadd.xlane.f32.xlu0 %v2041
    %v2043 = vpop.xlane.xlu0 %2042
    %v2044 = vsel %vm236, %v2040, 0.0
    %2045 = vadd.xlane.f32.xlu0 %v2044
    %v2046 = vpop.xlane.xlu0 %2045
    %v2047 = vrcp.pop %v2043
    %v2048 = vrcp.pop %v2046
    %v2049 = vmul.f32 %v2038, %v2047
    %v2050 = vmul.f32 %v2040, %v2048
    %v2052 = vsel %vm236, %v2049, 0
    %v2055 = vsel %vm236, %v2050, 0
    %2057 = vmatprep.subr.mxu0 0.0
    %2058 = vmatpush1.msra.mxu0 0.0
    %2059 = vmatprep.subr.mxu0 0.0
    %2060 = vmatpush1.msra.mxu0 0.0
    %2061 = vmatprep.subr.mxu0 0.0
    %2062 = vmatpush1.msra.mxu0 0.0
    %2063 = vmatprep.subr.mxu0 0.0
    %2064 = vmatpush1.msra.mxu0 0.0
    %2065 = vmatprep.subr.mxu0 0.0
    %2066 = vmatpush1.msra.mxu0 0.0
    %2067 = vmatprep.subr.mxu0 0.0
    %2068 = vmatpush1.msra.mxu0 0.0
    %2069 = vmatprep.subr.mxu0 0.0
    %2070 = vmatpush1.msra.mxu0 0.0
    %2071 = vmatprep.subr.mxu0 0.0
    %2072 = vmatpush1.msra.mxu0 0.0
    %2073 = vmatprep.subr.mxu0 0.0
    %2074 = vmatpush1.msra.mxu0 0.0
    %2075 = vmatprep.subr.mxu0 0.0
    %2076 = vmatpush1.msra.mxu0 0.0
    %2077 = vmatprep.subr.mxu0 0.0
    %2078 = vmatpush1.msra.mxu0 0.0
    %2079 = vmatprep.subr.mxu0 0.0
    %2080 = vmatpush1.msra.mxu0 0.0
    %2081 = vmatprep.subr.mxu0 0.0
    %2082 = vmatpush1.msra.mxu0 0.0
    %2083 = vmatprep.subr.mxu0 0.0
    %2084 = vmatpush1.msra.mxu0 0.0
    %2085 = vmatprep.subr.mxu0 0.0
    %2086 = vmatpush1.msra.mxu0 %v1854
    %2087 = vmatprep.subr.mxu0 0.0
    %2088 = vmatpush1.msra.mxu0 %v1852
    %2089 = vmatprep.subr.mxu0 0.0
    %2090 = vmatpush2.msra.mxu0 0.0
    %2091 = vmatprep.subr.mxu0 0.0
    %2092 = vmatpush2.msra.mxu0 0.0
    %2093 = vmatprep.subr.mxu0 0.0
    %2094 = vmatpush2.msra.mxu0 0.0
    %2095 = vmatprep.subr.mxu0 0.0
    %2096 = vmatpush2.msra.mxu0 0.0
    %2097 = vmatprep.subr.mxu0 0.0
    %2098 = vmatpush2.msra.mxu0 0.0
    %2099 = vmatprep.subr.mxu0 0.0
    %2100 = vmatpush2.msra.mxu0 0.0
    %2101 = vmatprep.subr.mxu0 0.0
    %2102 = vmatpush2.msra.mxu0 0.0
    %2103 = vmatprep.subr.mxu0 0.0
    %2104 = vmatpush2.msra.mxu0 0.0
    %2105 = vmatprep.subr.mxu0 0.0
    %2106 = vmatpush2.msra.mxu0 0.0
    %2107 = vmatprep.subr.mxu0 0.0
    %2108 = vmatpush2.msra.mxu0 0.0
    %2109 = vmatprep.subr.mxu0 0.0
    %2110 = vmatpush2.msra.mxu0 0.0
    %2111 = vmatprep.subr.mxu0 0.0
    %2112 = vmatpush2.msra.mxu0 0.0
    %2113 = vmatprep.subr.mxu0 0.0
    %2114 = vmatpush2.msra.mxu0 0.0
    %2115 = vmatprep.subr.mxu0 0.0
    %2116 = vmatpush2.msra.mxu0 0.0
    %2117 = vmatprep.subr.mxu0 0.0
    %2118 = vmatpush2.msra.mxu0 0.0
    %2119 = vmatprep.subr.mxu0 0.0
    %2120 = vmatpush2.msra.mxu0 0.0
    %2121 = vmatprep.mubr.f32.mxu0 0.0
    %2122 = vmatmul.mubr.f32.gmra.mxu0 %v2052
    %v2123 = vpop.f32.mrf.mxu0
    %v2124 = vadd.f32 0.0, %v2123
    %v2125 = vpop.f32.mrf.mxu0
    %2126 = vmatprep.mubr.f32.mxu0 0.0
    %2127 = vmatmul.mubr.f32.gmra.mxu0 %v2055
    %v2128 = vpop.f32.mrf.mxu0
    %v2129 = vadd.f32 0.0, %v2128
    %v2130 = vpop.f32.mrf.mxu0
    %2131 = vdwg.mxu0
    %v2132 = vmul.f32 %v2124, %v1945
    %v2133 = vmul.f32 %v2129, %v1945
    %v2134 = vadd.f32 %v1940, %v2132
    %v2135 = vadd.f32 %v1941, %v2133
    %v2136 = vmul.f32 %v1720, %v1731
    %v2137 = vmul.f32 %v1725, %v1731
    %v2138 = vlaneseq
    %v2139 = vshrl.u32 %v2138, 7
    %v2140 = vsub.s32 1, %v2139
    %v2141 = vrot.slane %v1623, %v2140
    %2144 = vrot.lane.b32.xlu0 %v1720, 120
    %v2145 = vpop.permute.xlu0 %2144
    %2146 = vrot.lane.b32.xlu0 %v1725, 120
    %v2147 = vpop.permute.xlu0 %2146
    %v2149 = vsel %vm1630, %v2136, 0
    %v2152 = vsel %vm1630, %v2137, 0
    %v2154 = vsel %vm1630, %v2145, 0
    %v2156 = vsel %vm1630, %v2147, 0
    %2158 = vmatprep.subr.mxu0 0.0
    %2159 = vmatpush1.xpose.msra.mxu0 0.0
    %2160 = vmatprep.subr.mxu0 0.0
    %2161 = vmatpush1.xpose.msra.mxu0 0.0
    %2162 = vmatprep.subr.mxu0 0.0
    %2163 = vmatpush1.xpose.msra.mxu0 0.0
    %2164 = vmatprep.subr.mxu0 0.0
    %2165 = vmatpush1.xpose.msra.mxu0 0.0
    %2166 = vmatprep.subr.mxu0 0.0
    %2167 = vmatpush1.xpose.msra.mxu0 0.0
    %2168 = vmatprep.subr.mxu0 0.0
    %2169 = vmatpush1.xpose.msra.mxu0 0.0
    %2170 = vmatprep.subr.mxu0 0.0
    %2171 = vmatpush1.xpose.msra.mxu0 0.0
    %2172 = vmatprep.subr.mxu0 0.0
    %2173 = vmatpush1.xpose.msra.mxu0 0.0
    %2174 = vmatprep.subr.mxu0 0.0
    %2175 = vmatpush1.xpose.msra.mxu0 0.0
    %2176 = vmatprep.subr.mxu0 0.0
    %2177 = vmatpush1.xpose.msra.mxu0 0.0
    %2178 = vmatprep.subr.mxu0 0.0
    %2179 = vmatpush1.xpose.msra.mxu0 0.0
    %2180 = vmatprep.subr.mxu0 0.0
    %2181 = vmatpush1.xpose.msra.mxu0 0.0
    %2182 = vmatprep.subr.mxu0 0.0
    %2183 = vmatpush1.xpose.msra.mxu0 0.0
    %2184 = vmatprep.subr.mxu0 0.0
    %2185 = vmatpush1.xpose.msra.mxu0 0.0
    %2186 = vmatprep.subr.mxu0 0.0
    %2187 = vmatpush1.xpose.msra.mxu0 %v2156
    %2188 = vmatprep.subr.mxu0 0.0
    %2189 = vmatpush1.xpose.msra.mxu0 %v2154
    %2190 = vmatprep.subr.mxu0 0.0
    %2191 = vmatpush2.xpose.msra.mxu0 0.0
    %2192 = vmatprep.subr.mxu0 0.0
    %2193 = vmatpush2.xpose.msra.mxu0 0.0
    %2194 = vmatprep.subr.mxu0 0.0
    %2195 = vmatpush2.xpose.msra.mxu0 0.0
    %2196 = vmatprep.subr.mxu0 0.0
    %2197 = vmatpush2.xpose.msra.mxu0 0.0
    %2198 = vmatprep.subr.mxu0 0.0
    %2199 = vmatpush2.xpose.msra.mxu0 0.0
    %2200 = vmatprep.subr.mxu0 0.0
    %2201 = vmatpush2.xpose.msra.mxu0 0.0
    %2202 = vmatprep.subr.mxu0 0.0
    %2203 = vmatpush2.xpose.msra.mxu0 0.0
    %2204 = vmatprep.subr.mxu0 0.0
    %2205 = vmatpush2.xpose.msra.mxu0 0.0
    %2206 = vmatprep.subr.mxu0 0.0
    %2207 = vmatpush2.xpose.msra.mxu0 0.0
    %2208 = vmatprep.subr.mxu0 0.0
    %2209 = vmatpush2.xpose.msra.mxu0 0.0
    %2210 = vmatprep.subr.mxu0 0.0
    %2211 = vmatpush2.xpose.msra.mxu0 0.0
    %2212 = vmatprep.subr.mxu0 0.0
    %2213 = vmatpush2.xpose.msra.mxu0 0.0
    %2214 = vmatprep.subr.mxu0 0.0
    %2215 = vmatpush2.xpose.msra.mxu0 0.0
    %2216 = vmatprep.subr.mxu0 0.0
    %2217 = vmatpush2.xpose.msra.mxu0 0.0
    %2218 = vmatprep.subr.mxu0 0.0
    %2219 = vmatpush2.xpose.msra.mxu0 0.0
    %2220 = vmatprep.subr.mxu0 0.0
    %2221 = vmatpush2.xpose.msra.mxu0 0.0
    %2222 = vmatprep.mubr.f32.mxu0 0.0
    %2223 = vmatmul.mubr.f32.gmra.mxu0 %v2149
    %v2224 = vpop.f32.mrf.mxu0
    %v2225 = vadd.f32 %v2141, %v2224
    %v2226 = vpop.f32.mrf.mxu0
    %2227 = vmatprep.mubr.f32.mxu0 0.0
    %2228 = vmatmul.mubr.f32.gmra.mxu0 %v2152
    %v2229 = vpop.f32.mrf.mxu0
    %v2230 = vadd.f32 %v2141, %v2229
    %v2231 = vpop.f32.mrf.mxu0
    %2232 = vdwg.mxu0
    %v2233 = vsel %vm236, %v2225, -inf
    %2234 = vmax.xlane.f32.xlu0 %v2233
    %v2235 = vpop.xlane.xlu0 %2234
    %v2236 = vsel %vm236, %v2230, -inf
    %2237 = vmax.xlane.f32.xlu0 %v2236
    %v2238 = vpop.xlane.xlu0 %2237
    %v2239 = vsub.f32 %v2225, %v2235
    %v2240 = vsub.f32 %v2230, %v2238
    %v2241 = vmul.f32 %v2239, 1.442695
    %v2242 = vpow.pop %v2241
    %v2243 = vmul.f32 %v2240, 1.442695
    %v2244 = vpow.pop %v2243
    %v2245 = vsel %vm236, %v2242, 0.0
    %2246 = vadd.xlane.f32.xlu0 %v2245
    %v2247 = vpop.xlane.xlu0 %2246
    %v2248 = vsel %vm236, %v2244, 0.0
    %2249 = vadd.xlane.f32.xlu0 %v2248
    %v2250 = vpop.xlane.xlu0 %2249
    %v2251 = vrcp.pop %v2247
    %v2252 = vrcp.pop %v2250
    %v2253 = vmul.f32 %v2242, %v2251
    %v2254 = vmul.f32 %v2244, %v2252
    %2255 = vrot.lane.b32.xlu0 %v1720, 112
    %v2256 = vpop.permute.xlu0 %2255
    %2257 = vrot.lane.b32.xlu0 %v1725, 112
    %v2258 = vpop.permute.xlu0 %2257
    %v2262 = vsel %vm236, %v2253, 0
    %v2265 = vsel %vm236, %v2254, 0
    %2267 = vmatprep.subr.mxu0 0.0
    %2268 = vmatpush1.msra.mxu0 0.0
    %2269 = vmatprep.subr.mxu0 0.0
    %2270 = vmatpush1.msra.mxu0 0.0
    %2271 = vmatprep.subr.mxu0 0.0
    %2272 = vmatpush1.msra.mxu0 0.0
    %2273 = vmatprep.subr.mxu0 0.0
    %2274 = vmatpush1.msra.mxu0 0.0
    %2275 = vmatprep.subr.mxu0 0.0
    %2276 = vmatpush1.msra.mxu0 0.0
    %2277 = vmatprep.subr.mxu0 0.0
    %2278 = vmatpush1.msra.mxu0 0.0
    %2279 = vmatprep.subr.mxu0 0.0
    %2280 = vmatpush1.msra.mxu0 0.0
    %2281 = vmatprep.subr.mxu0 0.0
    %2282 = vmatpush1.msra.mxu0 0.0
    %2283 = vmatprep.subr.mxu0 0.0
    %2284 = vmatpush1.msra.mxu0 0.0
    %2285 = vmatprep.subr.mxu0 0.0
    %2286 = vmatpush1.msra.mxu0 0.0
    %2287 = vmatprep.subr.mxu0 0.0
    %2288 = vmatpush1.msra.mxu0 0.0
    %2289 = vmatprep.subr.mxu0 0.0
    %2290 = vmatpush1.msra.mxu0 0.0
    %2291 = vmatprep.subr.mxu0 0.0
    %2292 = vmatpush1.msra.mxu0 0.0
    %2293 = vmatprep.subr.mxu0 0.0
    %2294 = vmatpush1.msra.mxu0 0.0
    %2295 = vmatprep.subr.mxu0 0.0
    %2296 = vmatpush1.msra.mxu0 %v2258
    %2297 = vmatprep.subr.mxu0 0.0
    %2298 = vmatpush1.msra.mxu0 %v2256
    %2299 = vmatprep.subr.mxu0 0.0
    %2300 = vmatpush2.msra.mxu0 0.0
    %2301 = vmatprep.subr.mxu0 0.0
    %2302 = vmatpush2.msra.mxu0 0.0
    %2303 = vmatprep.subr.mxu0 0.0
    %2304 = vmatpush2.msra.mxu0 0.0
    %2305 = vmatprep.subr.mxu0 0.0
    %2306 = vmatpush2.msra.mxu0 0.0
    %2307 = vmatprep.subr.mxu0 0.0
    %2308 = vmatpush2.msra.mxu0 0.0
    %2309 = vmatprep.subr.mxu0 0.0
    %2310 = vmatpush2.msra.mxu0 0.0
    %2311 = vmatprep.subr.mxu0 0.0
    %2312 = vmatpush2.msra.mxu0 0.0
    %2313 = vmatprep.subr.mxu0 0.0
    %2314 = vmatpush2.msra.mxu0 0.0
    %2315 = vmatprep.subr.mxu0 0.0
    %2316 = vmatpush2.msra.mxu0 0.0
    %2317 = vmatprep.subr.mxu0 0.0
    %2318 = vmatpush2.msra.mxu0 0.0
    %2319 = vmatprep.subr.mxu0 0.0
    %2320 = vmatpush2.msra.mxu0 0.0
    %2321 = vmatprep.subr.mxu0 0.0
    %2322 = vmatpush2.msra.mxu0 0.0
    %2323 = vmatprep.subr.mxu0 0.0
    %2324 = vmatpush2.msra.mxu0 0.0
    %2325 = vmatprep.subr.mxu0 0.0
    %2326 = vmatpush2.msra.mxu0 0.0
    %2327 = vmatprep.subr.mxu0 0.0
    %2328 = vmatpush2.msra.mxu0 0.0
    %2329 = vmatprep.subr.mxu0 0.0
    %2330 = vmatpush2.msra.mxu0 0.0
    %2331 = vmatprep.mubr.f32.mxu0 0.0
    %2332 = vmatmul.mubr.f32.gmra.mxu0 %v2262
    %v2333 = vpop.f32.mrf.mxu0
    %v2334 = vadd.f32 0.0, %v2333
    %v2335 = vpop.f32.mrf.mxu0
    %2336 = vmatprep.mubr.f32.mxu0 0.0
    %2337 = vmatmul.mubr.f32.gmra.mxu0 %v2265
    %v2338 = vpop.f32.mrf.mxu0
    %v2339 = vadd.f32 0.0, %v2338
    %v2340 = vpop.f32.mrf.mxu0
    %2341 = vdwg.mxu0
    %v2342 = vmul.f32 %v2334, %v1731
    %v2343 = vmul.f32 %v2339, %v1731
    %v2344 = vadd.f32 %v2342, 0.0
    %v2345 = vadd.f32 %v2343, 0.0
    %v2346 = vmul.f32 %v1720, %v1945
    %v2347 = vmul.f32 %v1725, %v1945
    %v2349 = vsel %vm1630, %v2346, 0
    %v2352 = vsel %vm1630, %v2347, 0
    %2354 = vmatprep.subr.mxu0 0.0
    %2355 = vmatpush1.xpose.msra.mxu0 0.0
    %2356 = vmatprep.subr.mxu0 0.0
    %2357 = vmatpush1.xpose.msra.mxu0 0.0
    %2358 = vmatprep.subr.mxu0 0.0
    %2359 = vmatpush1.xpose.msra.mxu0 0.0
    %2360 = vmatprep.subr.mxu0 0.0
    %2361 = vmatpush1.xpose.msra.mxu0 0.0
    %2362 = vmatprep.subr.mxu0 0.0
    %2363 = vmatpush1.xpose.msra.mxu0 0.0
    %2364 = vmatprep.subr.mxu0 0.0
    %2365 = vmatpush1.xpose.msra.mxu0 0.0
    %2366 = vmatprep.subr.mxu0 0.0
    %2367 = vmatpush1.xpose.msra.mxu0 0.0
    %2368 = vmatprep.subr.mxu0 0.0
    %2369 = vmatpush1.xpose.msra.mxu0 0.0
    %2370 = vmatprep.subr.mxu0 0.0
    %2371 = vmatpush1.xpose.msra.mxu0 0.0
    %2372 = vmatprep.subr.mxu0 0.0
    %2373 = vmatpush1.xpose.msra.mxu0 0.0
    %2374 = vmatprep.subr.mxu0 0.0
    %2375 = vmatpush1.xpose.msra.mxu0 0.0
    %2376 = vmatprep.subr.mxu0 0.0
    %2377 = vmatpush1.xpose.msra.mxu0 0.0
    %2378 = vmatprep.subr.mxu0 0.0
    %2379 = vmatpush1.xpose.msra.mxu0 0.0
    %2380 = vmatprep.subr.mxu0 0.0
    %2381 = vmatpush1.xpose.msra.mxu0 0.0
    %2382 = vmatprep.subr.mxu0 0.0
    %2383 = vmatpush1.xpose.msra.mxu0 %v2156
    %2384 = vmatprep.subr.mxu0 0.0
    %2385 = vmatpush1.xpose.msra.mxu0 %v2154
    %2386 = vmatprep.subr.mxu0 0.0
    %2387 = vmatpush2.xpose.msra.mxu0 0.0
    %2388 = vmatprep.subr.mxu0 0.0
    %2389 = vmatpush2.xpose.msra.mxu0 0.0
    %2390 = vmatprep.subr.mxu0 0.0
    %2391 = vmatpush2.xpose.msra.mxu0 0.0
    %2392 = vmatprep.subr.mxu0 0.0
    %2393 = vmatpush2.xpose.msra.mxu0 0.0
    %2394 = vmatprep.subr.mxu0 0.0
    %2395 = vmatpush2.xpose.msra.mxu0 0.0
    %2396 = vmatprep.subr.mxu0 0.0
    %2397 = vmatpush2.xpose.msra.mxu0 0.0
    %2398 = vmatprep.subr.mxu0 0.0
    %2399 = vmatpush2.xpose.msra.mxu0 0.0
    %2400 = vmatprep.subr.mxu0 0.0
    %2401 = vmatpush2.xpose.msra.mxu0 0.0
    %2402 = vmatprep.subr.mxu0 0.0
    %2403 = vmatpush2.xpose.msra.mxu0 0.0
    %2404 = vmatprep.subr.mxu0 0.0
    %2405 = vmatpush2.xpose.msra.mxu0 0.0
    %2406 = vmatprep.subr.mxu0 0.0
    %2407 = vmatpush2.xpose.msra.mxu0 0.0
    %2408 = vmatprep.subr.mxu0 0.0
    %2409 = vmatpush2.xpose.msra.mxu0 0.0
    %2410 = vmatprep.subr.mxu0 0.0
    %2411 = vmatpush2.xpose.msra.mxu0 0.0
    %2412 = vmatprep.subr.mxu0 0.0
    %2413 = vmatpush2.xpose.msra.mxu0 0.0
    %2414 = vmatprep.subr.mxu0 0.0
    %2415 = vmatpush2.xpose.msra.mxu0 0.0
    %2416 = vmatprep.subr.mxu0 0.0
    %2417 = vmatpush2.xpose.msra.mxu0 0.0
    %2418 = vmatprep.mubr.f32.mxu0 0.0
    %2419 = vmatmul.mubr.f32.gmra.mxu0 %v2349
    %v2420 = vpop.f32.mrf.mxu0
    %v2421 = vadd.f32 %v2141, %v2420
    %v2422 = vpop.f32.mrf.mxu0
    %2423 = vmatprep.mubr.f32.mxu0 0.0
    %2424 = vmatmul.mubr.f32.gmra.mxu0 %v2352
    %v2425 = vpop.f32.mrf.mxu0
    %v2426 = vadd.f32 %v2141, %v2425
    %v2427 = vpop.f32.mrf.mxu0
    %2428 = vdwg.mxu0
    %v2429 = vsel %vm236, %v2421, -inf
    %2430 = vmax.xlane.f32.xlu0 %v2429
    %v2431 = vpop.xlane.xlu0 %2430
    %v2432 = vsel %vm236, %v2426, -inf
    %2433 = vmax.xlane.f32.xlu0 %v2432
    %v2434 = vpop.xlane.xlu0 %2433
    %v2435 = vsub.f32 %v2421, %v2431
    %v2436 = vsub.f32 %v2426, %v2434
    %v2437 = vmul.f32 %v2435, 1.442695
    %v2438 = vpow.pop %v2437
    %v2439 = vmul.f32 %v2436, 1.442695
    %v2440 = vpow.pop %v2439
    %v2441 = vsel %vm236, %v2438, 0.0
    %2442 = vadd.xlane.f32.xlu0 %v2441
    %v2443 = vpop.xlane.xlu0 %2442
    %v2444 = vsel %vm236, %v2440, 0.0
    %2445 = vadd.xlane.f32.xlu0 %v2444
    %v2446 = vpop.xlane.xlu0 %2445
    %v2447 = vrcp.pop %v2443
    %v2448 = vrcp.pop %v2446
    %v2449 = vmul.f32 %v2438, %v2447
    %v2450 = vmul.f32 %v2440, %v2448
    %v2452 = vsel %vm236, %v2449, 0
    %v2455 = vsel %vm236, %v2450, 0
    %2457 = vmatprep.subr.mxu0 0.0
    %2458 = vmatpush1.msra.mxu0 0.0
    %2459 = vmatprep.subr.mxu0 0.0
    %2460 = vmatpush1.msra.mxu0 0.0
    %2461 = vmatprep.subr.mxu0 0.0
    %2462 = vmatpush1.msra.mxu0 0.0
    %2463 = vmatprep.subr.mxu0 0.0
    %2464 = vmatpush1.msra.mxu0 0.0
    %2465 = vmatprep.subr.mxu0 0.0
    %2466 = vmatpush1.msra.mxu0 0.0
    %2467 = vmatprep.subr.mxu0 0.0
    %2468 = vmatpush1.msra.mxu0 0.0
    %2469 = vmatprep.subr.mxu0 0.0
    %2470 = vmatpush1.msra.mxu0 0.0
    %2471 = vmatprep.subr.mxu0 0.0
    %2472 = vmatpush1.msra.mxu0 0.0
    %2473 = vmatprep.subr.mxu0 0.0
    %2474 = vmatpush1.msra.mxu0 0.0
    %2475 = vmatprep.subr.mxu0 0.0
    %2476 = vmatpush1.msra.mxu0 0.0
    %2477 = vmatprep.subr.mxu0 0.0
    %2478 = vmatpush1.msra.mxu0 0.0
    %2479 = vmatprep.subr.mxu0 0.0
    %2480 = vmatpush1.msra.mxu0 0.0
    %2481 = vmatprep.subr.mxu0 0.0
    %2482 = vmatpush1.msra.mxu0 0.0
    %2483 = vmatprep.subr.mxu0 0.0
    %2484 = vmatpush1.msra.mxu0 0.0
    %2485 = vmatprep.subr.mxu0 0.0
    %2486 = vmatpush1.msra.mxu0 %v2258
    %2487 = vmatprep.subr.mxu0 0.0
    %2488 = vmatpush1.msra.mxu0 %v2256
    %2489 = vmatprep.subr.mxu0 0.0
    %2490 = vmatpush2.msra.mxu0 0.0
    %2491 = vmatprep.subr.mxu0 0.0
    %2492 = vmatpush2.msra.mxu0 0.0
    %2493 = vmatprep.subr.mxu0 0.0
    %2494 = vmatpush2.msra.mxu0 0.0
    %2495 = vmatprep.subr.mxu0 0.0
    %2496 = vmatpush2.msra.mxu0 0.0
    %2497 = vmatprep.subr.mxu0 0.0
    %2498 = vmatpush2.msra.mxu0 0.0
    %2499 = vmatprep.subr.mxu0 0.0
    %2500 = vmatpush2.msra.mxu0 0.0
    %2501 = vmatprep.subr.mxu0 0.0
    %2502 = vmatpush2.msra.mxu0 0.0
    %2503 = vmatprep.subr.mxu0 0.0
    %2504 = vmatpush2.msra.mxu0 0.0
    %2505 = vmatprep.subr.mxu0 0.0
    %2506 = vmatpush2.msra.mxu0 0.0
    %2507 = vmatprep.subr.mxu0 0.0
    %2508 = vmatpush2.msra.mxu0 0.0
    %2509 = vmatprep.subr.mxu0 0.0
    %2510 = vmatpush2.msra.mxu0 0.0
    %2511 = vmatprep.subr.mxu0 0.0
    %2512 = vmatpush2.msra.mxu0 0.0
    %2513 = vmatprep.subr.mxu0 0.0
    %2514 = vmatpush2.msra.mxu0 0.0
    %2515 = vmatprep.subr.mxu0 0.0
    %2516 = vmatpush2.msra.mxu0 0.0
    %2517 = vmatprep.subr.mxu0 0.0
    %2518 = vmatpush2.msra.mxu0 0.0
    %2519 = vmatprep.subr.mxu0 0.0
    %2520 = vmatpush2.msra.mxu0 0.0
    %2521 = vmatprep.mubr.f32.mxu0 0.0
    %2522 = vmatmul.mubr.f32.gmra.mxu0 %v2452
    %v2523 = vpop.f32.mrf.mxu0
    %v2524 = vadd.f32 0.0, %v2523
    %v2525 = vpop.f32.mrf.mxu0
    %2526 = vmatprep.mubr.f32.mxu0 0.0
    %2527 = vmatmul.mubr.f32.gmra.mxu0 %v2455
    %v2528 = vpop.f32.mrf.mxu0
    %v2529 = vadd.f32 0.0, %v2528
    %v2530 = vpop.f32.mrf.mxu0
    %2531 = vdwg.mxu0
    %v2532 = vmul.f32 %v2524, %v1945
    %v2533 = vmul.f32 %v2529, %v1945
    %v2534 = vadd.f32 %v2344, %v2532
    %v2535 = vadd.f32 %v2345, %v2533
    %v2536 = vld [vmem:[#allocation13] sm:$0xff]
    %v2538 = vsel %vm1630, %v2134, 0
    %v2541 = vsel %vm1630, %v2135, 0
    %v2544 = vsel %vm1630, %v2534, 0
    %v2547 = vsel %vm1630, %v2535, 0
    %2549 = vmatprep.subr.mxu0 0.0
    %2550 = vmatpush1.msra.mxu0 0.0
    %2551 = vmatprep.subr.mxu0 0.0
    %2552 = vmatpush1.msra.mxu0 0.0
    %2553 = vmatprep.subr.mxu0 0.0
    %2554 = vmatpush1.msra.mxu0 0.0
    %2555 = vmatprep.subr.mxu0 0.0
    %2556 = vmatpush1.msra.mxu0 0.0
    %2557 = vmatprep.subr.mxu0 0.0
    %2558 = vmatpush1.msra.mxu0 0.0
    %2559 = vmatprep.subr.mxu0 0.0
    %2560 = vmatpush1.msra.mxu0 0.0
    %2561 = vmatprep.subr.mxu0 0.0
    %2562 = vmatpush1.msra.mxu0 0.0
    %2563 = vmatprep.subr.mxu0 0.0
    %2564 = vmatpush1.msra.mxu0 0.0
    %2565 = vmatprep.subr.mxu0 0.0
    %2566 = vmatpush1.msra.mxu0 0.0
    %2567 = vmatprep.subr.mxu0 0.0
    %2568 = vmatpush1.msra.mxu0 0.0
    %2569 = vmatprep.subr.mxu0 0.0
    %2570 = vmatpush1.msra.mxu0 0.0
    %2571 = vmatprep.subr.mxu0 0.0
    %2572 = vmatpush1.msra.mxu0 0.0
    %2573 = vmatprep.subr.mxu0 0.0
    %2574 = vmatpush1.msra.mxu0 0.0
    %2575 = vmatprep.subr.mxu0 0.0
    %2576 = vmatpush1.msra.mxu0 0.0
    %2577 = vmatprep.subr.mxu0 0.0
    %2578 = vmatpush1.msra.mxu0 0.0
    %2579 = vmatprep.subr.mxu0 0.0
    %2580 = vmatpush1.msra.mxu0 %v2536
    %2581 = vmatprep.subr.mxu0 0.0
    %2582 = vmatpush2.msra.mxu0 0.0
    %2583 = vmatprep.subr.mxu0 0.0
    %2584 = vmatpush2.msra.mxu0 0.0
    %2585 = vmatprep.subr.mxu0 0.0
    %2586 = vmatpush2.msra.mxu0 0.0
    %2587 = vmatprep.subr.mxu0 0.0
    %2588 = vmatpush2.msra.mxu0 0.0
    %2589 = vmatprep.subr.mxu0 0.0
    %2590 = vmatpush2.msra.mxu0 0.0
    %2591 = vmatprep.subr.mxu0 0.0
    %2592 = vmatpush2.msra.mxu0 0.0
    %2593 = vmatprep.subr.mxu0 0.0
    %2594 = vmatpush2.msra.mxu0 0.0
    %2595 = vmatprep.subr.mxu0 0.0
    %2596 = vmatpush2.msra.mxu0 0.0
    %2597 = vmatprep.subr.mxu0 0.0
    %2598 = vmatpush2.msra.mxu0 0.0
    %2599 = vmatprep.subr.mxu0 0.0
    %2600 = vmatpush2.msra.mxu0 0.0
    %2601 = vmatprep.subr.mxu0 0.0
    %2602 = vmatpush2.msra.mxu0 0.0
    %2603 = vmatprep.subr.mxu0 0.0
    %2604 = vmatpush2.msra.mxu0 0.0
    %2605 = vmatprep.subr.mxu0 0.0
    %2606 = vmatpush2.msra.mxu0 0.0
    %2607 = vmatprep.subr.mxu0 0.0
    %2608 = vmatpush2.msra.mxu0 0.0
    %2609 = vmatprep.subr.mxu0 0.0
    %2610 = vmatpush2.msra.mxu0 0.0
    %2611 = vmatprep.subr.mxu0 0.0
    %2612 = vmatpush2.msra.mxu0 0.0
    %2613 = vmatprep.mubr.f32.mxu0 0.0
    %2614 = vmatmul.mubr.f32.gmra.mxu0 %v2538
    %v2615 = vpop.f32.mrf.mxu0
    %v2616 = vadd.f32 0.0, %v2615
    %v2617 = vpop.f32.mrf.mxu0
    %2618 = vmatprep.mubr.f32.mxu0 0.0
    %2619 = vmatmul.mubr.f32.gmra.mxu0 %v2541
    %v2620 = vpop.f32.mrf.mxu0
    %v2621 = vadd.f32 0.0, %v2620
    %v2622 = vpop.f32.mrf.mxu0
    %2623 = vmatprep.mubr.f32.mxu0 0.0
    %2624 = vmatmul.mubr.f32.gmra.mxu0 %v2544
    %v2625 = vpop.f32.mrf.mxu0
    %v2626 = vadd.f32 0.0, %v2625
    %v2627 = vpop.f32.mrf.mxu0
    %2628 = vmatprep.mubr.f32.mxu0 0.0
    %2629 = vmatmul.mubr.f32.gmra.mxu0 %v2547
    %v2630 = vpop.f32.mrf.mxu0
    %v2631 = vadd.f32 0.0, %v2630
    %v2632 = vpop.f32.mrf.mxu0
    %2633 = vdwg.mxu0
    %v2634 = vadd.f32 %v1619, %v2616
    %v2635 = vadd.f32 %v1620, %v2621
    %v2636 = vadd.f32 %v1621, %v2626
    %v2637 = vadd.f32 %v1622, %v2631
    %v2638 = vlaneseq
    %v2639 = vshrl.u32 %v2638, 7
    %v2640 = vsub.s32 1, %v2639
    %v2641 = vrot.slane %v1624, %v2640
    %v2642 = vadd.f32 %v2634, %v2641
    %v2643 = vadd.f32 %v2635, %v2641
    %v2644 = vadd.f32 %v2636, %v2641
    %v2645 = vadd.f32 %v2637, %v2641
    %v2646 = vsel %vm1630, %v2642, 0.0
    %2647 = vadd.xlane.f32.xlu0 %v2646
    %v2648 = vpop.xlane.xlu0 %2647
    %v2649 = vsel %vm1630, %v2643, 0.0
    %2650 = vadd.xlane.f32.xlu0 %v2649
    %v2651 = vpop.xlane.xlu0 %2650
    %v2652 = vsel %vm1630, %v2644, 0.0
    %2653 = vadd.xlane.f32.xlu0 %v2652
    %v2654 = vpop.xlane.xlu0 %2653
    %v2655 = vsel %vm1630, %v2645, 0.0
    %2656 = vadd.xlane.f32.xlu0 %v2655
    %v2657 = vpop.xlane.xlu0 %2656
    %v2658 = vrcp.pop 8.0
    %v2659 = vmul.f32 %v2648, %v2658
    %v2660 = vmul.f32 %v2651, %v2658
    %v2661 = vmul.f32 %v2654, %v2658
    %v2662 = vmul.f32 %v2657, %v2658
    %v2663 = vsub.f32 %v2642, %v2659
    %v2664 = vsub.f32 %v2643, %v2660
    %v2665 = vsub.f32 %v2644, %v2661
    %v2666 = vsub.f32 %v2645, %v2662
    %v2667 = vmul.f32 %v2663, %v2663
    %v2668 = vmul.f32 %v2664, %v2664
    %v2669 = vmul.f32 %v2665, %v2665
    %v2670 = vmul.f32 %v2666, %v2666
    %v2671 = vsel %vm1630, %v2667, 0.0
    %2672 = vadd.xlane.f32.xlu0 %v2671
    %v2673 = vpop.xlane.xlu0 %2672
    %v2674 = vsel %vm1630, %v2668, 0.0
    %2675 = vadd.xlane.f32.xlu0 %v2674
    %v2676 = vpop.xlane.xlu0 %2675
    %v2677 = vsel %vm1630, %v2669, 0.0
    %2678 = vadd.xlane.f32.xlu0 %v2677
    %v2679 = vpop.xlane.xlu0 %2678
    %v2680 = vsel %vm1630, %v2670, 0.0
    %2681 = vadd.xlane.f32.xlu0 %v2680
    %v2682 = vpop.xlane.xlu0 %2681
    %v2683 = vmul.f32 %v2673, %v2658
    %v2684 = vmul.f32 %v2676, %v2658
    %v2685 = vmul.f32 %v2679, %v2658
    %v2686 = vmul.f32 %v2682, %v2658
    %v2687 = vadd.f32 %v2683, 1e-05
    %v2688 = vadd.f32 %v2684, 1e-05
    %v2689 = vadd.f32 %v2685, 1e-05
    %v2690 = vadd.f32 %v2686, 1e-05
    %v2691 = vrsqrt.pop %v2687
    %v2692 = vrsqrt.pop %v2688
    %v2693 = vrsqrt.pop %v2689
    %v2694 = vrsqrt.pop %v2690
    %v2695 = vmul.f32 %v2663, %v2691
    %v2696 = vmul.f32 %v2664, %v2692
    %v2697 = vmul.f32 %v2665, %v2693
    %v2698 = vmul.f32 %v2666, %v2694
    %v2699 = vlaneseq
    %v2700 = vshrl.u32 %v2699, 7
    %v2701 = vsub.s32 2, %v2700
    %v2702 = vrot.slane %v1624, %v2701
    %v2703 = vmul.f32 %v2695, %v2702
    %v2704 = vmul.f32 %v2696, %v2702
    %v2705 = vmul.f32 %v2697, %v2702
    %v2706 = vmul.f32 %v2698, %v2702
    %v2707 = vlaneseq
    %v2708 = vshrl.u32 %v2707, 7
    %v2709 = vsub.s32 3, %v2708
    %v2710 = vrot.slane %v1624, %v2709
    %v2711 = vadd.f32 %v2703, %v2710
    %v2712 = vadd.f32 %v2704, %v2710
    %v2713 = vadd.f32 %v2705, %v2710
    %v2714 = vadd.f32 %v2706, %v2710
    %v2715 = vld [vmem:[#allocation15] sm:$0xff]
    %v2716 = vlaneseq
    %v2717 = vshrl.u32 %v2716, 7
    %v2718 = vsub.s32 4, %v2717
    %v2719 = vrot.slane %v1624, %v2718
    %v2721 = vsel %vm1630, %v2711, 0
    %v2724 = vsel %vm1630, %v2712, 0
    %v2727 = vsel %vm1630, %v2713, 0
    %v2730 = vsel %vm1630, %v2714, 0
    %2732 = vmatprep.subr.mxu0 0.0
    %2733 = vmatpush1.msra.mxu0 0.0
    %2734 = vmatprep.subr.mxu0 0.0
    %2735 = vmatpush1.msra.mxu0 0.0
    %2736 = vmatprep.subr.mxu0 0.0
    %2737 = vmatpush1.msra.mxu0 0.0
    %2738 = vmatprep.subr.mxu0 0.0
    %2739 = vmatpush1.msra.mxu0 0.0
    %2740 = vmatprep.subr.mxu0 0.0
    %2741 = vmatpush1.msra.mxu0 0.0
    %2742 = vmatprep.subr.mxu0 0.0
    %2743 = vmatpush1.msra.mxu0 0.0
    %2744 = vmatprep.subr.mxu0 0.0
    %2745 = vmatpush1.msra.mxu0 0.0
    %2746 = vmatprep.subr.mxu0 0.0
    %2747 = vmatpush1.msra.mxu0 0.0
    %2748 = vmatprep.subr.mxu0 0.0
    %2749 = vmatpush1.msra.mxu0 0.0
    %2750 = vmatprep.subr.mxu0 0.0
    %2751 = vmatpush1.msra.mxu0 0.0
    %2752 = vmatprep.subr.mxu0 0.0
    %2753 = vmatpush1.msra.mxu0 0.0
    %2754 = vmatprep.subr.mxu0 0.0
    %2755 = vmatpush1.msra.mxu0 0.0
    %2756 = vmatprep.subr.mxu0 0.0
    %2757 = vmatpush1.msra.mxu0 0.0
    %2758 = vmatprep.subr.mxu0 0.0
    %2759 = vmatpush1.msra.mxu0 0.0
    %2760 = vmatprep.subr.mxu0 0.0
    %2761 = vmatpush1.msra.mxu0 0.0
    %2762 = vmatprep.subr.mxu0 0.0
    %2763 = vmatpush1.msra.mxu0 %v2715
    %2764 = vmatprep.subr.mxu0 0.0
    %2765 = vmatpush2.msra.mxu0 0.0
    %2766 = vmatprep.subr.mxu0 0.0
    %2767 = vmatpush2.msra.mxu0 0.0
    %2768 = vmatprep.subr.mxu0 0.0
    %2769 = vmatpush2.msra.mxu0 0.0
    %2770 = vmatprep.subr.mxu0 0.0
    %2771 = vmatpush2.msra.mxu0 0.0
    %2772 = vmatprep.subr.mxu0 0.0
    %2773 = vmatpush2.msra.mxu0 0.0
    %2774 = vmatprep.subr.mxu0 0.0
    %2775 = vmatpush2.msra.mxu0 0.0
    %2776 = vmatprep.subr.mxu0 0.0
    %2777 = vmatpush2.msra.mxu0 0.0
    %2778 = vmatprep.subr.mxu0 0.0
    %2779 = vmatpush2.msra.mxu0 0.0
    %2780 = vmatprep.subr.mxu0 0.0
    %2781 = vmatpush2.msra.mxu0 0.0
    %2782 = vmatprep.subr.mxu0 0.0
    %2783 = vmatpush2.msra.mxu0 0.0
    %2784 = vmatprep.subr.mxu0 0.0
    %2785 = vmatpush2.msra.mxu0 0.0
    %2786 = vmatprep.subr.mxu0 0.0
    %2787 = vmatpush2.msra.mxu0 0.0
    %2788 = vmatprep.subr.mxu0 0.0
    %2789 = vmatpush2.msra.mxu0 0.0
    %2790 = vmatprep.subr.mxu0 0.0
    %2791 = vmatpush2.msra.mxu0 0.0
    %2792 = vmatprep.subr.mxu0 0.0
    %2793 = vmatpush2.msra.mxu0 0.0
    %2794 = vmatprep.subr.mxu0 0.0
    %2795 = vmatpush2.msra.mxu0 0.0
    %2796 = vmatprep.mubr.f32.mxu0 0.0
    %2797 = vmatmul.mubr.f32.gmra.mxu0 %v2721
    %v2798 = vpop.f32.mrf.mxu0
    %v2799 = vadd.f32 %v2719, %v2798
    %v2800 = vpop.f32.mrf.mxu0
    %2801 = vmatprep.mubr.f32.mxu0 0.0
    %2802 = vmatmul.mubr.f32.gmra.mxu0 %v2724
    %v2803 = vpop.f32.mrf.mxu0
    %v2804 = vadd.f32 %v2719, %v2803
    %v2805 = vpop.f32.mrf.mxu0
    %2806 = vmatprep.mubr.f32.mxu0 0.0
    %2807 = vmatmul.mubr.f32.gmra.mxu0 %v2727
    %v2808 = vpop.f32.mrf.mxu0
    %v2809 = vadd.f32 %v2719, %v2808
    %v2810 = vpop.f32.mrf.mxu0
    %2811 = vmatprep.mubr.f32.mxu0 0.0
    %2812 = vmatmul.mubr.f32.gmra.mxu0 %v2730
    %v2813 = vpop.f32.mrf.mxu0
    %v2814 = vadd.f32 %v2719, %v2813
    %v2815 = vpop.f32.mrf.mxu0
    %2816 = vdwg.mxu0
    %v2817 = vmax.f32 %v2799, 0.0
    %v2818 = vmax.f32 %v2804, 0.0
    %v2819 = vmax.f32 %v2809, 0.0
    %v2820 = vmax.f32 %v2814, 0.0
    %v2821 = vld [vmem:[%s12] sm:$0xff]
    %v2822 = vld [vmem:[%s12 + $0x8] sm:$0xff]
    %v2823 = vld [vmem:[%s12 + $0x10] sm:$0xff]
    %v2824 = vld [vmem:[%s12 + $0x18] sm:$0xff]
    %v2826 = vsel %vm1437, %v2817, 0
    %v2829 = vsel %vm1437, %v2818, 0
    %v2832 = vsel %vm1437, %v2819, 0
    %v2835 = vsel %vm1437, %v2820, 0
    %2837 = vmatprep.subr.mxu0 0.0
    %2838 = vmatpush1.msra.mxu0 0.0
    %2839 = vmatprep.subr.mxu0 0.0
    %2840 = vmatpush1.msra.mxu0 0.0
    %2841 = vmatprep.subr.mxu0 0.0
    %2842 = vmatpush1.msra.mxu0 0.0
    %2843 = vmatprep.subr.mxu0 0.0
    %2844 = vmatpush1.msra.mxu0 0.0
    %2845 = vmatprep.subr.mxu0 0.0
    %2846 = vmatpush1.msra.mxu0 0.0
    %2847 = vmatprep.subr.mxu0 0.0
    %2848 = vmatpush1.msra.mxu0 0.0
    %2849 = vmatprep.subr.mxu0 0.0
    %2850 = vmatpush1.msra.mxu0 0.0
    %2851 = vmatprep.subr.mxu0 0.0
    %2852 = vmatpush1.msra.mxu0 0.0
    %2853 = vmatprep.subr.mxu0 0.0
    %2854 = vmatpush1.msra.mxu0 0.0
    %2855 = vmatprep.subr.mxu0 0.0
    %2856 = vmatpush1.msra.mxu0 0.0
    %2857 = vmatprep.subr.mxu0 0.0
    %2858 = vmatpush1.msra.mxu0 0.0
    %2859 = vmatprep.subr.mxu0 0.0
    %2860 = vmatpush1.msra.mxu0 0.0
    %2861 = vmatprep.subr.mxu0 0.0
    %2862 = vmatpush1.msra.mxu0 %v2824
    %2863 = vmatprep.subr.mxu0 0.0
    %2864 = vmatpush1.msra.mxu0 %v2823
    %2865 = vmatprep.subr.mxu0 0.0
    %2866 = vmatpush1.msra.mxu0 %v2822
    %2867 = vmatprep.subr.mxu0 0.0
    %2868 = vmatpush1.msra.mxu0 %v2821
    %2869 = vmatprep.subr.mxu0 0.0
    %2870 = vmatpush2.msra.mxu0 0.0
    %2871 = vmatprep.subr.mxu0 0.0
    %2872 = vmatpush2.msra.mxu0 0.0
    %2873 = vmatprep.subr.mxu0 0.0
    %2874 = vmatpush2.msra.mxu0 0.0
    %2875 = vmatprep.subr.mxu0 0.0
    %2876 = vmatpush2.msra.mxu0 0.0
    %2877 = vmatprep.subr.mxu0 0.0
    %2878 = vmatpush2.msra.mxu0 0.0
    %2879 = vmatprep.subr.mxu0 0.0
    %2880 = vmatpush2.msra.mxu0 0.0
    %2881 = vmatprep.subr.mxu0 0.0
    %2882 = vmatpush2.msra.mxu0 0.0
    %2883 = vmatprep.subr.mxu0 0.0
    %2884 = vmatpush2.msra.mxu0 0.0
    %2885 = vmatprep.subr.mxu0 0.0
    %2886 = vmatpush2.msra.mxu0 0.0
    %2887 = vmatprep.subr.mxu0 0.0
    %2888 = vmatpush2.msra.mxu0 0.0
    %2889 = vmatprep.subr.mxu0 0.0
    %2890 = vmatpush2.msra.mxu0 0.0
    %2891 = vmatprep.subr.mxu0 0.0
    %2892 = vmatpush2.msra.mxu0 0.0
    %2893 = vmatprep.subr.mxu0 0.0
    %2894 = vmatpush2.msra.mxu0 0.0
    %2895 = vmatprep.subr.mxu0 0.0
    %2896 = vmatpush2.msra.mxu0 0.0
    %2897 = vmatprep.subr.mxu0 0.0
    %2898 = vmatpush2.msra.mxu0 0.0
    %2899 = vmatprep.subr.mxu0 0.0
    %2900 = vmatpush2.msra.mxu0 0.0
    %2901 = vmatprep.mubr.f32.mxu0 0.0
    %2902 = vmatmul.mubr.f32.gmra.mxu0 %v2826
    %v2903 = vpop.f32.mrf.mxu0
    %v2904 = vadd.f32 0.0, %v2903
    %v2905 = vpop.f32.mrf.mxu0
    %2906 = vmatprep.mubr.f32.mxu0 0.0
    %2907 = vmatmul.mubr.f32.gmra.mxu0 %v2829
    %v2908 = vpop.f32.mrf.mxu0
    %v2909 = vadd.f32 0.0, %v2908
    %v2910 = vpop.f32.mrf.mxu0
    %2911 = vmatprep.mubr.f32.mxu0 0.0
    %2912 = vmatmul.mubr.f32.gmra.mxu0 %v2832
    %v2913 = vpop.f32.mrf.mxu0
    %v2914 = vadd.f32 0.0, %v2913
    %v2915 = vpop.f32.mrf.mxu0
    %2916 = vmatprep.mubr.f32.mxu0 0.0
    %2917 = vmatmul.mubr.f32.gmra.mxu0 %v2835
    %v2918 = vpop.f32.mrf.mxu0
    %v2919 = vadd.f32 0.0, %v2918
    %v2920 = vpop.f32.mrf.mxu0
    %2921 = vdwg.mxu0
    %v2922 = vadd.f32 %v2711, %v2904
    %v2923 = vadd.f32 %v2712, %v2909
    %v2924 = vadd.f32 %v2713, %v2914
    %v2925 = vadd.f32 %v2714, %v2919
    %v2926 = vlaneseq
    %v2927 = vshrl.u32 %v2926, 7
    %v2928 = vsub.s32 5, %v2927
    %v2929 = vrot.slane %v1624, %v2928
    %v2930 = vadd.f32 %v2922, %v2929
    %v2931 = vadd.f32 %v2923, %v2929
    %v2932 = vadd.f32 %v2924, %v2929
    %v2933 = vadd.f32 %v2925, %v2929
    %v2934 = vsel %vm1630, %v2930, 0.0
    %2935 = vadd.xlane.f32.xlu0 %v2934
    %v2936 = vpop.xlane.xlu0 %2935
    %v2937 = vsel %vm1630, %v2931, 0.0
    %2938 = vadd.xlane.f32.xlu0 %v2937
    %v2939 = vpop.xlane.xlu0 %2938
    %v2940 = vsel %vm1630, %v2932, 0.0
    %2941 = vadd.xlane.f32.xlu0 %v2940
    %v2942 = vpop.xlane.xlu0 %2941
    %v2943 = vsel %vm1630, %v2933, 0.0
    %2944 = vadd.xlane.f32.xlu0 %v2943
    %v2945 = vpop.xlane.xlu0 %2944
    %v2946 = vmul.f32 %v2936, %v2658
    %v2947 = vmul.f32 %v2939, %v2658
    %v2948 = vmul.f32 %v2942, %v2658
    %v2949 = vmul.f32 %v2945, %v2658
    %v2950 = vsub.f32 %v2930, %v2946
    %v2951 = vsub.f32 %v2931, %v2947
    %v2952 = vsub.f32 %v2932, %v2948
    %v2953 = vsub.f32 %v2933, %v2949
    %v2954 = vmul.f32 %v2950, %v2950
    %v2955 = vmul.f32 %v2951, %v2951
    %v2956 = vmul.f32 %v2952, %v2952
    %v2957 = vmul.f32 %v2953, %v2953
    %v2958 = vsel %vm1630, %v2954, 0.0
    %2959 = vadd.xlane.f32.xlu0 %v2958
    %v2960 = vpop.xlane.xlu0 %2959
    %v2961 = vsel %vm1630, %v2955, 0.0
    %2962 = vadd.xlane.f32.xlu0 %v2961
    %v2963 = vpop.xlane.xlu0 %2962
    %v2964 = vsel %vm1630, %v2956, 0.0
    %2965 = vadd.xlane.f32.xlu0 %v2964
    %v2966 = vpop.xlane.xlu0 %2965
    %v2967 = vsel %vm1630, %v2957, 0.0
    %2968 = vadd.xlane.f32.xlu0 %v2967
    %v2969 = vpop.xlane.xlu0 %2968
    %v2970 = vmul.f32 %v2960, %v2658
    %v2971 = vmul.f32 %v2963, %v2658
    %v2972 = vmul.f32 %v2966, %v2658
    %v2973 = vmul.f32 %v2969, %v2658
    %v2974 = vadd.f32 %v2970, 1e-05
    %v2975 = vadd.f32 %v2971, 1e-05
    %v2976 = vadd.f32 %v2972, 1e-05
    %v2977 = vadd.f32 %v2973, 1e-05
    %v2978 = vrsqrt.pop %v2974
    %v2979 = vrsqrt.pop %v2975
    %v2980 = vrsqrt.pop %v2976
    %v2981 = vrsqrt.pop %v2977
    %v2982 = vmul.f32 %v2950, %v2978
    %v2983 = vmul.f32 %v2951, %v2979
    %v2984 = vmul.f32 %v2952, %v2980
    %v2985 = vmul.f32 %v2953, %v2981
    %v2986 = vlaneseq
    %v2987 = vshrl.u32 %v2986, 7
    %v2988 = vsub.s32 6, %v2987
    %v2989 = vrot.slane %v1624, %v2988
    %v2990 = vmul.f32 %v2982, %v2989
    %v2991 = vmul.f32 %v2983, %v2989
    %v2992 = vmul.f32 %v2984, %v2989
    %v2993 = vmul.f32 %v2985, %v2989
    %v2994 = vlaneseq
    %v2995 = vshrl.u32 %v2994, 7
    %v2996 = vsub.s32 7, %v2995
    %v2997 = vrot.slane %v1624, %v2996
    %v2998 = vadd.f32 %v2990, %v2997
    %v2999 = vadd.f32 %v2991, %v2997
    %v3000 = vadd.f32 %v2992, %v2997
    %v3001 = vadd.f32 %v2993, %v2997
    %v3002 = vld [vmem:[%s18] sm:$0xff]
    %v3003 = vld [vmem:[#allocation18] sm:$0xff]
    %v3004 = vlaneseq
    %v3005 = vshrl.u32 %v3004, 7
    %v3006 = vsub.s32 0, %v3005
    %v3007 = vrot.slane %v3002, %v3006
    %v3009 = vsel %vm1630, %v2998, 0
    %v3012 = vsel %vm1630, %v2999, 0
    %v3015 = vsel %vm1630, %v3000, 0
    %v3018 = vsel %vm1630, %v3001, 0
    %3020 = vmatprep.subr.mxu0 0.0
    %3021 = vmatpush1.msra.mxu0 0.0
    %3022 = vmatprep.subr.mxu0 0.0
    %3023 = vmatpush1.msra.mxu0 0.0
    %3024 = vmatprep.subr.mxu0 0.0
    %3025 = vmatpush1.msra.mxu0 0.0
    %3026 = vmatprep.subr.mxu0 0.0
    %3027 = vmatpush1.msra.mxu0 0.0
    %3028 = vmatprep.subr.mxu0 0.0
    %3029 = vmatpush1.msra.mxu0 0.0
    %3030 = vmatprep.subr.mxu0 0.0
    %3031 = vmatpush1.msra.mxu0 0.0
    %3032 = vmatprep.subr.mxu0 0.0
    %3033 = vmatpush1.msra.mxu0 0.0
    %3034 = vmatprep.subr.mxu0 0.0
    %3035 = vmatpush1.msra.mxu0 0.0
    %3036 = vmatprep.subr.mxu0 0.0
    %3037 = vmatpush1.msra.mxu0 0.0
    %3038 = vmatprep.subr.mxu0 0.0
    %3039 = vmatpush1.msra.mxu0 0.0
    %3040 = vmatprep.subr.mxu0 0.0
    %3041 = vmatpush1.msra.mxu0 0.0
    %3042 = vmatprep.subr.mxu0 0.0
    %3043 = vmatpush1.msra.mxu0 0.0
    %3044 = vmatprep.subr.mxu0 0.0
    %3045 = vmatpush1.msra.mxu0 0.0
    %3046 = vmatprep.subr.mxu0 0.0
    %3047 = vmatpush1.msra.mxu0 0.0
    %3048 = vmatprep.subr.mxu0 0.0
    %3049 = vmatpush1.msra.mxu0 0.0
    %3050 = vmatprep.subr.mxu0 0.0
    %3051 = vmatpush1.msra.mxu0 %v3003
    %3052 = vmatprep.subr.mxu0 0.0
    %3053 = vmatpush2.msra.mxu0 0.0
    %3054 = vmatprep.subr.mxu0 0.0
    %3055 = vmatpush2.msra.mxu0 0.0
    %3056 = vmatprep.subr.mxu0 0.0
    %3057 = vmatpush2.msra.mxu0 0.0
    %3058 = vmatprep.subr.mxu0 0.0
    %3059 = vmatpush2.msra.mxu0 0.0
    %3060 = vmatprep.subr.mxu0 0.0
    %3061 = vmatpush2.msra.mxu0 0.0
    %3062 = vmatprep.subr.mxu0 0.0
    %3063 = vmatpush2.msra.mxu0 0.0
    %3064 = vmatprep.subr.mxu0 0.0
    %3065 = vmatpush2.msra.mxu0 0.0
    %3066 = vmatprep.subr.mxu0 0.0
    %3067 = vmatpush2.msra.mxu0 0.0
    %3068 = vmatprep.subr.mxu0 0.0
    %3069 = vmatpush2.msra.mxu0 0.0
    %3070 = vmatprep.subr.mxu0 0.0
    %3071 = vmatpush2.msra.mxu0 0.0
    %3072 = vmatprep.subr.mxu0 0.0
    %3073 = vmatpush2.msra.mxu0 0.0
    %3074 = vmatprep.subr.mxu0 0.0
    %3075 = vmatpush2.msra.mxu0 0.0
    %3076 = vmatprep.subr.mxu0 0.0
    %3077 = vmatpush2.msra.mxu0 0.0
    %3078 = vmatprep.subr.mxu0 0.0
    %3079 = vmatpush2.msra.mxu0 0.0
    %3080 = vmatprep.subr.mxu0 0.0
    %3081 = vmatpush2.msra.mxu0 0.0
    %3082 = vmatprep.subr.mxu0 0.0
    %3083 = vmatpush2.msra.mxu0 0.0
    %3084 = vmatprep.mubr.f32.mxu0 0.0
    %3085 = vmatmul.mubr.f32.gmra.mxu0 %v3009
    %v3086 = vpop.f32.mrf.mxu0
    %v3087 = vadd.f32 %v3007, %v3086
    %v3088 = vpop.f32.mrf.mxu0
    %3089 = vmatprep.mubr.f32.mxu0 0.0
    %3090 = vmatmul.mubr.f32.gmra.mxu0 %v3012
    %v3091 = vpop.f32.mrf.mxu0
    %v3092 = vadd.f32 %v3007, %v3091
    %v3093 = vpop.f32.mrf.mxu0
    %3094 = vmatprep.mubr.f32.mxu0 0.0
    %3095 = vmatmul.mubr.f32.gmra.mxu0 %v3015
    %v3096 = vpop.f32.mrf.mxu0
    %v3097 = vadd.f32 %v3007, %v3096
    %v3098 = vpop.f32.mrf.mxu0
    %3099 = vmatprep.mubr.f32.mxu0 0.0
    %3100 = vmatmul.mubr.f32.gmra.mxu0 %v3018
    %v3101 = vpop.f32.mrf.mxu0
    %v3102 = vadd.f32 %v3007, %v3101
    %v3103 = vpop.f32.mrf.mxu0
    %3104 = vdwg.mxu0
    %v3105 = vmul.f32 %v3087, %v1731
    %v3106 = vmul.f32 %v3092, %v1731
    %3109 = vrot.lane.b32.xlu0 %v3087, 120
    %v3110 = vpop.permute.xlu0 %3109
    %3111 = vrot.lane.b32.xlu0 %v3092, 120
    %v3112 = vpop.permute.xlu0 %3111
    %v3114 = vsel %vm1630, %v3105, 0
    %v3117 = vsel %vm1630, %v3106, 0
    %v3119 = vsel %vm1630, %v3110, 0
    %v3121 = vsel %vm1630, %v3112, 0
    %3123 = vmatprep.subr.mxu0 0.0
    %3124 = vmatpush1.xpose.msra.mxu0 0.0
    %3125 = vmatprep.subr.mxu0 0.0
    %3126 = vmatpush1.xpose.msra.mxu0 0.0
    %3127 = vmatprep.subr.mxu0 0.0
    %3128 = vmatpush1.xpose.msra.mxu0 0.0
    %3129 = vmatprep.subr.mxu0 0.0
    %3130 = vmatpush1.xpose.msra.mxu0 0.0
    %3131 = vmatprep.subr.mxu0 0.0
    %3132 = vmatpush1.xpose.msra.mxu0 0.0
    %3133 = vmatprep.subr.mxu0 0.0
    %3134 = vmatpush1.xpose.msra.mxu0 0.0
    %3135 = vmatprep.subr.mxu0 0.0
    %3136 = vmatpush1.xpose.msra.mxu0 0.0
    %3137 = vmatprep.subr.mxu0 0.0
    %3138 = vmatpush1.xpose.msra.mxu0 0.0
    %3139 = vmatprep.subr.mxu0 0.0
    %3140 = vmatpush1.xpose.msra.mxu0 0.0
    %3141 = vmatprep.subr.mxu0 0.0
    %3142 = vmatpush1.xpose.msra.mxu0 0.0
    %3143 = vmatprep.subr.mxu0 0.0
    %3144 = vmatpush1.xpose.msra.mxu0 0.0
    %3145 = vmatprep.subr.mxu0 0.0
    %3146 = vmatpush1.xpose.msra.mxu0 0.0
    %3147 = vmatprep.subr.mxu0 0.0
    %3148 = vmatpush1.xpose.msra.mxu0 0.0
    %3149 = vmatprep.subr.mxu0 0.0
    %3150 = vmatpush1.xpose.msra.mxu0 0.0
    %3151 = vmatprep.subr.mxu0 0.0
    %3152 = vmatpush1.xpose.msra.mxu0 %v3121
    %3153 = vmatprep.subr.mxu0 0.0
    %3154 = vmatpush1.xpose.msra.mxu0 %v3119
    %3155 = vmatprep.subr.mxu0 0.0
    %3156 = vmatpush2.xpose.msra.mxu0 0.0
    %3157 = vmatprep.subr.mxu0 0.0
    %3158 = vmatpush2.xpose.msra.mxu0 0.0
    %3159 = vmatprep.subr.mxu0 0.0
    %3160 = vmatpush2.xpose.msra.mxu0 0.0
    %3161 = vmatprep.subr.mxu0 0.0
    %3162 = vmatpush2.xpose.msra.mxu0 0.0
    %3163 = vmatprep.subr.mxu0 0.0
    %3164 = vmatpush2.xpose.msra.mxu0 0.0
    %3165 = vmatprep.subr.mxu0 0.0
    %3166 = vmatpush2.xpose.msra.mxu0 0.0
    %3167 = vmatprep.subr.mxu0 0.0
    %3168 = vmatpush2.xpose.msra.mxu0 0.0
    %3169 = vmatprep.subr.mxu0 0.0
    %3170 = vmatpush2.xpose.msra.mxu0 0.0
    %3171 = vmatprep.subr.mxu0 0.0
    %3172 = vmatpush2.xpose.msra.mxu0 0.0
    %3173 = vmatprep.subr.mxu0 0.0
    %3174 = vmatpush2.xpose.msra.mxu0 0.0
    %3175 = vmatprep.subr.mxu0 0.0
    %3176 = vmatpush2.xpose.msra.mxu0 0.0
    %3177 = vmatprep.subr.mxu0 0.0
    %3178 = vmatpush2.xpose.msra.mxu0 0.0
    %3179 = vmatprep.subr.mxu0 0.0
    %3180 = vmatpush2.xpose.msra.mxu0 0.0
    %3181 = vmatprep.subr.mxu0 0.0
    %3182 = vmatpush2.xpose.msra.mxu0 0.0
    %3183 = vmatprep.subr.mxu0 0.0
    %3184 = vmatpush2.xpose.msra.mxu0 0.0
    %3185 = vmatprep.subr.mxu0 0.0
    %3186 = vmatpush2.xpose.msra.mxu0 0.0
    %3187 = vmatprep.mubr.f32.mxu0 0.0
    %3188 = vmatmul.mubr.f32.gmra.mxu0 %v3114
    %v3189 = vpop.f32.mrf.mxu0
    %v3190 = vadd.f32 %v1737, %v3189
    %v3191 = vpop.f32.mrf.mxu0
    %3192 = vmatprep.mubr.f32.mxu0 0.0
    %3193 = vmatmul.mubr.f32.gmra.mxu0 %v3117
    %v3194 = vpop.f32.mrf.mxu0
    %v3195 = vadd.f32 %v1737, %v3194
    %v3196 = vpop.f32.mrf.mxu0
    %3197 = vdwg.mxu0
    %v3198 = vsel %vm236, %v3190, -inf
    %3199 = vmax.xlane.f32.xlu0 %v3198
    %v3200 = vpop.xlane.xlu0 %3199
    %v3201 = vsel %vm236, %v3195, -inf
    %3202 = vmax.xlane.f32.xlu0 %v3201
    %v3203 = vpop.xlane.xlu0 %3202
    %v3204 = vsub.f32 %v3190, %v3200
    %v3205 = vsub.f32 %v3195, %v3203
    %v3206 = vmul.f32 %v3204, 1.442695
    %v3207 = vpow.pop %v3206
    %v3208 = vmul.f32 %v3205, 1.442695
    %v3209 = vpow.pop %v3208
    %v3210 = vsel %vm236, %v3207, 0.0
    %3211 = vadd.xlane.f32.xlu0 %v3210
    %v3212 = vpop.xlane.xlu0 %3211
    %v3213 = vsel %vm236, %v3209, 0.0
    %3214 = vadd.xlane.f32.xlu0 %v3213
    %v3215 = vpop.xlane.xlu0 %3214
    %v3216 = vrcp.pop %v3212
    %v3217 = vrcp.pop %v3215
    %v3218 = vmul.f32 %v3207, %v3216
    %v3219 = vmul.f32 %v3209, %v3217
    %3220 = vrot.lane.b32.xlu0 %v3087, 112
    %v3221 = vpop.permute.xlu0 %3220
    %3222 = vrot.lane.b32.xlu0 %v3092, 112
    %v3223 = vpop.permute.xlu0 %3222
    %v3227 = vsel %vm236, %v3218, 0
    %v3230 = vsel %vm236, %v3219, 0
    %3232 = vmatprep.subr.mxu0 0.0
    %3233 = vmatpush1.msra.mxu0 0.0
    %3234 = vmatprep.subr.mxu0 0.0
    %3235 = vmatpush1.msra.mxu0 0.0
    %3236 = vmatprep.subr.mxu0 0.0
    %3237 = vmatpush1.msra.mxu0 0.0
    %3238 = vmatprep.subr.mxu0 0.0
    %3239 = vmatpush1.msra.mxu0 0.0
    %3240 = vmatprep.subr.mxu0 0.0
    %3241 = vmatpush1.msra.mxu0 0.0
    %3242 = vmatprep.subr.mxu0 0.0
    %3243 = vmatpush1.msra.mxu0 0.0
    %3244 = vmatprep.subr.mxu0 0.0
    %3245 = vmatpush1.msra.mxu0 0.0
    %3246 = vmatprep.subr.mxu0 0.0
    %3247 = vmatpush1.msra.mxu0 0.0
    %3248 = vmatprep.subr.mxu0 0.0
    %3249 = vmatpush1.msra.mxu0 0.0
    %3250 = vmatprep.subr.mxu0 0.0
    %3251 = vmatpush1.msra.mxu0 0.0
    %3252 = vmatprep.subr.mxu0 0.0
    %3253 = vmatpush1.msra.mxu0 0.0
    %3254 = vmatprep.subr.mxu0 0.0
    %3255 = vmatpush1.msra.mxu0 0.0
    %3256 = vmatprep.subr.mxu0 0.0
    %3257 = vmatpush1.msra.mxu0 0.0
    %3258 = vmatprep.subr.mxu0 0.0
    %3259 = vmatpush1.msra.mxu0 0.0
    %3260 = vmatprep.subr.mxu0 0.0
    %3261 = vmatpush1.msra.mxu0 %v3223
    %3262 = vmatprep.subr.mxu0 0.0
    %3263 = vmatpush1.msra.mxu0 %v3221
    %3264 = vmatprep.subr.mxu0 0.0
    %3265 = vmatpush2.msra.mxu0 0.0
    %3266 = vmatprep.subr.mxu0 0.0
    %3267 = vmatpush2.msra.mxu0 0.0
    %3268 = vmatprep.subr.mxu0 0.0
    %3269 = vmatpush2.msra.mxu0 0.0
    %3270 = vmatprep.subr.mxu0 0.0
    %3271 = vmatpush2.msra.mxu0 0.0
    %3272 = vmatprep.subr.mxu0 0.0
    %3273 = vmatpush2.msra.mxu0 0.0
    %3274 = vmatprep.subr.mxu0 0.0
    %3275 = vmatpush2.msra.mxu0 0.0
    %3276 = vmatprep.subr.mxu0 0.0
    %3277 = vmatpush2.msra.mxu0 0.0
    %3278 = vmatprep.subr.mxu0 0.0
    %3279 = vmatpush2.msra.mxu0 0.0
    %3280 = vmatprep.subr.mxu0 0.0
    %3281 = vmatpush2.msra.mxu0 0.0
    %3282 = vmatprep.subr.mxu0 0.0
    %3283 = vmatpush2.msra.mxu0 0.0
    %3284 = vmatprep.subr.mxu0 0.0
    %3285 = vmatpush2.msra.mxu0 0.0
    %3286 = vmatprep.subr.mxu0 0.0
    %3287 = vmatpush2.msra.mxu0 0.0
    %3288 = vmatprep.subr.mxu0 0.0
    %3289 = vmatpush2.msra.mxu0 0.0
    %3290 = vmatprep.subr.mxu0 0.0
    %3291 = vmatpush2.msra.mxu0 0.0
    %3292 = vmatprep.subr.mxu0 0.0
    %3293 = vmatpush2.msra.mxu0 0.0
    %3294 = vmatprep.subr.mxu0 0.0
    %3295 = vmatpush2.msra.mxu0 0.0
    %3296 = vmatprep.mubr.f32.mxu0 0.0
    %3297 = vmatmul.mubr.f32.gmra.mxu0 %v3227
    %v3298 = vpop.f32.mrf.mxu0
    %v3299 = vadd.f32 0.0, %v3298
    %v3300 = vpop.f32.mrf.mxu0
    %3301 = vmatprep.mubr.f32.mxu0 0.0
    %3302 = vmatmul.mubr.f32.gmra.mxu0 %v3230
    %v3303 = vpop.f32.mrf.mxu0
    %v3304 = vadd.f32 0.0, %v3303
    %v3305 = vpop.f32.mrf.mxu0
    %3306 = vdwg.mxu0
    %v3307 = vmul.f32 %v3299, %v1731
    %v3308 = vmul.f32 %v3304, %v1731
    %v3309 = vadd.f32 %v3307, 0.0
    %v3310 = vadd.f32 %v3308, 0.0
    %v3311 = vmul.f32 %v3087, %v1945
    %v3312 = vmul.f32 %v3092, %v1945
    %v3314 = vsel %vm1630, %v3311, 0
    %v3317 = vsel %vm1630, %v3312, 0
    %3319 = vmatprep.subr.mxu0 0.0
    %3320 = vmatpush1.xpose.msra.mxu0 0.0
    %3321 = vmatprep.subr.mxu0 0.0
    %3322 = vmatpush1.xpose.msra.mxu0 0.0
    %3323 = vmatprep.subr.mxu0 0.0
    %3324 = vmatpush1.xpose.msra.mxu0 0.0
    %3325 = vmatprep.subr.mxu0 0.0
    %3326 = vmatpush1.xpose.msra.mxu0 0.0
    %3327 = vmatprep.subr.mxu0 0.0
    %3328 = vmatpush1.xpose.msra.mxu0 0.0
    %3329 = vmatprep.subr.mxu0 0.0
    %3330 = vmatpush1.xpose.msra.mxu0 0.0
    %3331 = vmatprep.subr.mxu0 0.0
    %3332 = vmatpush1.xpose.msra.mxu0 0.0
    %3333 = vmatprep.subr.mxu0 0.0
    %3334 = vmatpush1.xpose.msra.mxu0 0.0
    %3335 = vmatprep.subr.mxu0 0.0
    %3336 = vmatpush1.xpose.msra.mxu0 0.0
    %3337 = vmatprep.subr.mxu0 0.0
    %3338 = vmatpush1.xpose.msra.mxu0 0.0
    %3339 = vmatprep.subr.mxu0 0.0
    %3340 = vmatpush1.xpose.msra.mxu0 0.0
    %3341 = vmatprep.subr.mxu0 0.0
    %3342 = vmatpush1.xpose.msra.mxu0 0.0
    %3343 = vmatprep.subr.mxu0 0.0
    %3344 = vmatpush1.xpose.msra.mxu0 0.0
    %3345 = vmatprep.subr.mxu0 0.0
    %3346 = vmatpush1.xpose.msra.mxu0 0.0
    %3347 = vmatprep.subr.mxu0 0.0
    %3348 = vmatpush1.xpose.msra.mxu0 %v3121
    %3349 = vmatprep.subr.mxu0 0.0
    %3350 = vmatpush1.xpose.msra.mxu0 %v3119
    %3351 = vmatprep.subr.mxu0 0.0
    %3352 = vmatpush2.xpose.msra.mxu0 0.0
    %3353 = vmatprep.subr.mxu0 0.0
    %3354 = vmatpush2.xpose.msra.mxu0 0.0
    %3355 = vmatprep.subr.mxu0 0.0
    %3356 = vmatpush2.xpose.msra.mxu0 0.0
    %3357 = vmatprep.subr.mxu0 0.0
    %3358 = vmatpush2.xpose.msra.mxu0 0.0
    %3359 = vmatprep.subr.mxu0 0.0
    %3360 = vmatpush2.xpose.msra.mxu0 0.0
    %3361 = vmatprep.subr.mxu0 0.0
    %3362 = vmatpush2.xpose.msra.mxu0 0.0
    %3363 = vmatprep.subr.mxu0 0.0
    %3364 = vmatpush2.xpose.msra.mxu0 0.0
    %3365 = vmatprep.subr.mxu0 0.0
    %3366 = vmatpush2.xpose.msra.mxu0 0.0
    %3367 = vmatprep.subr.mxu0 0.0
    %3368 = vmatpush2.xpose.msra.mxu0 0.0
    %3369 = vmatprep.subr.mxu0 0.0
    %3370 = vmatpush2.xpose.msra.mxu0 0.0
    %3371 = vmatprep.subr.mxu0 0.0
    %3372 = vmatpush2.xpose.msra.mxu0 0.0
    %3373 = vmatprep.subr.mxu0 0.0
    %3374 = vmatpush2.xpose.msra.mxu0 0.0
    %3375 = vmatprep.subr.mxu0 0.0
    %3376 = vmatpush2.xpose.msra.mxu0 0.0
    %3377 = vmatprep.subr.mxu0 0.0
    %3378 = vmatpush2.xpose.msra.mxu0 0.0
    %3379 = vmatprep.subr.mxu0 0.0
    %3380 = vmatpush2.xpose.msra.mxu0 0.0
    %3381 = vmatprep.subr.mxu0 0.0
    %3382 = vmatpush2.xpose.msra.mxu0 0.0
    %3383 = vmatprep.mubr.f32.mxu0 0.0
    %3384 = vmatmul.mubr.f32.gmra.mxu0 %v3314
    %v3385 = vpop.f32.mrf.mxu0
    %v3386 = vadd.f32 %v1737, %v3385
    %v3387 = vpop.f32.mrf.mxu0
    %3388 = vmatprep.mubr.f32.mxu0 0.0
    %3389 = vmatmul.mubr.f32.gmra.mxu0 %v3317
    %v3390 = vpop.f32.mrf.mxu0
    %v3391 = vadd.f32 %v1737, %v3390
    %v3392 = vpop.f32.mrf.mxu0
    %3393 = vdwg.mxu0
    %v3394 = vsel %vm236, %v3386, -inf
    %3395 = vmax.xlane.f32.xlu0 %v3394
    %v3396 = vpop.xlane.xlu0 %3395
    %v3397 = vsel %vm236, %v3391, -inf
    %3398 = vmax.xlane.f32.xlu0 %v3397
    %v3399 = vpop.xlane.xlu0 %3398
    %v3400 = vsub.f32 %v3386, %v3396
    %v3401 = vsub.f32 %v3391, %v3399
    %v3402 = vmul.f32 %v3400, 1.442695
    %v3403 = vpow.pop %v3402
    %v3404 = vmul.f32 %v3401, 1.442695
    %v3405 = vpow.pop %v3404
    %v3406 = vsel %vm236, %v3403, 0.0
    %3407 = vadd.xlane.f32.xlu0 %v3406
    %v3408 = vpop.xlane.xlu0 %3407
    %v3409 = vsel %vm236, %v3405, 0.0
    %3410 = vadd.xlane.f32.xlu0 %v3409
    %v3411 = vpop.xlane.xlu0 %3410
    %v3412 = vrcp.pop %v3408
    %v3413 = vrcp.pop %v3411
    %v3414 = vmul.f32 %v3403, %v3412
    %v3415 = vmul.f32 %v3405, %v3413
    %v3417 = vsel %vm236, %v3414, 0
    %v3420 = vsel %vm236, %v3415, 0
    %3422 = vmatprep.subr.mxu0 0.0
    %3423 = vmatpush1.msra.mxu0 0.0
    %3424 = vmatprep.subr.mxu0 0.0
    %3425 = vmatpush1.msra.mxu0 0.0
    %3426 = vmatprep.subr.mxu0 0.0
    %3427 = vmatpush1.msra.mxu0 0.0
    %3428 = vmatprep.subr.mxu0 0.0
    %3429 = vmatpush1.msra.mxu0 0.0
    %3430 = vmatprep.subr.mxu0 0.0
    %3431 = vmatpush1.msra.mxu0 0.0
    %3432 = vmatprep.subr.mxu0 0.0
    %3433 = vmatpush1.msra.mxu0 0.0
    %3434 = vmatprep.subr.mxu0 0.0
    %3435 = vmatpush1.msra.mxu0 0.0
    %3436 = vmatprep.subr.mxu0 0.0
    %3437 = vmatpush1.msra.mxu0 0.0
    %3438 = vmatprep.subr.mxu0 0.0
    %3439 = vmatpush1.msra.mxu0 0.0
    %3440 = vmatprep.subr.mxu0 0.0
    %3441 = vmatpush1.msra.mxu0 0.0
    %3442 = vmatprep.subr.mxu0 0.0
    %3443 = vmatpush1.msra.mxu0 0.0
    %3444 = vmatprep.subr.mxu0 0.0
    %3445 = vmatpush1.msra.mxu0 0.0
    %3446 = vmatprep.subr.mxu0 0.0
    %3447 = vmatpush1.msra.mxu0 0.0
    %3448 = vmatprep.subr.mxu0 0.0
    %3449 = vmatpush1.msra.mxu0 0.0
    %3450 = vmatprep.subr.mxu0 0.0
    %3451 = vmatpush1.msra.mxu0 %v3223
    %3452 = vmatprep.subr.mxu0 0.0
    %3453 = vmatpush1.msra.mxu0 %v3221
    %3454 = vmatprep.subr.mxu0 0.0
    %3455 = vmatpush2.msra.mxu0 0.0
    %3456 = vmatprep.subr.mxu0 0.0
    %3457 = vmatpush2.msra.mxu0 0.0
    %3458 = vmatprep.subr.mxu0 0.0
    %3459 = vmatpush2.msra.mxu0 0.0
    %3460 = vmatprep.subr.mxu0 0.0
    %3461 = vmatpush2.msra.mxu0 0.0
    %3462 = vmatprep.subr.mxu0 0.0
    %3463 = vmatpush2.msra.mxu0 0.0
    %3464 = vmatprep.subr.mxu0 0.0
    %3465 = vmatpush2.msra.mxu0 0.0
    %3466 = vmatprep.subr.mxu0 0.0
    %3467 = vmatpush2.msra.mxu0 0.0
    %3468 = vmatprep.subr.mxu0 0.0
    %3469 = vmatpush2.msra.mxu0 0.0
    %3470 = vmatprep.subr.mxu0 0.0
    %3471 = vmatpush2.msra.mxu0 0.0
    %3472 = vmatprep.subr.mxu0 0.0
    %3473 = vmatpush2.msra.mxu0 0.0
    %3474 = vmatprep.subr.mxu0 0.0
    %3475 = vmatpush2.msra.mxu0 0.0
    %3476 = vmatprep.subr.mxu0 0.0
    %3477 = vmatpush2.msra.mxu0 0.0
    %3478 = vmatprep.subr.mxu0 0.0
    %3479 = vmatpush2.msra.mxu0 0.0
    %3480 = vmatprep.subr.mxu0 0.0
    %3481 = vmatpush2.msra.mxu0 0.0
    %3482 = vmatprep.subr.mxu0 0.0
    %3483 = vmatpush2.msra.mxu0 0.0
    %3484 = vmatprep.subr.mxu0 0.0
    %3485 = vmatpush2.msra.mxu0 0.0
    %3486 = vmatprep.mubr.f32.mxu0 0.0
    %3487 = vmatmul.mubr.f32.gmra.mxu0 %v3417
    %v3488 = vpop.f32.mrf.mxu0
    %v3489 = vadd.f32 0.0, %v3488
    %v3490 = vpop.f32.mrf.mxu0
    %3491 = vmatprep.mubr.f32.mxu0 0.0
    %3492 = vmatmul.mubr.f32.gmra.mxu0 %v3420
    %v3493 = vpop.f32.mrf.mxu0
    %v3494 = vadd.f32 0.0, %v3493
    %v3495 = vpop.f32.mrf.mxu0
    %3496 = vdwg.mxu0
    %v3497 = vmul.f32 %v3489, %v1945
    %v3498 = vmul.f32 %v3494, %v1945
    %v3499 = vadd.f32 %v3309, %v3497
    %v3500 = vadd.f32 %v3310, %v3498
    %v3501 = vmul.f32 %v3097, %v1731
    %v3502 = vmul.f32 %v3102, %v1731
    %3505 = vrot.lane.b32.xlu0 %v3097, 120
    %v3506 = vpop.permute.xlu0 %3505
    %3507 = vrot.lane.b32.xlu0 %v3102, 120
    %v3508 = vpop.permute.xlu0 %3507
    %v3510 = vsel %vm1630, %v3501, 0
    %v3513 = vsel %vm1630, %v3502, 0
    %v3515 = vsel %vm1630, %v3506, 0
    %v3517 = vsel %vm1630, %v3508, 0
    %3519 = vmatprep.subr.mxu0 0.0
    %3520 = vmatpush1.xpose.msra.mxu0 0.0
    %3521 = vmatprep.subr.mxu0 0.0
    %3522 = vmatpush1.xpose.msra.mxu0 0.0
    %3523 = vmatprep.subr.mxu0 0.0
    %3524 = vmatpush1.xpose.msra.mxu0 0.0
    %3525 = vmatprep.subr.mxu0 0.0
    %3526 = vmatpush1.xpose.msra.mxu0 0.0
    %3527 = vmatprep.subr.mxu0 0.0
    %3528 = vmatpush1.xpose.msra.mxu0 0.0
    %3529 = vmatprep.subr.mxu0 0.0
    %3530 = vmatpush1.xpose.msra.mxu0 0.0
    %3531 = vmatprep.subr.mxu0 0.0
    %3532 = vmatpush1.xpose.msra.mxu0 0.0
    %3533 = vmatprep.subr.mxu0 0.0
    %3534 = vmatpush1.xpose.msra.mxu0 0.0
    %3535 = vmatprep.subr.mxu0 0.0
    %3536 = vmatpush1.xpose.msra.mxu0 0.0
    %3537 = vmatprep.subr.mxu0 0.0
    %3538 = vmatpush1.xpose.msra.mxu0 0.0
    %3539 = vmatprep.subr.mxu0 0.0
    %3540 = vmatpush1.xpose.msra.mxu0 0.0
    %3541 = vmatprep.subr.mxu0 0.0
    %3542 = vmatpush1.xpose.msra.mxu0 0.0
    %3543 = vmatprep.subr.mxu0 0.0
    %3544 = vmatpush1.xpose.msra.mxu0 0.0
    %3545 = vmatprep.subr.mxu0 0.0
    %3546 = vmatpush1.xpose.msra.mxu0 0.0
    %3547 = vmatprep.subr.mxu0 0.0
    %3548 = vmatpush1.xpose.msra.mxu0 %v3517
    %3549 = vmatprep.subr.mxu0 0.0
    %3550 = vmatpush1.xpose.msra.mxu0 %v3515
    %3551 = vmatprep.subr.mxu0 0.0
    %3552 = vmatpush2.xpose.msra.mxu0 0.0
    %3553 = vmatprep.subr.mxu0 0.0
    %3554 = vmatpush2.xpose.msra.mxu0 0.0
    %3555 = vmatprep.subr.mxu0 0.0
    %3556 = vmatpush2.xpose.msra.mxu0 0.0
    %3557 = vmatprep.subr.mxu0 0.0
    %3558 = vmatpush2.xpose.msra.mxu0 0.0
    %3559 = vmatprep.subr.mxu0 0.0
    %3560 = vmatpush2.xpose.msra.mxu0 0.0
    %3561 = vmatprep.subr.mxu0 0.0
    %3562 = vmatpush2.xpose.msra.mxu0 0.0
    %3563 = vmatprep.subr.mxu0 0.0
    %3564 = vmatpush2.xpose.msra.mxu0 0.0
    %3565 = vmatprep.subr.mxu0 0.0
    %3566 = vmatpush2.xpose.msra.mxu0 0.0
    %3567 = vmatprep.subr.mxu0 0.0
    %3568 = vmatpush2.xpose.msra.mxu0 0.0
    %3569 = vmatprep.subr.mxu0 0.0
    %3570 = vmatpush2.xpose.msra.mxu0 0.0
    %3571 = vmatprep.subr.mxu0 0.0
    %3572 = vmatpush2.xpose.msra.mxu0 0.0
    %3573 = vmatprep.subr.mxu0 0.0
    %3574 = vmatpush2.xpose.msra.mxu0 0.0
    %3575 = vmatprep.subr.mxu0 0.0
    %3576 = vmatpush2.xpose.msra.mxu0 0.0
    %3577 = vmatprep.subr.mxu0 0.0
    %3578 = vmatpush2.xpose.msra.mxu0 0.0
    %3579 = vmatprep.subr.mxu0 0.0
    %3580 = vmatpush2.xpose.msra.mxu0 0.0
    %3581 = vmatprep.subr.mxu0 0.0
    %3582 = vmatpush2.xpose.msra.mxu0 0.0
    %3583 = vmatprep.mubr.f32.mxu0 0.0
    %3584 = vmatmul.mubr.f32.gmra.mxu0 %v3510
    %v3585 = vpop.f32.mrf.mxu0
    %v3586 = vadd.f32 %v2141, %v3585
    %v3587 = vpop.f32.mrf.mxu0
    %3588 = vmatprep.mubr.f32.mxu0 0.0
    %3589 = vmatmul.mubr.f32.gmra.mxu0 %v3513
    %v3590 = vpop.f32.mrf.mxu0
    %v3591 = vadd.f32 %v2141, %v3590
    %v3592 = vpop.f32.mrf.mxu0
    %3593 = vdwg.mxu0
    %v3594 = vsel %vm236, %v3586, -inf
    %3595 = vmax.xlane.f32.xlu0 %v3594
    %v3596 = vpop.xlane.xlu0 %3595
    %v3597 = vsel %vm236, %v3591, -inf
    %3598 = vmax.xlane.f32.xlu0 %v3597
    %v3599 = vpop.xlane.xlu0 %3598
    %v3600 = vsub.f32 %v3586, %v3596
    %v3601 = vsub.f32 %v3591, %v3599
    %v3602 = vmul.f32 %v3600, 1.442695
    %v3603 = vpow.pop %v3602
    %v3604 = vmul.f32 %v3601, 1.442695
    %v3605 = vpow.pop %v3604
    %v3606 = vsel %vm236, %v3603, 0.0
    %3607 = vadd.xlane.f32.xlu0 %v3606
    %v3608 = vpop.xlane.xlu0 %3607
    %v3609 = vsel %vm236, %v3605, 0.0
    %3610 = vadd.xlane.f32.xlu0 %v3609
    %v3611 = vpop.xlane.xlu0 %3610
    %v3612 = vrcp.pop %v3608
    %v3613 = vrcp.pop %v3611
    %v3614 = vmul.f32 %v3603, %v3612
    %v3615 = vmul.f32 %v3605, %v3613
    %3616 = vrot.lane.b32.xlu0 %v3097, 112
    %v3617 = vpop.permute.xlu0 %3616
    %3618 = vrot.lane.b32.xlu0 %v3102, 112
    %v3619 = vpop.permute.xlu0 %3618
    %v3623 = vsel %vm236, %v3614, 0
    %v3626 = vsel %vm236, %v3615, 0
    %3628 = vmatprep.subr.mxu0 0.0
    %3629 = vmatpush1.msra.mxu0 0.0
    %3630 = vmatprep.subr.mxu0 0.0
    %3631 = vmatpush1.msra.mxu0 0.0
    %3632 = vmatprep.subr.mxu0 0.0
    %3633 = vmatpush1.msra.mxu0 0.0
    %3634 = vmatprep.subr.mxu0 0.0
    %3635 = vmatpush1.msra.mxu0 0.0
    %3636 = vmatprep.subr.mxu0 0.0
    %3637 = vmatpush1.msra.mxu0 0.0
    %3638 = vmatprep.subr.mxu0 0.0
    %3639 = vmatpush1.msra.mxu0 0.0
    %3640 = vmatprep.subr.mxu0 0.0
    %3641 = vmatpush1.msra.mxu0 0.0
    %3642 = vmatprep.subr.mxu0 0.0
    %3643 = vmatpush1.msra.mxu0 0.0
    %3644 = vmatprep.subr.mxu0 0.0
    %3645 = vmatpush1.msra.mxu0 0.0
    %3646 = vmatprep.subr.mxu0 0.0
    %3647 = vmatpush1.msra.mxu0 0.0
    %3648 = vmatprep.subr.mxu0 0.0
    %3649 = vmatpush1.msra.mxu0 0.0
    %3650 = vmatprep.subr.mxu0 0.0
    %3651 = vmatpush1.msra.mxu0 0.0
    %3652 = vmatprep.subr.mxu0 0.0
    %3653 = vmatpush1.msra.mxu0 0.0
    %3654 = vmatprep.subr.mxu0 0.0
    %3655 = vmatpush1.msra.mxu0 0.0
    %3656 = vmatprep.subr.mxu0 0.0
    %3657 = vmatpush1.msra.mxu0 %v3619
    %3658 = vmatprep.subr.mxu0 0.0
    %3659 = vmatpush1.msra.mxu0 %v3617
    %3660 = vmatprep.subr.mxu0 0.0
    %3661 = vmatpush2.msra.mxu0 0.0
    %3662 = vmatprep.subr.mxu0 0.0
    %3663 = vmatpush2.msra.mxu0 0.0
    %3664 = vmatprep.subr.mxu0 0.0
    %3665 = vmatpush2.msra.mxu0 0.0
    %3666 = vmatprep.subr.mxu0 0.0
    %3667 = vmatpush2.msra.mxu0 0.0
    %3668 = vmatprep.subr.mxu0 0.0
    %3669 = vmatpush2.msra.mxu0 0.0
    %3670 = vmatprep.subr.mxu0 0.0
    %3671 = vmatpush2.msra.mxu0 0.0
    %3672 = vmatprep.subr.mxu0 0.0
    %3673 = vmatpush2.msra.mxu0 0.0
    %3674 = vmatprep.subr.mxu0 0.0
    %3675 = vmatpush2.msra.mxu0 0.0
    %3676 = vmatprep.subr.mxu0 0.0
    %3677 = vmatpush2.msra.mxu0 0.0
    %3678 = vmatprep.subr.mxu0 0.0
    %3679 = vmatpush2.msra.mxu0 0.0
    %3680 = vmatprep.subr.mxu0 0.0
    %3681 = vmatpush2.msra.mxu0 0.0
    %3682 = vmatprep.subr.mxu0 0.0
    %3683 = vmatpush2.msra.mxu0 0.0
    %3684 = vmatprep.subr.mxu0 0.0
    %3685 = vmatpush2.msra.mxu0 0.0
    %3686 = vmatprep.subr.mxu0 0.0
    %3687 = vmatpush2.msra.mxu0 0.0
    %3688 = vmatprep.subr.mxu0 0.0
    %3689 = vmatpush2.msra.mxu0 0.0
    %3690 = vmatprep.subr.mxu0 0.0
    %3691 = vmatpush2.msra.mxu0 0.0
    %3692 = vmatprep.mubr.f32.mxu0 0.0
    %3693 = vmatmul.mubr.f32.gmra.mxu0 %v3623
    %v3694 = vpop.f32.mrf.mxu0
    %v3695 = vadd.f32 0.0, %v3694
    %v3696 = vpop.f32.mrf.mxu0
    %3697 = vmatprep.mubr.f32.mxu0 0.0
    %3698 = vmatmul.mubr.f32.gmra.mxu0 %v3626
    %v3699 = vpop.f32.mrf.mxu0
    %v3700 = vadd.f32 0.0, %v3699
    %v3701 = vpop.f32.mrf.mxu0
    %3702 = vdwg.mxu0
    %v3703 = vmul.f32 %v3695, %v1731
    %v3704 = vmul.f32 %v3700, %v1731
    %v3705 = vadd.f32 %v3703, 0.0
    %v3706 = vadd.f32 %v3704, 0.0
    %v3707 = vmul.f32 %v3097, %v1945
    %v3708 = vmul.f32 %v3102, %v1945
    %v3710 = vsel %vm1630, %v3707, 0
    %v3713 = vsel %vm1630, %v3708, 0
    %3715 = vmatprep.subr.mxu0 0.0
    %3716 = vmatpush1.xpose.msra.mxu0 0.0
    %3717 = vmatprep.subr.mxu0 0.0
    %3718 = vmatpush1.xpose.msra.mxu0 0.0
    %3719 = vmatprep.subr.mxu0 0.0
    %3720 = vmatpush1.xpose.msra.mxu0 0.0
    %3721 = vmatprep.subr.mxu0 0.0
    %3722 = vmatpush1.xpose.msra.mxu0 0.0
    %3723 = vmatprep.subr.mxu0 0.0
    %3724 = vmatpush1.xpose.msra.mxu0 0.0
    %3725 = vmatprep.subr.mxu0 0.0
    %3726 = vmatpush1.xpose.msra.mxu0 0.0
    %3727 = vmatprep.subr.mxu0 0.0
    %3728 = vmatpush1.xpose.msra.mxu0 0.0
    %3729 = vmatprep.subr.mxu0 0.0
    %3730 = vmatpush1.xpose.msra.mxu0 0.0
    %3731 = vmatprep.subr.mxu0 0.0
    %3732 = vmatpush1.xpose.msra.mxu0 0.0
    %3733 = vmatprep.subr.mxu0 0.0
    %3734 = vmatpush1.xpose.msra.mxu0 0.0
    %3735 = vmatprep.subr.mxu0 0.0
    %3736 = vmatpush1.xpose.msra.mxu0 0.0
    %3737 = vmatprep.subr.mxu0 0.0
    %3738 = vmatpush1.xpose.msra.mxu0 0.0
    %3739 = vmatprep.subr.mxu0 0.0
    %3740 = vmatpush1.xpose.msra.mxu0 0.0
    %3741 = vmatprep.subr.mxu0 0.0
    %3742 = vmatpush1.xpose.msra.mxu0 0.0
    %3743 = vmatprep.subr.mxu0 0.0
    %3744 = vmatpush1.xpose.msra.mxu0 %v3517
    %3745 = vmatprep.subr.mxu0 0.0
    %3746 = vmatpush1.xpose.msra.mxu0 %v3515
    %3747 = vmatprep.subr.mxu0 0.0
    %3748 = vmatpush2.xpose.msra.mxu0 0.0
    %3749 = vmatprep.subr.mxu0 0.0
    %3750 = vmatpush2.xpose.msra.mxu0 0.0
    %3751 = vmatprep.subr.mxu0 0.0
    %3752 = vmatpush2.xpose.msra.mxu0 0.0
    %3753 = vmatprep.subr.mxu0 0.0
    %3754 = vmatpush2.xpose.msra.mxu0 0.0
    %3755 = vmatprep.subr.mxu0 0.0
    %3756 = vmatpush2.xpose.msra.mxu0 0.0
    %3757 = vmatprep.subr.mxu0 0.0
    %3758 = vmatpush2.xpose.msra.mxu0 0.0
    %3759 = vmatprep.subr.mxu0 0.0
    %3760 = vmatpush2.xpose.msra.mxu0 0.0
    %3761 = vmatprep.subr.mxu0 0.0
    %3762 = vmatpush2.xpose.msra.mxu0 0.0
    %3763 = vmatprep.subr.mxu0 0.0
    %3764 = vmatpush2.xpose.msra.mxu0 0.0
    %3765 = vmatprep.subr.mxu0 0.0
    %3766 = vmatpush2.xpose.msra.mxu0 0.0
    %3767 = vmatprep.subr.mxu0 0.0
    %3768 = vmatpush2.xpose.msra.mxu0 0.0
    %3769 = vmatprep.subr.mxu0 0.0
    %3770 = vmatpush2.xpose.msra.mxu0 0.0
    %3771 = vmatprep.subr.mxu0 0.0
    %3772 = vmatpush2.xpose.msra.mxu0 0.0
    %3773 = vmatprep.subr.mxu0 0.0
    %3774 = vmatpush2.xpose.msra.mxu0 0.0
    %3775 = vmatprep.subr.mxu0 0.0
    %3776 = vmatpush2.xpose.msra.mxu0 0.0
    %3777 = vmatprep.subr.mxu0 0.0
    %3778 = vmatpush2.xpose.msra.mxu0 0.0
    %3779 = vmatprep.mubr.f32.mxu0 0.0
    %3780 = vmatmul.mubr.f32.gmra.mxu0 %v3710
    %v3781 = vpop.f32.mrf.mxu0
    %v3782 = vadd.f32 %v2141, %v3781
    %v3783 = vpop.f32.mrf.mxu0
    %3784 = vmatprep.mubr.f32.mxu0 0.0
    %3785 = vmatmul.mubr.f32.gmra.mxu0 %v3713
    %v3786 = vpop.f32.mrf.mxu0
    %v3787 = vadd.f32 %v2141, %v3786
    %v3788 = vpop.f32.mrf.mxu0
    %3789 = vdwg.mxu0
    %v3790 = vsel %vm236, %v3782, -inf
    %3791 = vmax.xlane.f32.xlu0 %v3790
    %v3792 = vpop.xlane.xlu0 %3791
    %v3793 = vsel %vm236, %v3787, -inf
    %3794 = vmax.xlane.f32.xlu0 %v3793
    %v3795 = vpop.xlane.xlu0 %3794
    %v3796 = vsub.f32 %v3782, %v3792
    %v3797 = vsub.f32 %v3787, %v3795
    %v3798 = vmul.f32 %v3796, 1.442695
    %v3799 = vpow.pop %v3798
    %v3800 = vmul.f32 %v3797, 1.442695
    %v3801 = vpow.pop %v3800
    %v3802 = vsel %vm236, %v3799, 0.0
    %3803 = vadd.xlane.f32.xlu0 %v3802
    %v3804 = vpop.xlane.xlu0 %3803
    %v3805 = vsel %vm236, %v3801, 0.0
    %3806 = vadd.xlane.f32.xlu0 %v3805
    %v3807 = vpop.xlane.xlu0 %3806
    %v3808 = vrcp.pop %v3804
    %v3809 = vrcp.pop %v3807
    %v3810 = vmul.f32 %v3799, %v3808
    %v3811 = vmul.f32 %v3801, %v3809
    %v3813 = vsel %vm236, %v3810, 0
    %v3816 = vsel %vm236, %v3811, 0
    %3818 = vmatprep.subr.mxu0 0.0
    %3819 = vmatpush1.msra.mxu0 0.0
    %3820 = vmatprep.subr.mxu0 0.0
    %3821 = vmatpush1.msra.mxu0 0.0
    %3822 = vmatprep.subr.mxu0 0.0
    %3823 = vmatpush1.msra.mxu0 0.0
    %3824 = vmatprep.subr.mxu0 0.0
    %3825 = vmatpush1.msra.mxu0 0.0
    %3826 = vmatprep.subr.mxu0 0.0
    %3827 = vmatpush1.msra.mxu0 0.0
    %3828 = vmatprep.subr.mxu0 0.0
    %3829 = vmatpush1.msra.mxu0 0.0
    %3830 = vmatprep.subr.mxu0 0.0
    %3831 = vmatpush1.msra.mxu0 0.0
    %3832 = vmatprep.subr.mxu0 0.0
    %3833 = vmatpush1.msra.mxu0 0.0
    %3834 = vmatprep.subr.mxu0 0.0
    %3835 = vmatpush1.msra.mxu0 0.0
    %3836 = vmatprep.subr.mxu0 0.0
    %3837 = vmatpush1.msra.mxu0 0.0
    %3838 = vmatprep.subr.mxu0 0.0
    %3839 = vmatpush1.msra.mxu0 0.0
    %3840 = vmatprep.subr.mxu0 0.0
    %3841 = vmatpush1.msra.mxu0 0.0
    %3842 = vmatprep.subr.mxu0 0.0
    %3843 = vmatpush1.msra.mxu0 0.0
    %3844 = vmatprep.subr.mxu0 0.0
    %3845 = vmatpush1.msra.mxu0 0.0
    %3846 = vmatprep.subr.mxu0 0.0
    %3847 = vmatpush1.msra.mxu0 %v3619
    %3848 = vmatprep.subr.mxu0 0.0
    %3849 = vmatpush1.msra.mxu0 %v3617
    %3850 = vmatprep.subr.mxu0 0.0
    %3851 = vmatpush2.msra.mxu0 0.0
    %3852 = vmatprep.subr.mxu0 0.0
    %3853 = vmatpush2.msra.mxu0 0.0
    %3854 = vmatprep.subr.mxu0 0.0
    %3855 = vmatpush2.msra.mxu0 0.0
    %3856 = vmatprep.subr.mxu0 0.0
    %3857 = vmatpush2.msra.mxu0 0.0
    %3858 = vmatprep.subr.mxu0 0.0
    %3859 = vmatpush2.msra.mxu0 0.0
    %3860 = vmatprep.subr.mxu0 0.0
    %3861 = vmatpush2.msra.mxu0 0.0
    %3862 = vmatprep.subr.mxu0 0.0
    %3863 = vmatpush2.msra.mxu0 0.0
    %3864 = vmatprep.subr.mxu0 0.0
    %3865 = vmatpush2.msra.mxu0 0.0
    %3866 = vmatprep.subr.mxu0 0.0
    %3867 = vmatpush2.msra.mxu0 0.0
    %3868 = vmatprep.subr.mxu0 0.0
    %3869 = vmatpush2.msra.mxu0 0.0
    %3870 = vmatprep.subr.mxu0 0.0
    %3871 = vmatpush2.msra.mxu0 0.0
    %3872 = vmatprep.subr.mxu0 0.0
    %3873 = vmatpush2.msra.mxu0 0.0
    %3874 = vmatprep.subr.mxu0 0.0
    %3875 = vmatpush2.msra.mxu0 0.0
    %3876 = vmatprep.subr.mxu0 0.0
    %3877 = vmatpush2.msra.mxu0 0.0
    %3878 = vmatprep.subr.mxu0 0.0
    %3879 = vmatpush2.msra.mxu0 0.0
    %3880 = vmatprep.subr.mxu0 0.0
    %3881 = vmatpush2.msra.mxu0 0.0
    %3882 = vmatprep.mubr.f32.mxu0 0.0
    %3883 = vmatmul.mubr.f32.gmra.mxu0 %v3813
    %v3884 = vpop.f32.mrf.mxu0
    %v3885 = vadd.f32 0.0, %v3884
    %v3886 = vpop.f32.mrf.mxu0
    %3887 = vmatprep.mubr.f32.mxu0 0.0
    %3888 = vmatmul.mubr.f32.gmra.mxu0 %v3816
    %v3889 = vpop.f32.mrf.mxu0
    %v3890 = vadd.f32 0.0, %v3889
    %v3891 = vpop.f32.mrf.mxu0
    %3892 = vdwg.mxu0
    %v3893 = vmul.f32 %v3885, %v1945
    %v3894 = vmul.f32 %v3890, %v1945
    %v3895 = vadd.f32 %v3705, %v3893
    %v3896 = vadd.f32 %v3706, %v3894
    %v3897 = vld [vmem:[#allocation19] sm:$0xff]
    %v3899 = vsel %vm1630, %v3499, 0
    %v3902 = vsel %vm1630, %v3500, 0
    %v3905 = vsel %vm1630, %v3895, 0
    %v3908 = vsel %vm1630, %v3896, 0
    %3910 = vmatprep.subr.mxu0 0.0
    %3911 = vmatpush1.msra.mxu0 0.0
    %3912 = vmatprep.subr.mxu0 0.0
    %3913 = vmatpush1.msra.mxu0 0.0
    %3914 = vmatprep.subr.mxu0 0.0
    %3915 = vmatpush1.msra.mxu0 0.0
    %3916 = vmatprep.subr.mxu0 0.0
    %3917 = vmatpush1.msra.mxu0 0.0
    %3918 = vmatprep.subr.mxu0 0.0
    %3919 = vmatpush1.msra.mxu0 0.0
    %3920 = vmatprep.subr.mxu0 0.0
    %3921 = vmatpush1.msra.mxu0 0.0
    %3922 = vmatprep.subr.mxu0 0.0
    %3923 = vmatpush1.msra.mxu0 0.0
    %3924 = vmatprep.subr.mxu0 0.0
    %3925 = vmatpush1.msra.mxu0 0.0
    %3926 = vmatprep.subr.mxu0 0.0
    %3927 = vmatpush1.msra.mxu0 0.0
    %3928 = vmatprep.subr.mxu0 0.0
    %3929 = vmatpush1.msra.mxu0 0.0
    %3930 = vmatprep.subr.mxu0 0.0
    %3931 = vmatpush1.msra.mxu0 0.0
    %3932 = vmatprep.subr.mxu0 0.0
    %3933 = vmatpush1.msra.mxu0 0.0
    %3934 = vmatprep.subr.mxu0 0.0
    %3935 = vmatpush1.msra.mxu0 0.0
    %3936 = vmatprep.subr.mxu0 0.0
    %3937 = vmatpush1.msra.mxu0 0.0
    %3938 = vmatprep.subr.mxu0 0.0
    %3939 = vmatpush1.msra.mxu0 0.0
    %3940 = vmatprep.subr.mxu0 0.0
    %3941 = vmatpush1.msra.mxu0 %v3897
    %3942 = vmatprep.subr.mxu0 0.0
    %3943 = vmatpush2.msra.mxu0 0.0
    %3944 = vmatprep.subr.mxu0 0.0
    %3945 = vmatpush2.msra.mxu0 0.0
    %3946 = vmatprep.subr.mxu0 0.0
    %3947 = vmatpush2.msra.mxu0 0.0
    %3948 = vmatprep.subr.mxu0 0.0
    %3949 = vmatpush2.msra.mxu0 0.0
    %3950 = vmatprep.subr.mxu0 0.0
    %3951 = vmatpush2.msra.mxu0 0.0
    %3952 = vmatprep.subr.mxu0 0.0
    %3953 = vmatpush2.msra.mxu0 0.0
    %3954 = vmatprep.subr.mxu0 0.0
    %3955 = vmatpush2.msra.mxu0 0.0
    %3956 = vmatprep.subr.mxu0 0.0
    %3957 = vmatpush2.msra.mxu0 0.0
    %3958 = vmatprep.subr.mxu0 0.0
    %3959 = vmatpush2.msra.mxu0 0.0
    %3960 = vmatprep.subr.mxu0 0.0
    %3961 = vmatpush2.msra.mxu0 0.0
    %3962 = vmatprep.subr.mxu0 0.0
    %3963 = vmatpush2.msra.mxu0 0.0
    %3964 = vmatprep.subr.mxu0 0.0
    %3965 = vmatpush2.msra.mxu0 0.0
    %3966 = vmatprep.subr.mxu0 0.0
    %3967 = vmatpush2.msra.mxu0 0.0
    %3968 = vmatprep.subr.mxu0 0.0
    %3969 = vmatpush2.msra.mxu0 0.0
    %3970 = vmatprep.subr.mxu0 0.0
    %3971 = vmatpush2.msra.mxu0 0.0
    %3972 = vmatprep.subr.mxu0 0.0
    %3973 = vmatpush2.msra.mxu0 0.0
    %3974 = vmatprep.mubr.f32.mxu0 0.0
    %3975 = vmatmul.mubr.f32.gmra.mxu0 %v3899
    %v3976 = vpop.f32.mrf.mxu0
    %v3977 = vadd.f32 0.0, %v3976
    %v3978 = vpop.f32.mrf.mxu0
    %3979 = vmatprep.mubr.f32.mxu0 0.0
    %3980 = vmatmul.mubr.f32.gmra.mxu0 %v3902
    %v3981 = vpop.f32.mrf.mxu0
    %v3982 = vadd.f32 0.0, %v3981
    %v3983 = vpop.f32.mrf.mxu0
    %3984 = vmatprep.mubr.f32.mxu0 0.0
    %3985 = vmatmul.mubr.f32.gmra.mxu0 %v3905
    %v3986 = vpop.f32.mrf.mxu0
    %v3987 = vadd.f32 0.0, %v3986
    %v3988 = vpop.f32.mrf.mxu0
    %3989 = vmatprep.mubr.f32.mxu0 0.0
    %3990 = vmatmul.mubr.f32.gmra.mxu0 %v3908
    %v3991 = vpop.f32.mrf.mxu0
    %v3992 = vadd.f32 0.0, %v3991
    %v3993 = vpop.f32.mrf.mxu0
    %3994 = vdwg.mxu0
    %v3995 = vadd.f32 %v2998, %v3977
    %v3996 = vadd.f32 %v2999, %v3982
    %v3997 = vadd.f32 %v3000, %v3987
    %v3998 = vadd.f32 %v3001, %v3992
    %v3999 = vlaneseq
    %v4000 = vshrl.u32 %v3999, 7
    %v4001 = vsub.s32 1, %v4000
    %v4002 = vrot.slane %v3002, %v4001
    %v4003 = vadd.f32 %v3995, %v4002
    %v4004 = vadd.f32 %v3996, %v4002
    %v4005 = vadd.f32 %v3997, %v4002
    %v4006 = vadd.f32 %v3998, %v4002
    %v4007 = vsel %vm1630, %v4003, 0.0
    %4008 = vadd.xlane.f32.xlu0 %v4007
    %v4009 = vpop.xlane.xlu0 %4008
    %v4010 = vsel %vm1630, %v4004, 0.0
    %4011 = vadd.xlane.f32.xlu0 %v4010
    %v4012 = vpop.xlane.xlu0 %4011
    %v4013 = vsel %vm1630, %v4005, 0.0
    %4014 = vadd.xlane.f32.xlu0 %v4013
    %v4015 = vpop.xlane.xlu0 %4014
    %v4016 = vsel %vm1630, %v4006, 0.0
    %4017 = vadd.xlane.f32.xlu0 %v4016
    %v4018 = vpop.xlane.xlu0 %4017
    %v4019 = vmul.f32 %v4009, %v2658
    %v4020 = vmul.f32 %v4012, %v2658
    %v4021 = vmul.f32 %v4015, %v2658
    %v4022 = vmul.f32 %v4018, %v2658
    %v4023 = vsub.f32 %v4003, %v4019
    %v4024 = vsub.f32 %v4004, %v4020
    %v4025 = vsub.f32 %v4005, %v4021
    %v4026 = vsub.f32 %v4006, %v4022
    %v4027 = vmul.f32 %v4023, %v4023
    %v4028 = vmul.f32 %v4024, %v4024
    %v4029 = vmul.f32 %v4025, %v4025
    %v4030 = vmul.f32 %v4026, %v4026
    %v4031 = vsel %vm1630, %v4027, 0.0
    %4032 = vadd.xlane.f32.xlu0 %v4031
    %v4033 = vpop.xlane.xlu0 %4032
    %v4034 = vsel %vm1630, %v4028, 0.0
    %4035 = vadd.xlane.f32.xlu0 %v4034
    %v4036 = vpop.xlane.xlu0 %4035
    %v4037 = vsel %vm1630, %v4029, 0.0
    %4038 = vadd.xlane.f32.xlu0 %v4037
    %v4039 = vpop.xlane.xlu0 %4038
    %v4040 = vsel %vm1630, %v4030, 0.0
    %4041 = vadd.xlane.f32.xlu0 %v4040
    %v4042 = vpop.xlane.xlu0 %4041
    %v4043 = vmul.f32 %v4033, %v2658
    %v4044 = vmul.f32 %v4036, %v2658
    %v4045 = vmul.f32 %v4039, %v2658
    %v4046 = vmul.f32 %v4042, %v2658
    %v4047 = vadd.f32 %v4043, 1e-05
    %v4048 = vadd.f32 %v4044, 1e-05
    %v4049 = vadd.f32 %v4045, 1e-05
    %v4050 = vadd.f32 %v4046, 1e-05
    %v4051 = vrsqrt.pop %v4047
    %v4052 = vrsqrt.pop %v4048
    %v4053 = vrsqrt.pop %v4049
    %v4054 = vrsqrt.pop %v4050
    %v4055 = vmul.f32 %v4023, %v4051
    %v4056 = vmul.f32 %v4024, %v4052
    %v4057 = vmul.f32 %v4025, %v4053
    %v4058 = vmul.f32 %v4026, %v4054
    %v4059 = vlaneseq
    %v4060 = vshrl.u32 %v4059, 7
    %v4061 = vsub.s32 2, %v4060
    %v4062 = vrot.slane %v3002, %v4061
    %v4063 = vmul.f32 %v4055, %v4062
    %v4064 = vmul.f32 %v4056, %v4062
    %v4065 = vmul.f32 %v4057, %v4062
    %v4066 = vmul.f32 %v4058, %v4062
    %v4067 = vlaneseq
    %v4068 = vshrl.u32 %v4067, 7
    %v4069 = vsub.s32 3, %v4068
    %v4070 = vrot.slane %v3002, %v4069
    %v4071 = vadd.f32 %v4063, %v4070
    %v4072 = vadd.f32 %v4064, %v4070
    %v4073 = vadd.f32 %v4065, %v4070
    %v4074 = vadd.f32 %v4066, %v4070
    %v4075 = vld [vmem:[#allocation21] sm:$0xff]
    %v4076 = vlaneseq
    %v4077 = vshrl.u32 %v4076, 7
    %v4078 = vsub.s32 4, %v4077
    %v4079 = vrot.slane %v3002, %v4078
    %v4081 = vsel %vm1630, %v4071, 0
    %v4084 = vsel %vm1630, %v4072, 0
    %v4087 = vsel %vm1630, %v4073, 0
    %v4090 = vsel %vm1630, %v4074, 0
    %4092 = vmatprep.subr.mxu0 0.0
    %4093 = vmatpush1.msra.mxu0 0.0
    %4094 = vmatprep.subr.mxu0 0.0
    %4095 = vmatpush1.msra.mxu0 0.0
    %4096 = vmatprep.subr.mxu0 0.0
    %4097 = vmatpush1.msra.mxu0 0.0
    %4098 = vmatprep.subr.mxu0 0.0
    %4099 = vmatpush1.msra.mxu0 0.0
    %4100 = vmatprep.subr.mxu0 0.0
    %4101 = vmatpush1.msra.mxu0 0.0
    %4102 = vmatprep.subr.mxu0 0.0
    %4103 = vmatpush1.msra.mxu0 0.0
    %4104 = vmatprep.subr.mxu0 0.0
    %4105 = vmatpush1.msra.mxu0 0.0
    %4106 = vmatprep.subr.mxu0 0.0
    %4107 = vmatpush1.msra.mxu0 0.0
    %4108 = vmatprep.subr.mxu0 0.0
    %4109 = vmatpush1.msra.mxu0 0.0
    %4110 = vmatprep.subr.mxu0 0.0
    %4111 = vmatpush1.msra.mxu0 0.0
    %4112 = vmatprep.subr.mxu0 0.0
    %4113 = vmatpush1.msra.mxu0 0.0
    %4114 = vmatprep.subr.mxu0 0.0
    %4115 = vmatpush1.msra.mxu0 0.0
    %4116 = vmatprep.subr.mxu0 0.0
    %4117 = vmatpush1.msra.mxu0 0.0
    %4118 = vmatprep.subr.mxu0 0.0
    %4119 = vmatpush1.msra.mxu0 0.0
    %4120 = vmatprep.subr.mxu0 0.0
    %4121 = vmatpush1.msra.mxu0 0.0
    %4122 = vmatprep.subr.mxu0 0.0
    %4123 = vmatpush1.msra.mxu0 %v4075
    %4124 = vmatprep.subr.mxu0 0.0
    %4125 = vmatpush2.msra.mxu0 0.0
    %4126 = vmatprep.subr.mxu0 0.0
    %4127 = vmatpush2.msra.mxu0 0.0
    %4128 = vmatprep.subr.mxu0 0.0
    %4129 = vmatpush2.msra.mxu0 0.0
    %4130 = vmatprep.subr.mxu0 0.0
    %4131 = vmatpush2.msra.mxu0 0.0
    %4132 = vmatprep.subr.mxu0 0.0
    %4133 = vmatpush2.msra.mxu0 0.0
    %4134 = vmatprep.subr.mxu0 0.0
    %4135 = vmatpush2.msra.mxu0 0.0
    %4136 = vmatprep.subr.mxu0 0.0
    %4137 = vmatpush2.msra.mxu0 0.0
    %4138 = vmatprep.subr.mxu0 0.0
    %4139 = vmatpush2.msra.mxu0 0.0
    %4140 = vmatprep.subr.mxu0 0.0
    %4141 = vmatpush2.msra.mxu0 0.0
    %4142 = vmatprep.subr.mxu0 0.0
    %4143 = vmatpush2.msra.mxu0 0.0
    %4144 = vmatprep.subr.mxu0 0.0
    %4145 = vmatpush2.msra.mxu0 0.0
    %4146 = vmatprep.subr.mxu0 0.0
    %4147 = vmatpush2.msra.mxu0 0.0
    %4148 = vmatprep.subr.mxu0 0.0
    %4149 = vmatpush2.msra.mxu0 0.0
    %4150 = vmatprep.subr.mxu0 0.0
    %4151 = vmatpush2.msra.mxu0 0.0
    %4152 = vmatprep.subr.mxu0 0.0
    %4153 = vmatpush2.msra.mxu0 0.0
    %4154 = vmatprep.subr.mxu0 0.0
    %4155 = vmatpush2.msra.mxu0 0.0
    %4156 = vmatprep.mubr.f32.mxu0 0.0
    %4157 = vmatmul.mubr.f32.gmra.mxu0 %v4081
    %v4158 = vpop.f32.mrf.mxu0
    %v4159 = vadd.f32 %v4079, %v4158
    %v4160 = vpop.f32.mrf.mxu0
    %4161 = vmatprep.mubr.f32.mxu0 0.0
    %4162 = vmatmul.mubr.f32.gmra.mxu0 %v4084
    %v4163 = vpop.f32.mrf.mxu0
    %v4164 = vadd.f32 %v4079, %v4163
    %v4165 = vpop.f32.mrf.mxu0
    %4166 = vmatprep.mubr.f32.mxu0 0.0
    %4167 = vmatmul.mubr.f32.gmra.mxu0 %v4087
    %v4168 = vpop.f32.mrf.mxu0
    %v4169 = vadd.f32 %v4079, %v4168
    %v4170 = vpop.f32.mrf.mxu0
    %4171 = vmatprep.mubr.f32.mxu0 0.0
    %4172 = vmatmul.mubr.f32.gmra.mxu0 %v4090
    %v4173 = vpop.f32.mrf.mxu0
    %v4174 = vadd.f32 %v4079, %v4173
    %v4175 = vpop.f32.mrf.mxu0
    %4176 = vdwg.mxu0
    %v4177 = vmax.f32 %v4159, 0.0
    %v4178 = vmax.f32 %v4164, 0.0
    %v4179 = vmax.f32 %v4169, 0.0
    %v4180 = vmax.f32 %v4174, 0.0
    %v4181 = vld [vmem:[%s17] sm:$0xff]
    %v4182 = vld [vmem:[%s17 + $0x8] sm:$0xff]
    %v4183 = vld [vmem:[%s17 + $0x10] sm:$0xff]
    %v4184 = vld [vmem:[%s17 + $0x18] sm:$0xff]
    %v4186 = vsel %vm1437, %v4177, 0
    %v4189 = vsel %vm1437, %v4178, 0
    %v4192 = vsel %vm1437, %v4179, 0
    %v4195 = vsel %vm1437, %v4180, 0
    %4197 = vmatprep.subr.mxu0 0.0
    %4198 = vmatpush1.msra.mxu0 0.0
    %4199 = vmatprep.subr.mxu0 0.0
    %4200 = vmatpush1.msra.mxu0 0.0
    %4201 = vmatprep.subr.mxu0 0.0
    %4202 = vmatpush1.msra.mxu0 0.0
    %4203 = vmatprep.subr.mxu0 0.0
    %4204 = vmatpush1.msra.mxu0 0.0
    %4205 = vmatprep.subr.mxu0 0.0
    %4206 = vmatpush1.msra.mxu0 0.0
    %4207 = vmatprep.subr.mxu0 0.0
    %4208 = vmatpush1.msra.mxu0 0.0
    %4209 = vmatprep.subr.mxu0 0.0
    %4210 = vmatpush1.msra.mxu0 0.0
    %4211 = vmatprep.subr.mxu0 0.0
    %4212 = vmatpush1.msra.mxu0 0.0
    %4213 = vmatprep.subr.mxu0 0.0
    %4214 = vmatpush1.msra.mxu0 0.0
    %4215 = vmatprep.subr.mxu0 0.0
    %4216 = vmatpush1.msra.mxu0 0.0
    %4217 = vmatprep.subr.mxu0 0.0
    %4218 = vmatpush1.msra.mxu0 0.0
    %4219 = vmatprep.subr.mxu0 0.0
    %4220 = vmatpush1.msra.mxu0 0.0
    %4221 = vmatprep.subr.mxu0 0.0
    %4222 = vmatpush1.msra.mxu0 %v4184
    %4223 = vmatprep.subr.mxu0 0.0
    %4224 = vmatpush1.msra.mxu0 %v4183
    %4225 = vmatprep.subr.mxu0 0.0
    %4226 = vmatpush1.msra.mxu0 %v4182
    %4227 = vmatprep.subr.mxu0 0.0
    %4228 = vmatpush1.msra.mxu0 %v4181
    %4229 = vmatprep.subr.mxu0 0.0
    %4230 = vmatpush2.msra.mxu0 0.0
    %4231 = vmatprep.subr.mxu0 0.0
    %4232 = vmatpush2.msra.mxu0 0.0
    %4233 = vmatprep.subr.mxu0 0.0
    %4234 = vmatpush2.msra.mxu0 0.0
    %4235 = vmatprep.subr.mxu0 0.0
    %4236 = vmatpush2.msra.mxu0 0.0
    %4237 = vmatprep.subr.mxu0 0.0
    %4238 = vmatpush2.msra.mxu0 0.0
    %4239 = vmatprep.subr.mxu0 0.0
    %4240 = vmatpush2.msra.mxu0 0.0
    %4241 = vmatprep.subr.mxu0 0.0
    %4242 = vmatpush2.msra.mxu0 0.0
    %4243 = vmatprep.subr.mxu0 0.0
    %4244 = vmatpush2.msra.mxu0 0.0
    %4245 = vmatprep.subr.mxu0 0.0
    %4246 = vmatpush2.msra.mxu0 0.0
    %4247 = vmatprep.subr.mxu0 0.0
    %4248 = vmatpush2.msra.mxu0 0.0
    %4249 = vmatprep.subr.mxu0 0.0
    %4250 = vmatpush2.msra.mxu0 0.0
    %4251 = vmatprep.subr.mxu0 0.0
    %4252 = vmatpush2.msra.mxu0 0.0
    %4253 = vmatprep.subr.mxu0 0.0
    %4254 = vmatpush2.msra.mxu0 0.0
    %4255 = vmatprep.subr.mxu0 0.0
    %4256 = vmatpush2.msra.mxu0 0.0
    %4257 = vmatprep.subr.mxu0 0.0
    %4258 = vmatpush2.msra.mxu0 0.0
    %4259 = vmatprep.subr.mxu0 0.0
    %4260 = vmatpush2.msra.mxu0 0.0
    %4261 = vmatprep.mubr.f32.mxu0 0.0
    %4262 = vmatmul.mubr.f32.gmra.mxu0 %v4186
    %v4263 = vpop.f32.mrf.mxu0
    %v4264 = vadd.f32 0.0, %v4263
    %v4265 = vpop.f32.mrf.mxu0
    %4266 = vmatprep.mubr.f32.mxu0 0.0
    %4267 = vmatmul.mubr.f32.gmra.mxu0 %v4189
    %v4268 = vpop.f32.mrf.mxu0
    %v4269 = vadd.f32 0.0, %v4268
    %v4270 = vpop.f32.mrf.mxu0
    %4271 = vmatprep.mubr.f32.mxu0 0.0
    %4272 = vmatmul.mubr.f32.gmra.mxu0 %v4192
    %v4273 = vpop.f32.mrf.mxu0
    %v4274 = vadd.f32 0.0, %v4273
    %v4275 = vpop.f32.mrf.mxu0
    %4276 = vmatprep.mubr.f32.mxu0 0.0
    %4277 = vmatmul.mubr.f32.gmra.mxu0 %v4195
    %v4278 = vpop.f32.mrf.mxu0
    %v4279 = vadd.f32 0.0, %v4278
    %v4280 = vpop.f32.mrf.mxu0
    %4281 = vdwg.mxu0
    %v4282 = vadd.f32 %v4071, %v4264
    %v4283 = vadd.f32 %v4072, %v4269
    %v4284 = vadd.f32 %v4073, %v4274
    %v4285 = vadd.f32 %v4074, %v4279
    %v4286 = vlaneseq
    %v4287 = vshrl.u32 %v4286, 7
    %v4288 = vsub.s32 5, %v4287
    %v4289 = vrot.slane %v3002, %v4288
    %v4290 = vadd.f32 %v4282, %v4289
    %v4291 = vadd.f32 %v4283, %v4289
    %v4292 = vadd.f32 %v4284, %v4289
    %v4293 = vadd.f32 %v4285, %v4289
    %v4294 = vsel %vm1630, %v4290, 0.0
    %4295 = vadd.xlane.f32.xlu0 %v4294
    %v4296 = vpop.xlane.xlu0 %4295
    %v4297 = vsel %vm1630, %v4291, 0.0
    %4298 = vadd.xlane.f32.xlu0 %v4297
    %v4299 = vpop.xlane.xlu0 %4298
    %v4300 = vsel %vm1630, %v4292, 0.0
    %4301 = vadd.xlane.f32.xlu0 %v4300
    %v4302 = vpop.xlane.xlu0 %4301
    %v4303 = vsel %vm1630, %v4293, 0.0
    %4304 = vadd.xlane.f32.xlu0 %v4303
    %v4305 = vpop.xlane.xlu0 %4304
    %v4306 = vmul.f32 %v4296, %v2658
    %v4307 = vmul.f32 %v4299, %v2658
    %v4308 = vmul.f32 %v4302, %v2658
    %v4309 = vmul.f32 %v4305, %v2658
    %v4310 = vsub.f32 %v4290, %v4306
    %v4311 = vsub.f32 %v4291, %v4307
    %v4312 = vsub.f32 %v4292, %v4308
    %v4313 = vsub.f32 %v4293, %v4309
    %v4314 = vmul.f32 %v4310, %v4310
    %v4315 = vmul.f32 %v4311, %v4311
    %v4316 = vmul.f32 %v4312, %v4312
    %v4317 = vmul.f32 %v4313, %v4313
    %v4318 = vsel %vm1630, %v4314, 0.0
    %4319 = vadd.xlane.f32.xlu0 %v4318
    %v4320 = vpop.xlane.xlu0 %4319
    %v4321 = vsel %vm1630, %v4315, 0.0
    %4322 = vadd.xlane.f32.xlu0 %v4321
    %v4323 = vpop.xlane.xlu0 %4322
    %v4324 = vsel %vm1630, %v4316, 0.0
    %4325 = vadd.xlane.f32.xlu0 %v4324
    %v4326 = vpop.xlane.xlu0 %4325
    %v4327 = vsel %vm1630, %v4317, 0.0
    %4328 = vadd.xlane.f32.xlu0 %v4327
    %v4329 = vpop.xlane.xlu0 %4328
    %v4330 = vmul.f32 %v4320, %v2658
    %v4331 = vmul.f32 %v4323, %v2658
    %v4332 = vmul.f32 %v4326, %v2658
    %v4333 = vmul.f32 %v4329, %v2658
    %v4334 = vadd.f32 %v4330, 1e-05
    %v4335 = vadd.f32 %v4331, 1e-05
    %v4336 = vadd.f32 %v4332, 1e-05
    %v4337 = vadd.f32 %v4333, 1e-05
    %v4338 = vrsqrt.pop %v4334
    %v4339 = vrsqrt.pop %v4335
    %v4340 = vrsqrt.pop %v4336
    %v4341 = vrsqrt.pop %v4337
    %v4342 = vmul.f32 %v4310, %v4338
    %v4343 = vmul.f32 %v4311, %v4339
    %v4344 = vmul.f32 %v4312, %v4340
    %v4345 = vmul.f32 %v4313, %v4341
    %v4346 = vlaneseq
    %v4347 = vshrl.u32 %v4346, 7
    %v4348 = vsub.s32 6, %v4347
    %v4349 = vrot.slane %v3002, %v4348
    %v4350 = vmul.f32 %v4342, %v4349
    %v4351 = vmul.f32 %v4343, %v4349
    %v4352 = vmul.f32 %v4344, %v4349
    %v4353 = vmul.f32 %v4345, %v4349
    %v4354 = vlaneseq
    %v4355 = vshrl.u32 %v4354, 7
    %v4356 = vsub.s32 7, %v4355
    %v4357 = vrot.slane %v3002, %v4356
    %v4358 = vadd.f32 %v4350, %v4357
    %v4359 = vadd.f32 %v4351, %v4357
    %v4360 = vadd.f32 %v4352, %v4357
    %v4361 = vadd.f32 %v4353, %v4357
    %4362 = vst.msk [vmem:[%s20] sm:$0xff] %vm1630, %v4358
    %4363 = vst.msk [vmem:[%s20 + $0x8] sm:$0xff] %vm1630, %v4359
    %4364 = vst.msk [vmem:[%s20 + $0x10] sm:$0xff] %vm1630, %v4360
    %4365 = vst.msk [vmem:[%s20 + $0x18] sm:$0xff] %vm1630, %v4361
    // Predicated region
    $region130: #{_lambda_.2} parent=1 // pred_check
      _
    $region131: #{_lambda_.2} parent=1 // pred_check_branch
      %4367 = sbr.rel (0) target = $region133
    $region132: #{_lambda_.2} parent=1 // pred_region
      _
    $region133: #{_lambda_.2} parent=1 // pred_fallthru
      _
    // Predicated region
    $region134: #{_lambda_.2} parent=1 // pred_check
      _
    $region135: #{_lambda_.2} parent=1 // pred_check_branch
      %4369 = sbr.rel (0) target = $region137
    $region136: #{_lambda_.2} parent=1 // pred_region
      _
    $region137: #{_lambda_.2} parent=1 // pred_fallthru
      _
    // Predicated region
    $region138: #{_lambda_.2} parent=1 // pred_check
      _
    $region139: #{_lambda_.2} parent=1 // pred_check_branch
      %4371 = sbr.rel (0) target = $region141
    $region140: #{_lambda_.2} parent=1 // pred_region
      _
    $region141: #{_lambda_.2} parent=1 // pred_fallthru
      _
    // Predicated region
    $region142: #{_lambda_.2} parent=1 // pred_check
      _
    $region143: #{_lambda_.2} parent=1 // pred_check_branch
      %4373 = sbr.rel (0) target = $region145
    $region144: #{_lambda_.2} parent=1 // pred_region
      _
    $region145: #{_lambda_.2} parent=1 // pred_fallthru
      _
    %4374 = vsyncpa [#allocation3], 1
    %4375 = vsyncpa [#allocation5], 1
    %4376 = vsyncpa [#allocation8], 1
    %4377 = vsyncpa [#allocation11], 1
    %4378 = vsyncpa [#allocation14], 1
    %4379 = vsyncpa [#allocation17], 1
    %4380 = vsyncpa [#allocation20], 1

</llo_original>
